<compile_context>
chip_gen: v7x
topology: tpu7x:2x2x1
jax: 0.10.0
libtpu: 0.0.40
codegen_flags: <defaults>
</compile_context>

<pallas_src>
import functools

import jax
import jax.numpy as jnp
from jax.experimental import pallas as pl
from jax.experimental.pallas import tpu as pltpu

EPS = float(jnp.finfo(jnp.float32).eps)  # torch.finfo(torch.float32).eps

IMG_H, IMG_W = 64, 64
C_FEAT = 8
NUM_CLASSES = 4
NUM_ANCHORS = 3
NUM_ATTRIB = 5 + NUM_CLASSES  # x, y, w, h, obj, cls...
STRIDES = (32, 16, 8)
NUM_LEVELS = len(STRIDES)
NUM_SCORES = 5  # class score + 4 bbox preds
HW_PAD = 128    # per-level H*W padded to one lane tile (4, 16, 64 all fit)
HW_PER_LEVEL = tuple((IMG_H // s) * (IMG_W // s) for s in STRIDES)  # (4, 16, 64)
BASE_SIZES = (
    ((40.0, 30.0), (50.0, 60.0), (60.0, 50.0)),  # stride 32
    ((16.0, 24.0), (24.0, 16.0), (20.0, 20.0)),  # stride 16
    ((8.0, 10.0), (10.0, 8.0), (12.0, 12.0)),    # stride 8
)


# ----------------------------------------------------------------------------
# Kernel A: sigmoid + YOLO bbox decode + scale_boxes + IoU + class weighting
# + in-kernel argmax.  Anchors packed onto full (8, lanes) vreg tiles.
# ----------------------------------------------------------------------------
def _select_kernel(n, npad, target_class, raw_ref, anc_ref, tbox_ref, scale_ref,
                   idx_ref):
    lanes = npad // 8

    def attr(a):           # attrib a of the raw preds, as a full (8, lanes) tile
        return raw_ref[8 * a:8 * (a + 1), :]

    def anc(a):            # anchor-decode parameter a, as a full (8, lanes) tile
        return anc_ref[8 * a:8 * (a + 1), :]

    # pred[..., :2].sigmoid_()  (w/h stay raw), cls score sigmoid
    tx = jax.nn.sigmoid(attr(0))
    ty = jax.nn.sigmoid(attr(1))
    tw = attr(2)
    th = attr(3)
    cls_score = jax.nn.sigmoid(attr(5 + target_class))

    cxa = anc(0)      # anchor center x
    cya = anc(1)      # anchor center y
    hwb = anc(2)      # anchor half width
    hhb = anc(3)      # anchor half height
    stride = anc(4)   # featmap stride

    # mmdet YOLOBBoxCoder.decode (anchor center/size precomputed host-side)
    cx = cxa + (tx - 0.5) * stride
    cy = cya + (ty - 0.5) * stride
    # NOTE: exp is unclamped, matching the reference decode.
    half_w = hwb * jnp.exp(tw)
    half_h = hhb * jnp.exp(th)

    # scale_boxes (rescale back to the original image frame)
    sx = scale_ref[0]
    sy = scale_ref[1]
    x1 = (cx - half_w) * sx
    y1 = (cy - half_h) * sy
    x2 = (cx + half_w) * sx
    y2 = (cy + half_h) * sy

    # calculate_iou(bboxes, target_box)
    tx1 = tbox_ref[0]
    ty1 = tbox_ref[1]
    tx2 = tbox_ref[2]
    ty2 = tbox_ref[3]
    ix1 = jnp.maximum(x1, tx1)
    iy1 = jnp.maximum(y1, ty1)
    ix2 = jnp.minimum(x2, tx2)
    iy2 = jnp.minimum(y2, ty2)
    inter = jnp.maximum(ix2 - ix1, 0.0) * jnp.maximum(iy2 - iy1, 0.0)
    area = (x2 - x1) * (y2 - y1)
    tarea = (tx2 - tx1) * (ty2 - ty1)
    # eps clamp on the union guards against a 0/inf denominator poisoning the
    # argmax (no-op for well-formed boxes; reference divides unguarded).
    union = jnp.maximum(area + tarea - inter, EPS)
    iou = inter * pl.reciprocal(union, approx=True)   # EUP, frees the divide

    weighted = iou * cls_score                         # (8, lanes)

    # argmax over the packed (sublane, lane) layout: flat = sub*lanes + lane.
    sub = jax.lax.broadcasted_iota(jnp.int32, weighted.shape, 0)
    lane = jax.lax.broadcasted_iota(jnp.int32, weighted.shape, 1)
    flat = sub * lanes + lane
    valid = flat < n                                   # mask padded anchors
    neg_inf = jnp.float32(-jnp.inf)
    wm = jnp.where(valid, weighted, neg_inf)
    wmax = jnp.max(jnp.max(wm, axis=1, keepdims=True), axis=0, keepdims=True)
    cand = jnp.where(jnp.logical_and(wm == wmax, valid), flat, npad)
    idx = jnp.min(jnp.min(cand, axis=1, keepdims=True), axis=0, keepdims=True)
    # clamp: all-NaN fallback stays in range
    idx_ref[...] = jnp.minimum(idx, n - 1)             # (1, 1) int32


def select_argmax(raw_packed, anc_packed, target_box, scale_factor,
                  target_class, n, npad):
    idx = pl.pallas_call(
        functools.partial(_select_kernel, n, npad, target_class),
        out_shape=jax.ShapeDtypeStruct((1, 1), jnp.int32),
        in_specs=[
            pl.BlockSpec(memory_space=pltpu.MemorySpace.VMEM),   # raw preds (A*8, npad/8)
            pl.BlockSpec(memory_space=pltpu.MemorySpace.VMEM),   # anchor params (5*8, npad/8)
            pl.BlockSpec(memory_space=pltpu.MemorySpace.SMEM),   # target box (4,)
            pl.BlockSpec(memory_space=pltpu.MemorySpace.SMEM),   # scale factor (2,)
        ],
        out_specs=pl.BlockSpec(memory_space=pltpu.MemorySpace.VMEM),
    )(raw_packed, anc_packed, target_box, scale_factor)
    return idx[0, 0]


# ----------------------------------------------------------------------------
# Kernel B: Grad-CAM for all (level, score) pairs in a single launch.
# Features arrive once per level (no 5x broadcast); grads carry the score dim.
# relu(sum_c(grad*feat)) over a 128-lane-padded H*W, then min/max normalize
# over the valid lanes only (valid widths are compile-time constants).
# ----------------------------------------------------------------------------
def _cam_kernel(hw_per_level, feat_ref, grad_ref, out_ref):
    lane = jax.lax.broadcasted_iota(jnp.int32, (NUM_SCORES, HW_PAD), 1)
    inf = jnp.float32(jnp.inf)
    for l in range(NUM_LEVELS):                        # static, L = 3
        f = feat_ref[l]                                # (C, 128)
        g = grad_ref[l]                                # (S, C, 128)
        cam = jnp.maximum(jnp.sum(g * f[None, :, :], axis=1), 0.0)   # (S, 128)
        valid = lane < hw_per_level[l]                 # compile-time constant mask
        cmin = jnp.min(jnp.where(valid, cam, inf), axis=1, keepdims=True)
        cmax = jnp.max(jnp.where(valid, cam, -inf), axis=1, keepdims=True)
        out_ref[l] = (cam - cmin) / jnp.maximum(cmax - cmin, EPS)


def cam_maps_fused(feat_b, grad_b):
    return pl.pallas_call(
        functools.partial(_cam_kernel, HW_PER_LEVEL),
        out_shape=jax.ShapeDtypeStruct((NUM_LEVELS, NUM_SCORES, HW_PAD),
                                       jnp.float32),
        in_specs=[
            pl.BlockSpec(memory_space=pltpu.MemorySpace.VMEM),   # (L, C, 128)
            pl.BlockSpec(memory_space=pltpu.MemorySpace.VMEM),   # (L, S, C, 128)
        ],
        out_specs=pl.BlockSpec(memory_space=pltpu.MemorySpace.VMEM),
    )(feat_b, grad_b)


# ----------------------------------------------------------------------------
# Kernel C: mean over levels, per-score min/max normalize, max over scores.
# ----------------------------------------------------------------------------
def _combine_kernel(maps_ref, out_ref):
    m = maps_ref[...]                    # (L, S, P)
    mean_m = jnp.mean(m, axis=0)         # (S, P)
    mn = jnp.min(mean_m, axis=1, keepdims=True)
    mx = jnp.max(mean_m, axis=1, keepdims=True)
    norm = (mean_m - mn) / jnp.maximum(mx - mn, EPS)
    out_ref[...] = jnp.max(norm, axis=0, keepdims=True)   # (1, P)


def combine_maps(maps_flat):
    p = maps_flat.shape[-1]
    return pl.pallas_call(
        _combine_kernel,
        out_shape=jax.ShapeDtypeStruct((1, p), jnp.float32),
        in_specs=[pl.BlockSpec(memory_space=pltpu.MemorySpace.VMEM)],
        out_specs=pl.BlockSpec(memory_space=pltpu.MemorySpace.VMEM),
    )(maps_flat)


# ----------------------------------------------------------------------------
# Synthetic (deterministic) detection model — plain JAX so jax.vjp can
# replicate torch's backward() into the retained feature maps.
# ----------------------------------------------------------------------------
def make_params(key):
    params = {"proj_w": [], "proj_b": [], "head_w": [], "head_b": []}
    for _ in range(NUM_LEVELS):
        key, k1, k2, k3, k4 = jax.random.split(key, 5)
        params["proj_w"].append(jax.random.normal(k1, (3, C_FEAT), jnp.float32) * 0.5)
        params["proj_b"].append(jax.random.normal(k2, (C_FEAT,), jnp.float32) * 0.1)
        params["head_w"].append(
            jax.random.normal(k3, (NUM_ANCHORS * NUM_ATTRIB, C_FEAT), jnp.float32) * 0.3)
        params["head_b"].append(
            jax.random.normal(k4, (NUM_ANCHORS * NUM_ATTRIB,), jnp.float32) * 0.1)
    return params


def extract_feat(image, params):
    """image (H, W, 3) -> tuple of 3 NCHW feature maps (1, C, H/s, W/s)."""
    feats = []
    for l, s in enumerate(STRIDES):
        h, w = IMG_H // s, IMG_W // s
        pooled = image.reshape(h, s, w, s, 3).mean(axis=(1, 3))            # (h, w, 3)
        f = jnp.tanh(pooled @ params["proj_w"][l] + params["proj_b"][l])   # (h, w, C)
        feats.append(jnp.transpose(f, (2, 0, 1))[None])                    # (1, C, h, w)
    return tuple(feats)


def head_flatten(feats, params):
    """YOLOv3 head (1x1 conv per level) + permute/reshape flatten -> (N, 9).

    Kept in XLA: the (HW, 8) x (8, 27) contraction is far too small for the
    MXU, and autodiff needs this graph anyway (per review).
    """
    flat = []
    for l, x in enumerate(feats):
        p = jnp.einsum("nchw,kc->nkhw", x, params["head_w"][l]) \
            + params["head_b"][l][None, :, None, None]
        p = jnp.transpose(p, (0, 2, 3, 1)).reshape(-1, NUM_ATTRIB)
        flat.append(p)
    return jnp.concatenate(flat, axis=0)


def yolo_anchor_params():
    """mmdet YOLOAnchorGenerator.grid_priors, pre-reduced to decode params.

    Returns (5, N) float32: cx, cy, half_w_base, half_h_base, stride with the
    same position-major / anchor-minor flattening order as head_flatten.
    """
    cxs, cys, hws, hhs, sts = [], [], [], [], []
    for l, s in enumerate(STRIDES):
        h, w = IMG_H // s, IMG_W // s
        ys = jnp.arange(h, dtype=jnp.float32) * s + s / 2.0
        xs = jnp.arange(w, dtype=jnp.float32) * s + s / 2.0
        cy, cx = jnp.meshgrid(ys, xs, indexing="ij")
        cx = cx.reshape(-1)
        cy = cy.reshape(-1)
        base = jnp.asarray(BASE_SIZES[l], jnp.float32)    # (A, 2)
        hw = h * w
        cxs.append(jnp.broadcast_to(cx[:, None], (hw, NUM_ANCHORS)).reshape(-1))
        cys.append(jnp.broadcast_to(cy[:, None], (hw, NUM_ANCHORS)).reshape(-1))
        hws.append(jnp.broadcast_to(base[None, :, 0] * 0.5, (hw, NUM_ANCHORS)).reshape(-1))
        hhs.append(jnp.broadcast_to(base[None, :, 1] * 0.5, (hw, NUM_ANCHORS)).reshape(-1))
        sts.append(jnp.full((hw * NUM_ANCHORS,), float(s), jnp.float32))
    return jnp.stack([jnp.concatenate(v) for v in (cxs, cys, hws, hhs, sts)], axis=0)


def pack_rows(x, npad):
    """(K, N) -> (K*8, npad//8): pad each row to npad, fold onto 8 sublanes.

    Flat anchor index i maps to (sublane, lane) = (i // (npad//8), i % (npad//8)).
    """
    k, n = x.shape
    xp = jnp.pad(x, ((0, 0), (0, npad - n)))
    return xp.reshape(k, 8, npad // 8).reshape(k * 8, npad // 8)


def build_cam_inputs(feats, grads_acc):
    """Lane-pad CAM operands: feat (L, C, 128) once, grads (L, S, C, 128)."""
    feat_rows, grad_rows = [], []
    for l in range(NUM_LEVELS):
        _, c, h, w = feats[l].shape
        hw = h * w
        f2 = jnp.pad(feats[l][0].reshape(c, hw), ((0, 0), (0, HW_PAD - hw)))
        g2 = jnp.pad(grads_acc[l].reshape(NUM_SCORES, c, hw),
                     ((0, 0), (0, 0), (0, HW_PAD - hw)))
        feat_rows.append(f2)
        grad_rows.append(g2)
    return jnp.stack(feat_rows, axis=0), jnp.stack(grad_rows, axis=0)


# ----------------------------------------------------------------------------
# Full ODAM forward
# ----------------------------------------------------------------------------
@functools.partial(jax.jit, static_argnums=(1,))
def yolo_v3_odam_forward(image, target_class, target_box, params):
    feats = extract_feat(image, params)           # tuple of (1, C, h, w)
    raw = head_flatten(feats, params)             # (N, NUM_ATTRIB)
    n = raw.shape[0]
    npad = ((n + 1023) // 1024) * 1024            # full (8,128) vreg multiples
    raw_packed = pack_rows(raw.T, npad)           # (NUM_ATTRIB*8, npad//8)
    anc_packed = pack_rows(yolo_anchor_params(), npad)   # (5*8, npad//8)
    scale_factor = jnp.array([1.0, 1.0], jnp.float32)  # test pipeline skipped -> identity rescale
    tbox = jnp.asarray(target_box, jnp.float32)

    # (ious * cls_scores[..., tc]).argmax(), computed entirely in-kernel.
    idx = select_argmax(raw_packed, anc_packed, tbox, scale_factor,
                        target_class, n, npad)

    # Single vjp of the selected 9-attrib row; 5 stacked cotangents replace
    # the reference's 5 separate backward() replays.
    def row_fn(fs):
        return head_flatten(fs, params)[idx]      # (NUM_ATTRIB,)

    row, vjp_fn = jax.vjp(row_fn, feats)

    def dsig(z):
        s = jax.nn.sigmoid(z)
        return s * (1.0 - s)

    cot = jnp.zeros((NUM_SCORES, NUM_ATTRIB), jnp.float32)
    cot = cot.at[0, 5 + target_class].set(dsig(row[5 + target_class]))  # class score
    cot = cot.at[1, 0].set(dsig(row[0]))                                # box left
    cot = cot.at[2, 1].set(dsig(row[1]))                                # box top
    cot = cot.at[3, 2].set(1.0)                                         # box right
    cot = cot.at[4, 3].set(1.0)                                         # box bottom

    (grads_feats,) = jax.vmap(vjp_fn)(cot)        # tuple of (S, 1, C, h, w)

    grads_acc = []
    for l in range(NUM_LEVELS):
        g_stack = grads_feats[l][:, 0]            # (S, C, h, w)
        # Replicates the reference code: detection_model.zero_grad() does not
        # clear the retained intermediate feature grads, so gradients
        # accumulate across the 5 successive backward() calls.
        grads_acc.append(jnp.cumsum(g_stack, axis=0))

    feat_b, grad_b = build_cam_inputs(feats, grads_acc)
    cam_all = cam_maps_fused(feat_b, grad_b)      # (L, S, 128)

    level_maps = []
    for l, s in enumerate(STRIDES):
        h, w = IMG_H // s, IMG_W // s
        cam_l = cam_all[l, :, :h * w].reshape(NUM_SCORES, h, w)
        # TODO(synk): jax.image.resize 'linear' approximates cv2.resize INTER_LINEAR.
        level_maps.append(
            jax.image.resize(cam_l, (NUM_SCORES, IMG_H, IMG_W), method="linear"))

    maps = jnp.stack(level_maps, axis=0)                              # (3, 5, H, W)
    maps_flat = maps.reshape(NUM_LEVELS, NUM_SCORES, IMG_H * IMG_W)
    saliency = combine_maps(maps_flat).reshape(IMG_H, IMG_W)
    return saliency


if __name__ == "__main__":
    key = jax.random.PRNGKey(0)
    k_img, k_par = jax.random.split(key)
    image = jax.random.uniform(k_img, (IMG_H, IMG_W, 3), jnp.float32)
    params = make_params(k_par)

    target_class = 2
    target_box = jnp.asarray([10.0, 12.0, 40.0, 44.0], jnp.float32)

    saliency = yolo_v3_odam_forward(image, target_class, target_box, params)
    saliency = jax.block_until_ready(saliency)

    assert saliency.shape == (IMG_H, IMG_W)
    assert bool(jnp.all(jnp.isfinite(saliency)))
    print("KERNEL_OK")
</pallas_src>

<mosaic_0001>
module attributes {stable_mosaic.version = 11 : i64} {
  func.func @_select_kernel(%arg0: memref<72x128xf32, #tpu.memory_space<vmem>>, %arg1: memref<40x128xf32, #tpu.memory_space<vmem>>, %arg2: memref<4xf32, #tpu.memory_space<smem>>, %arg3: memref<2xf32, #tpu.memory_space<smem>>, %arg4: memref<1x1xi32, #tpu.memory_space<vmem>>) attributes {dimension_semantics = [], scalar_prefetch = 0 : i64, scratch_operands = 0 : i64, tpu.core_type = #tpu.core_type<tc>} {
    %c0 = arith.constant 0 : index
    %c0_0 = arith.constant 0 : index
    %0 = vector.load %arg0[%c0, %c0_0] : memref<72x128xf32, #tpu.memory_space<vmem>>, vector<8x128xf32>
    %1 = arith.negf %0 : vector<8x128xf32>
    %2 = math.exp %1 : vector<8x128xf32>
    %cst = arith.constant 1.000000e+00 : f32
    %3 = vector.broadcast %cst : f32 to vector<8x128xf32>
    %4 = arith.addf %3, %2 : vector<8x128xf32>
    %5 = arith.divf %3, %4 : vector<8x128xf32>
    %c8 = arith.constant 8 : index
    %c0_1 = arith.constant 0 : index
    %6 = vector.load %arg0[%c8, %c0_1] : memref<72x128xf32, #tpu.memory_space<vmem>>, vector<8x128xf32>
    %7 = arith.negf %6 : vector<8x128xf32>
    %8 = math.exp %7 : vector<8x128xf32>
    %cst_2 = arith.constant 1.000000e+00 : f32
    %9 = vector.broadcast %cst_2 : f32 to vector<8x128xf32>
    %10 = arith.addf %9, %8 : vector<8x128xf32>
    %11 = arith.divf %9, %10 : vector<8x128xf32>
    %c16 = arith.constant 16 : index
    %c0_3 = arith.constant 0 : index
    %12 = vector.load %arg0[%c16, %c0_3] : memref<72x128xf32, #tpu.memory_space<vmem>>, vector<8x128xf32>
    %c24 = arith.constant 24 : index
    %c0_4 = arith.constant 0 : index
    %13 = vector.load %arg0[%c24, %c0_4] : memref<72x128xf32, #tpu.memory_space<vmem>>, vector<8x128xf32>
    %c56 = arith.constant 56 : index
    %c0_5 = arith.constant 0 : index
    %14 = vector.load %arg0[%c56, %c0_5] : memref<72x128xf32, #tpu.memory_space<vmem>>, vector<8x128xf32>
    %15 = arith.negf %14 : vector<8x128xf32>
    %16 = math.exp %15 : vector<8x128xf32>
    %cst_6 = arith.constant 1.000000e+00 : f32
    %17 = vector.broadcast %cst_6 : f32 to vector<8x128xf32>
    %18 = arith.addf %17, %16 : vector<8x128xf32>
    %19 = arith.divf %17, %18 : vector<8x128xf32>
    %c0_7 = arith.constant 0 : index
    %c0_8 = arith.constant 0 : index
    %20 = vector.load %arg1[%c0_7, %c0_8] : memref<40x128xf32, #tpu.memory_space<vmem>>, vector<8x128xf32>
    %c8_9 = arith.constant 8 : index
    %c0_10 = arith.constant 0 : index
    %21 = vector.load %arg1[%c8_9, %c0_10] : memref<40x128xf32, #tpu.memory_space<vmem>>, vector<8x128xf32>
    %c16_11 = arith.constant 16 : index
    %c0_12 = arith.constant 0 : index
    %22 = vector.load %arg1[%c16_11, %c0_12] : memref<40x128xf32, #tpu.memory_space<vmem>>, vector<8x128xf32>
    %c24_13 = arith.constant 24 : index
    %c0_14 = arith.constant 0 : index
    %23 = vector.load %arg1[%c24_13, %c0_14] : memref<40x128xf32, #tpu.memory_space<vmem>>, vector<8x128xf32>
    %c32 = arith.constant 32 : index
    %c0_15 = arith.constant 0 : index
    %24 = vector.load %arg1[%c32, %c0_15] : memref<40x128xf32, #tpu.memory_space<vmem>>, vector<8x128xf32>
    %cst_16 = arith.constant 5.000000e-01 : f32
    %25 = vector.broadcast %cst_16 : f32 to vector<8x128xf32>
    %26 = arith.subf %5, %25 : vector<8x128xf32>
    %27 = arith.mulf %26, %24 : vector<8x128xf32>
    %28 = arith.addf %20, %27 : vector<8x128xf32>
    %cst_17 = arith.constant 5.000000e-01 : f32
    %29 = vector.broadcast %cst_17 : f32 to vector<8x128xf32>
    %30 = arith.subf %11, %29 : vector<8x128xf32>
    %31 = arith.mulf %30, %24 : vector<8x128xf32>
    %32 = arith.addf %21, %31 : vector<8x128xf32>
    %33 = math.exp %12 : vector<8x128xf32>
    %34 = arith.mulf %22, %33 : vector<8x128xf32>
    %35 = math.exp %13 : vector<8x128xf32>
    %36 = arith.mulf %23, %35 : vector<8x128xf32>
    %c0_18 = arith.constant 0 : index
    %37 = memref.load %arg3[%c0_18] : memref<2xf32, #tpu.memory_space<smem>>
    %c1 = arith.constant 1 : index
    %38 = memref.load %arg3[%c1] : memref<2xf32, #tpu.memory_space<smem>>
    %39 = arith.subf %28, %34 : vector<8x128xf32>
    %40 = vector.broadcast %37 : f32 to vector<8x128xf32>
    %41 = arith.mulf %39, %40 : vector<8x128xf32>
    %42 = arith.subf %32, %36 : vector<8x128xf32>
    %43 = vector.broadcast %38 : f32 to vector<8x128xf32>
    %44 = arith.mulf %42, %43 : vector<8x128xf32>
    %45 = arith.addf %28, %34 : vector<8x128xf32>
    %46 = vector.broadcast %37 : f32 to vector<8x128xf32>
    %47 = arith.mulf %45, %46 : vector<8x128xf32>
    %48 = arith.addf %32, %36 : vector<8x128xf32>
    %49 = vector.broadcast %38 : f32 to vector<8x128xf32>
    %50 = arith.mulf %48, %49 : vector<8x128xf32>
    %c0_19 = arith.constant 0 : index
    %51 = memref.load %arg2[%c0_19] : memref<4xf32, #tpu.memory_space<smem>>
    %c1_20 = arith.constant 1 : index
    %52 = memref.load %arg2[%c1_20] : memref<4xf32, #tpu.memory_space<smem>>
    %c2 = arith.constant 2 : index
    %53 = memref.load %arg2[%c2] : memref<4xf32, #tpu.memory_space<smem>>
    %c3 = arith.constant 3 : index
    %54 = memref.load %arg2[%c3] : memref<4xf32, #tpu.memory_space<smem>>
    %55 = vector.broadcast %51 : f32 to vector<8x128xf32>
    %56 = arith.maximumf %41, %55 : vector<8x128xf32>
    %57 = vector.broadcast %52 : f32 to vector<8x128xf32>
    %58 = arith.maximumf %44, %57 : vector<8x128xf32>
    %59 = vector.broadcast %53 : f32 to vector<8x128xf32>
    %60 = arith.minimumf %47, %59 : vector<8x128xf32>
    %61 = vector.broadcast %54 : f32 to vector<8x128xf32>
    %62 = arith.minimumf %50, %61 : vector<8x128xf32>
    %63 = arith.subf %60, %56 : vector<8x128xf32>
    %cst_21 = arith.constant 0.000000e+00 : f32
    %64 = vector.broadcast %cst_21 : f32 to vector<8x128xf32>
    %65 = arith.maximumf %63, %64 : vector<8x128xf32>
    %66 = arith.subf %62, %58 : vector<8x128xf32>
    %cst_22 = arith.constant 0.000000e+00 : f32
    %67 = vector.broadcast %cst_22 : f32 to vector<8x128xf32>
    %68 = arith.maximumf %66, %67 : vector<8x128xf32>
    %69 = arith.mulf %65, %68 : vector<8x128xf32>
    %70 = arith.subf %47, %41 : vector<8x128xf32>
    %71 = arith.subf %50, %44 : vector<8x128xf32>
    %72 = arith.mulf %70, %71 : vector<8x128xf32>
    %73 = arith.subf %53, %51 : f32
    %74 = arith.subf %54, %52 : f32
    %75 = arith.mulf %73, %74 : f32
    %76 = vector.broadcast %75 : f32 to vector<8x128xf32>
    %77 = arith.addf %72, %76 : vector<8x128xf32>
    %78 = arith.subf %77, %69 : vector<8x128xf32>
    %cst_23 = arith.constant 1.1920929E-7 : f32
    %79 = vector.broadcast %cst_23 : f32 to vector<8x128xf32>
    %80 = arith.maximumf %78, %79 : vector<8x128xf32>
    %81 = tpu.reciprocal %80 {approx = true} : vector<8x128xf32> -> vector<8x128xf32>
    %82 = arith.mulf %69, %81 : vector<8x128xf32>
    %83 = arith.mulf %82, %19 : vector<8x128xf32>
    %84 = tpu.iota {dimensions = array<i32: 0>} : vector<8x128xi32>
    %85 = tpu.iota {dimensions = array<i32: 1>} : vector<8x128xi32>
    %c128_i32 = arith.constant 128 : i32
    %86 = vector.broadcast %c128_i32 : i32 to vector<8x128xi32>
    %87 = arith.muli %84, %86 : vector<8x128xi32>
    %88 = arith.addi %87, %85 : vector<8x128xi32>
    %c252_i32 = arith.constant 252 : i32
    %89 = vector.broadcast %c252_i32 : i32 to vector<8x128xi32>
    %90 = arith.cmpi slt, %88, %89 : vector<8x128xi32>
    %cst_24 = arith.constant 0xFF800000 : f32
    %91 = vector.broadcast %cst_24 : f32 to vector<8x128xf32>
    %92 = arith.select %90, %83, %91 : vector<8x128xi1>, vector<8x128xf32>
    %cst_25 = arith.constant dense<0xFF800000> : vector<8xf32>
    %93 = vector.multi_reduction <maximumf>, %92, %cst_25 [1] : vector<8x128xf32> to vector<8xf32>
    %94 = vector.shape_cast %93 : vector<8xf32> to vector<8x1xf32>
    %cst_26 = arith.constant dense<0xFF800000> : vector<1xf32>
    %95 = vector.multi_reduction <maximumf>, %94, %cst_26 [0] : vector<8x1xf32> to vector<1xf32>
    %96 = vector.shape_cast %95 : vector<1xf32> to vector<1x1xf32>
    %97 = vector.broadcast %96 : vector<1x1xf32> to vector<8x128xf32>
    %98 = arith.cmpf oeq, %92, %97 : vector<8x128xf32>
    %99 = arith.andi %98, %90 : vector<8x128xi1>
    %c1024_i32 = arith.constant 1024 : i32
    %100 = vector.broadcast %c1024_i32 : i32 to vector<8x128xi32>
    %101 = arith.select %99, %88, %100 : vector<8x128xi1>, vector<8x128xi32>
    %cst_27 = arith.constant dense<2147483647> : vector<8xi32>
    %102 = vector.multi_reduction <minsi>, %101, %cst_27 [1] : vector<8x128xi32> to vector<8xi32>
    %103 = vector.shape_cast %102 : vector<8xi32> to vector<8x1xi32>
    %cst_28 = arith.constant dense<2147483647> : vector<1xi32>
    %104 = vector.multi_reduction <minsi>, %103, %cst_28 [0] : vector<8x1xi32> to vector<1xi32>
    %105 = vector.shape_cast %104 : vector<1xi32> to vector<1x1xi32>
    %c251_i32 = arith.constant 251 : i32
    %106 = vector.broadcast %c251_i32 : i32 to vector<1x1xi32>
    %107 = arith.minsi %105, %106 : vector<1x1xi32>
    %c0_29 = arith.constant 0 : index
    %c0_30 = arith.constant 0 : index
    %108 = vector.load %arg4[%c0_29, %c0_30] : memref<1x1xi32, #tpu.memory_space<vmem>>, vector<1x1xi32>
    tpu.vector_store %arg4[%c0_29, %c0_30], %107 {strides = array<i32>} : memref<1x1xi32, #tpu.memory_space<vmem>>, vector<1x1xi32>,
    return
  }
}

module attributes {stable_mosaic.version = 11 : i64} {
  func.func @_cam_kernel(%arg0: memref<3x8x128xf32, #tpu.memory_space<vmem>>, %arg1: memref<3x5x8x128xf32, #tpu.memory_space<vmem>>, %arg2: memref<3x5x128xf32, #tpu.memory_space<vmem>>) attributes {dimension_semantics = [], scalar_prefetch = 0 : i64, scratch_operands = 0 : i64, tpu.core_type = #tpu.core_type<tc>} {
    %0 = tpu.iota {dimensions = array<i32: 1>} : vector<5x128xi32>
    %c0 = arith.constant 0 : index
    %c0_0 = arith.constant 0 : index
    %c0_1 = arith.constant 0 : index
    %1 = vector.load %arg0[%c0, %c0_0, %c0_1] : memref<3x8x128xf32, #tpu.memory_space<vmem>>, vector<1x8x128xf32>
    %2 = vector.shape_cast %1 : vector<1x8x128xf32> to vector<8x128xf32>
    %c0_2 = arith.constant 0 : index
    %c0_3 = arith.constant 0 : index
    %c0_4 = arith.constant 0 : index
    %c0_5 = arith.constant 0 : index
    %3 = vector.load %arg1[%c0_2, %c0_3, %c0_4, %c0_5] : memref<3x5x8x128xf32, #tpu.memory_space<vmem>>, vector<1x5x8x128xf32>
    %4 = vector.shape_cast %3 : vector<1x5x8x128xf32> to vector<5x8x128xf32>
    %5 = vector.shape_cast %2 : vector<8x128xf32> to vector<1x8x128xf32>
    %6 = vector.broadcast %5 : vector<1x8x128xf32> to vector<5x8x128xf32>
    %7 = arith.mulf %4, %6 : vector<5x8x128xf32>
    %cst = arith.constant dense<0.000000e+00> : vector<5x128xf32>
    %8 = vector.multi_reduction <add>, %7, %cst [1] : vector<5x8x128xf32> to vector<5x128xf32>
    %cst_6 = arith.constant 0.000000e+00 : f32
    %9 = vector.broadcast %cst_6 : f32 to vector<5x128xf32>
    %10 = arith.maximumf %8, %9 : vector<5x128xf32>
    %c4_i32 = arith.constant 4 : i32
    %11 = vector.broadcast %c4_i32 : i32 to vector<5x128xi32>
    %12 = arith.cmpi slt, %0, %11 : vector<5x128xi32>
    %cst_7 = arith.constant 0x7F800000 : f32
    %13 = vector.broadcast %cst_7 : f32 to vector<5x128xf32>
    %14 = arith.select %12, %10, %13 : vector<5x128xi1>, vector<5x128xf32>
    %cst_8 = arith.constant dense<0x7F800000> : vector<5xf32>
    %15 = vector.multi_reduction <minimumf>, %14, %cst_8 [1] : vector<5x128xf32> to vector<5xf32>
    %16 = vector.shape_cast %15 : vector<5xf32> to vector<5x1xf32>
    %cst_9 = arith.constant 0.000000e+00 : f32
    %cst_10 = arith.constant 0x7F800000 : f32
    %17 = arith.subf %cst_9, %cst_10 : f32
    %18 = vector.broadcast %17 : f32 to vector<5x128xf32>
    %19 = arith.select %12, %10, %18 : vector<5x128xi1>, vector<5x128xf32>
    %cst_11 = arith.constant dense<0xFF800000> : vector<5xf32>
    %20 = vector.multi_reduction <maximumf>, %19, %cst_11 [1] : vector<5x128xf32> to vector<5xf32>
    %21 = vector.shape_cast %20 : vector<5xf32> to vector<5x1xf32>
    %22 = vector.broadcast %16 : vector<5x1xf32> to vector<5x128xf32>
    %23 = arith.subf %10, %22 : vector<5x128xf32>
    %24 = arith.subf %21, %16 : vector<5x1xf32>
    %cst_12 = arith.constant 1.1920929E-7 : f32
    %25 = vector.broadcast %cst_12 : f32 to vector<5x1xf32>
    %26 = arith.maximumf %24, %25 : vector<5x1xf32>
    %27 = vector.broadcast %26 : vector<5x1xf32> to vector<5x128xf32>
    %28 = arith.divf %23, %27 : vector<5x128xf32>
    %c0_13 = arith.constant 0 : index
    %c0_14 = arith.constant 0 : index
    %c0_15 = arith.constant 0 : index
    %29 = vector.load %arg2[%c0_13, %c0_14, %c0_15] : memref<3x5x128xf32, #tpu.memory_space<vmem>>, vector<1x5x128xf32>
    %30 = vector.shape_cast %29 : vector<1x5x128xf32> to vector<5x128xf32>
    %31 = vector.shape_cast %28 : vector<5x128xf32> to vector<1x5x128xf32>
    tpu.vector_store %arg2[%c0_13, %c0_14, %c0_15], %31 {strides = array<i32>} : memref<3x5x128xf32, #tpu.memory_space<vmem>>, vector<1x5x128xf32>,
    %c1 = arith.constant 1 : index
    %c0_16 = arith.constant 0 : index
    %c0_17 = arith.constant 0 : index
    %32 = vector.load %arg0[%c1, %c0_16, %c0_17] : memref<3x8x128xf32, #tpu.memory_space<vmem>>, vector<1x8x128xf32>
    %33 = vector.shape_cast %32 : vector<1x8x128xf32> to vector<8x128xf32>
    %c1_18 = arith.constant 1 : index
    %c0_19 = arith.constant 0 : index
    %c0_20 = arith.constant 0 : index
    %c0_21 = arith.constant 0 : index
    %34 = vector.load %arg1[%c1_18, %c0_19, %c0_20, %c0_21] : memref<3x5x8x128xf32, #tpu.memory_space<vmem>>, vector<1x5x8x128xf32>
    %35 = vector.shape_cast %34 : vector<1x5x8x128xf32> to vector<5x8x128xf32>
    %36 = vector.shape_cast %33 : vector<8x128xf32> to vector<1x8x128xf32>
    %37 = vector.broadcast %36 : vector<1x8x128xf32> to vector<5x8x128xf32>
    %38 = arith.mulf %35, %37 : vector<5x8x128xf32>
    %cst_22 = arith.constant dense<0.000000e+00> : vector<5x128xf32>
    %39 = vector.multi_reduction <add>, %38, %cst_22 [1] : vector<5x8x128xf32> to vector<5x128xf32>
    %cst_23 = arith.constant 0.000000e+00 : f32
    %40 = vector.broadcast %cst_23 : f32 to vector<5x128xf32>
    %41 = arith.maximumf %39, %40 : vector<5x128xf32>
    %c16_i32 = arith.constant 16 : i32
    %42 = vector.broadcast %c16_i32 : i32 to vector<5x128xi32>
    %43 = arith.cmpi slt, %0, %42 : vector<5x128xi32>
    %cst_24 = arith.constant 0x7F800000 : f32
    %44 = vector.broadcast %cst_24 : f32 to vector<5x128xf32>
    %45 = arith.select %43, %41, %44 : vector<5x128xi1>, vector<5x128xf32>
    %cst_25 = arith.constant dense<0x7F800000> : vector<5xf32>
    %46 = vector.multi_reduction <minimumf>, %45, %cst_25 [1] : vector<5x128xf32> to vector<5xf32>
    %47 = vector.shape_cast %46 : vector<5xf32> to vector<5x1xf32>
    %cst_26 = arith.constant 0.000000e+00 : f32
    %cst_27 = arith.constant 0x7F800000 : f32
    %48 = arith.subf %cst_26, %cst_27 : f32
    %49 = vector.broadcast %48 : f32 to vector<5x128xf32>
    %50 = arith.select %43, %41, %49 : vector<5x128xi1>, vector<5x128xf32>
    %cst_28 = arith.constant dense<0xFF800000> : vector<5xf32>
    %51 = vector.multi_reduction <maximumf>, %50, %cst_28 [1] : vector<5x128xf32> to vector<5xf32>
    %52 = vector.shape_cast %51 : vector<5xf32> to vector<5x1xf32>
    %53 = vector.broadcast %47 : vector<5x1xf32> to vector<5x128xf32>
    %54 = arith.subf %41, %53 : vector<5x128xf32>
    %55 = arith.subf %52, %47 : vector<5x1xf32>
    %cst_29 = arith.constant 1.1920929E-7 : f32
    %56 = vector.broadcast %cst_29 : f32 to vector<5x1xf32>
    %57 = arith.maximumf %55, %56 : vector<5x1xf32>
    %58 = vector.broadcast %57 : vector<5x1xf32> to vector<5x128xf32>
    %59 = arith.divf %54, %58 : vector<5x128xf32>
    %c1_30 = arith.constant 1 : index
    %c0_31 = arith.constant 0 : index
    %c0_32 = arith.constant 0 : index
    %60 = vector.load %arg2[%c1_30, %c0_31, %c0_32] : memref<3x5x128xf32, #tpu.memory_space<vmem>>, vector<1x5x128xf32>
    %61 = vector.shape_cast %60 : vector<1x5x128xf32> to vector<5x128xf32>
    %62 = vector.shape_cast %59 : vector<5x128xf32> to vector<1x5x128xf32>
    tpu.vector_store %arg2[%c1_30, %c0_31, %c0_32], %62 {strides = array<i32>} : memref<3x5x128xf32, #tpu.memory_space<vmem>>, vector<1x5x128xf32>,
    %c2 = arith.constant 2 : index
    %c0_33 = arith.constant 0 : index
    %c0_34 = arith.constant 0 : index
    %63 = vector.load %arg0[%c2, %c0_33, %c0_34] : memref<3x8x128xf32, #tpu.memory_space<vmem>>, vector<1x8x128xf32>
    %64 = vector.shape_cast %63 : vector<1x8x128xf32> to vector<8x128xf32>
    %c2_35 = arith.constant 2 : index
    %c0_36 = arith.constant 0 : index
    %c0_37 = arith.constant 0 : index
    %c0_38 = arith.constant 0 : index
    %65 = vector.load %arg1[%c2_35, %c0_36, %c0_37, %c0_38] : memref<3x5x8x128xf32, #tpu.memory_space<vmem>>, vector<1x5x8x128xf32>
    %66 = vector.shape_cast %65 : vector<1x5x8x128xf32> to vector<5x8x128xf32>
    %67 = vector.shape_cast %64 : vector<8x128xf32> to vector<1x8x128xf32>
    %68 = vector.broadcast %67 : vector<1x8x128xf32> to vector<5x8x128xf32>
    %69 = arith.mulf %66, %68 : vector<5x8x128xf32>
    %cst_39 = arith.constant dense<0.000000e+00> : vector<5x128xf32>
    %70 = vector.multi_reduction <add>, %69, %cst_39 [1] : vector<5x8x128xf32> to vector<5x128xf32>
    %cst_40 = arith.constant 0.000000e+00 : f32
    %71 = vector.broadcast %cst_40 : f32 to vector<5x128xf32>
    %72 = arith.maximumf %70, %71 : vector<5x128xf32>
    %c64_i32 = arith.constant 64 : i32
    %73 = vector.broadcast %c64_i32 : i32 to vector<5x128xi32>
    %74 = arith.cmpi slt, %0, %73 : vector<5x128xi32>
    %cst_41 = arith.constant 0x7F800000 : f32
    %75 = vector.broadcast %cst_41 : f32 to vector<5x128xf32>
    %76 = arith.select %74, %72, %75 : vector<5x128xi1>, vector<5x128xf32>
    %cst_42 = arith.constant dense<0x7F800000> : vector<5xf32>
    %77 = vector.multi_reduction <minimumf>, %76, %cst_42 [1] : vector<5x128xf32> to vector<5xf32>
    %78 = vector.shape_cast %77 : vector<5xf32> to vector<5x1xf32>
    %cst_43 = arith.constant 0.000000e+00 : f32
    %cst_44 = arith.constant 0x7F800000 : f32
    %79 = arith.subf %cst_43, %cst_44 : f32
    %80 = vector.broadcast %79 : f32 to vector<5x128xf32>
    %81 = arith.select %74, %72, %80 : vector<5x128xi1>, vector<5x128xf32>
    %cst_45 = arith.constant dense<0xFF800000> : vector<5xf32>
    %82 = vector.multi_reduction <maximumf>, %81, %cst_45 [1] : vector<5x128xf32> to vector<5xf32>
    %83 = vector.shape_cast %82 : vector<5xf32> to vector<5x1xf32>
    %84 = vector.broadcast %78 : vector<5x1xf32> to vector<5x128xf32>
    %85 = arith.subf %72, %84 : vector<5x128xf32>
    %86 = arith.subf %83, %78 : vector<5x1xf32>
    %cst_46 = arith.constant 1.1920929E-7 : f32
    %87 = vector.broadcast %cst_46 : f32 to vector<5x1xf32>
    %88 = arith.maximumf %86, %87 : vector<5x1xf32>
    %89 = vector.broadcast %88 : vector<5x1xf32> to vector<5x128xf32>
    %90 = arith.divf %85, %89 : vector<5x128xf32>
    %c2_47 = arith.constant 2 : index
    %c0_48 = arith.constant 0 : index
    %c0_49 = arith.constant 0 : index
    %91 = vector.load %arg2[%c2_47, %c0_48, %c0_49] : memref<3x5x128xf32, #tpu.memory_space<vmem>>, vector<1x5x128xf32>
    %92 = vector.shape_cast %91 : vector<1x5x128xf32> to vector<5x128xf32>
    %93 = vector.shape_cast %90 : vector<5x128xf32> to vector<1x5x128xf32>
    tpu.vector_store %arg2[%c2_47, %c0_48, %c0_49], %93 {strides = array<i32>} : memref<3x5x128xf32, #tpu.memory_space<vmem>>, vector<1x5x128xf32>,
    return
  }
}

module attributes {stable_mosaic.version = 11 : i64} {
  func.func @_combine_kernel(%arg0: memref<3x5x4096xf32, #tpu.memory_space<vmem>>, %arg1: memref<1x4096xf32, #tpu.memory_space<vmem>>) attributes {dimension_semantics = [], scalar_prefetch = 0 : i64, scratch_operands = 0 : i64, tpu.core_type = #tpu.core_type<tc>} {
    %c0 = arith.constant 0 : index
    %c0_0 = arith.constant 0 : index
    %c0_1 = arith.constant 0 : index
    %0 = vector.load %arg0[%c0, %c0_0, %c0_1] : memref<3x5x4096xf32, #tpu.memory_space<vmem>>, vector<3x5x4096xf32>
    %cst = arith.constant dense<0.000000e+00> : vector<5x4096xf32>
    %1 = vector.multi_reduction <add>, %0, %cst [0] : vector<3x5x4096xf32> to vector<5x4096xf32>
    %cst_2 = arith.constant 3.000000e+00 : f32
    %2 = vector.broadcast %cst_2 : f32 to vector<5x4096xf32>
    %3 = arith.divf %1, %2 : vector<5x4096xf32>
    %cst_3 = arith.constant dense<0x7F800000> : vector<5xf32>
    %4 = vector.multi_reduction <minimumf>, %3, %cst_3 [1] : vector<5x4096xf32> to vector<5xf32>
    %5 = vector.shape_cast %4 : vector<5xf32> to vector<5x1xf32>
    %cst_4 = arith.constant dense<0xFF800000> : vector<5xf32>
    %6 = vector.multi_reduction <maximumf>, %3, %cst_4 [1] : vector<5x4096xf32> to vector<5xf32>
    %7 = vector.shape_cast %6 : vector<5xf32> to vector<5x1xf32>
    %8 = vector.broadcast %5 : vector<5x1xf32> to vector<5x4096xf32>
    %9 = arith.subf %3, %8 : vector<5x4096xf32>
    %10 = arith.subf %7, %5 : vector<5x1xf32>
    %cst_5 = arith.constant 1.1920929E-7 : f32
    %11 = vector.broadcast %cst_5 : f32 to vector<5x1xf32>
    %12 = arith.maximumf %10, %11 : vector<5x1xf32>
    %13 = vector.broadcast %12 : vector<5x1xf32> to vector<5x4096xf32>
    %14 = arith.divf %9, %13 : vector<5x4096xf32>
    %cst_6 = arith.constant dense<0xFF800000> : vector<4096xf32>
    %15 = vector.multi_reduction <maximumf>, %14, %cst_6 [0] : vector<5x4096xf32> to vector<4096xf32>
    %16 = vector.shape_cast %15 : vector<4096xf32> to vector<1x4096xf32>
    %c0_7 = arith.constant 0 : index
    %c0_8 = arith.constant 0 : index
    %17 = vector.load %arg1[%c0_7, %c0_8] : memref<1x4096xf32, #tpu.memory_space<vmem>>, vector<1x4096xf32>
    tpu.vector_store %arg1[%c0_7, %c0_8], %16 {strides = array<i32>} : memref<1x4096xf32, #tpu.memory_space<vmem>>, vector<1x4096xf32>,
    return
  }
}

</mosaic_0001>

<llo_original>
// kernel: yolo_v3_odam_forward.3
$region0: #{yolo_v3_odam_forward.3}
  #allocation0 [shape = 'u32[]', space=smem, size = 0x4, offset = 0x4, fixed_abs, tag = 'smem constant byte address 0x4 - core index']
  #allocation1 [shape = 'u32[144,128]{1,0:T(1,128)}', space=vmem, size = 0x12000, scoped, tag = 'internal scratch']
  %s0 = inlined_call_operand.vmem [shape: f32[72,128], index: 0, kind: input, shape index: {}]
  %s1 = inlined_call_operand.vmem [shape: f32[40,128], index: 1, kind: input, shape index: {}]
  %s2 = inlined_call_operand.vmem [shape: f32[4], index: 2, kind: input, shape index: {}]
  %s3 = inlined_call_operand.vmem [shape: f32[2], index: 3, kind: input, shape index: {}]
  %s4 = inlined_call_operand.hbm [shape: s32[1,1], index: 4, kind: output, shape index: {}]
  %s5 = sld [smem:[#allocation0]]
  $region34: #{yolo_v3_odam_forward.3} parent=0
    _
  %s7 = ssub.s32 1, %s5
  %s8 = scalar_select 0, %s7, %s5
  $region1: #{yolo_v3_odam_forward.3} parent=0
    #allocation2 [shape = 'u8[512]{0}', space=smem, size = 0x200, scoped, tag = 'input window, operand 2, single buffered']
    #allocation3 [shape = 's32[1]{0}', space=sflag, size = 0x4, scoped, tag = 'scoped memory for yolo_v3_odam_forward.3']
    #allocation4 [shape = 's32[1]{0}', space=sflag, size = 0x4, scoped, tag = 'scoped memory for yolo_v3_odam_forward.3']
    #allocation5 [shape = 'u8[512]{0}', space=smem, size = 0x200, scoped, tag = 'input window, operand 3, single buffered']
    #allocation6 [shape = 's32[1]{0}', space=sflag, size = 0x4, scoped, tag = 'scoped memory for yolo_v3_odam_forward.3']
    #allocation7 [shape = 'u8[512]{0}', space=vmem, size = 0x400, scoped, tag = 'output window, operand 0, single buffered']
    %9 = vsyncpa [#allocation4], 0
    %10 = vsyncpa [#allocation6], 0
    %11 = vsyncpa [#allocation3], 0
    // Predicated region
    $region2: #{yolo_v3_odam_forward.3} parent=1 // pred_check
      _
    $region3: #{yolo_v3_odam_forward.3} parent=1 // pred_check_branch
      %13 = sbr.rel (0) target = $region5
    $region4: #{yolo_v3_odam_forward.3} parent=1 // pred_region
      _
    $region5: #{yolo_v3_odam_forward.3} parent=1 // pred_fallthru
      _
    // Predicated region
    $region6: #{yolo_v3_odam_forward.3} parent=1 // pred_check
      _
    $region7: #{yolo_v3_odam_forward.3} parent=1 // pred_check_branch
      %15 = sbr.rel (0) target = $region9
    $region8: #{yolo_v3_odam_forward.3} parent=1 // pred_region
      _
    $region9: #{yolo_v3_odam_forward.3} parent=1 // pred_fallthru
      _
    // Predicated region
    $region10: #{yolo_v3_odam_forward.3} parent=1 // pred_check
      _
    $region11: #{yolo_v3_odam_forward.3} parent=1 // pred_check_branch
      %17 = sbr.rel (0) target = $region13
    $region12: #{yolo_v3_odam_forward.3} parent=1 // pred_region
      %s19 = ssub.s32 16, 16
      %20 = vsyncadd [#allocation4], %s19
      %s22 = sshll.u32 %s2, 4
      %s23 = int_to_ptr.vmem [resolvable:$true] %s22
      %25 = dma.vmem_to_smem %s23, 16, [#allocation2], [#allocation4]
    $region13: #{yolo_v3_odam_forward.3} parent=1 // pred_fallthru
      _
    // Predicated region
    $region14: #{yolo_v3_odam_forward.3} parent=1 // pred_check
      _
    $region15: #{yolo_v3_odam_forward.3} parent=1 // pred_check_branch
      %27 = sbr.rel (0) target = $region17
    $region16: #{yolo_v3_odam_forward.3} parent=1 // pred_region
      %s29 = ssub.s32 16, 16
      %30 = vsyncadd [#allocation6], %s29
      %s32 = sshll.u32 %s3, 4
      %s33 = int_to_ptr.vmem [resolvable:$true] %s32
      %35 = dma.vmem_to_smem %s33, 16, [#allocation5], [#allocation6]
    $region17: #{yolo_v3_odam_forward.3} parent=1 // pred_fallthru
      _
    // Predicated region
    $region18: #{yolo_v3_odam_forward.3} parent=1 // pred_check
      _
    $region19: #{yolo_v3_odam_forward.3} parent=1 // pred_check_branch
      %37 = sbr.rel (0) target = $region21
    $region20: #{yolo_v3_odam_forward.3} parent=1 // pred_region
      %38 = dma.done [#allocation4], 16
    $region21: #{yolo_v3_odam_forward.3} parent=1 // pred_fallthru
      _
    // Predicated region
    $region22: #{yolo_v3_odam_forward.3} parent=1 // pred_check
      _
    $region23: #{yolo_v3_odam_forward.3} parent=1 // pred_check_branch
      %40 = sbr.rel (0) target = $region25
    $region24: #{yolo_v3_odam_forward.3} parent=1 // pred_region
      %41 = dma.done [#allocation6], 16
    $region25: #{yolo_v3_odam_forward.3} parent=1 // pred_fallthru
      _
    %42 = sfence
    %v43 = vld [vmem:[%s0] sm:$0xff]
    %v44 = vxor.u32 %v43, 2147483648
    %v45 = vmul.f32 %v44, 1.442695
    %v46 = vpow.pop %v45
    %v47 = vadd.f32 %v46, 1.0
    %v48 = vrcp.pop %v47
    %v49 = vmul.f32 1.0, %v48
    %v50 = vld [vmem:[%s0 + $0x8] sm:$0xff]
    %v51 = vxor.u32 %v50, 2147483648
    %v52 = vmul.f32 %v51, 1.442695
    %v53 = vpow.pop %v52
    %v54 = vadd.f32 %v53, 1.0
    %v55 = vrcp.pop %v54
    %v56 = vmul.f32 1.0, %v55
    %v57 = vld [vmem:[%s0 + $0x10] sm:$0xff]
    %v58 = vld [vmem:[%s0 + $0x18] sm:$0xff]
    %v59 = vld [vmem:[%s0 + $0x38] sm:$0xff]
    %v60 = vxor.u32 %v59, 2147483648
    %v61 = vmul.f32 %v60, 1.442695
    %v62 = vpow.pop %v61
    %v63 = vadd.f32 %v62, 1.0
    %v64 = vrcp.pop %v63
    %v65 = vmul.f32 1.0, %v64
    %v66 = vld [vmem:[%s1] sm:$0xff]
    %v67 = vld [vmem:[%s1 + $0x8] sm:$0xff]
    %v68 = vld [vmem:[%s1 + $0x10] sm:$0xff]
    %v69 = vld [vmem:[%s1 + $0x18] sm:$0xff]
    %v70 = vld [vmem:[%s1 + $0x20] sm:$0xff]
    %v71 = vsub.f32 %v49, 0.5
    %v72 = vmul.f32 %v71, %v70
    %v73 = vadd.f32 %v66, %v72
    %v74 = vsub.f32 %v56, 0.5
    %v75 = vmul.f32 %v74, %v70
    %v76 = vadd.f32 %v67, %v75
    %v77 = vmul.f32 %v57, 1.442695
    %v78 = vpow.pop %v77
    %v79 = vmul.f32 %v68, %v78
    %v80 = vmul.f32 %v58, 1.442695
    %v81 = vpow.pop %v80
    %v82 = vmul.f32 %v69, %v81
    %s83 = sld [smem:[#allocation5]]
    %s84 = sld [smem:[#allocation5 + $0x1]]
    %v85 = vsub.f32 %v73, %v79
    %v86 = vstv %s83
    %v87 = vmul.f32 %v85, %v86
    %v88 = vsub.f32 %v76, %v82
    %v89 = vstv %s84
    %v90 = vmul.f32 %v88, %v89
    %v91 = vadd.f32 %v73, %v79
    %v92 = vmul.f32 %v91, %v86
    %v93 = vadd.f32 %v76, %v82
    %v94 = vmul.f32 %v93, %v89
    %s95 = sld [smem:[#allocation2]]
    %s96 = sld [smem:[#allocation2 + $0x1]]
    %s97 = sld [smem:[#allocation2 + $0x2]]
    %s98 = sld [smem:[#allocation2 + $0x3]]
    %v99 = vstv %s95
    %v100 = vmax.f32 %v87, %v99
    %v101 = vstv %s96
    %v102 = vmax.f32 %v90, %v101
    %v103 = vstv %s97
    %v104 = vmin.f32 %v92, %v103
    %v105 = vstv %s98
    %v106 = vmin.f32 %v94, %v105
    %v107 = vsub.f32 %v104, %v100
    %v108 = vmax.f32 %v107, 0.0
    %v109 = vsub.f32 %v106, %v102
    %v110 = vmax.f32 %v109, 0.0
    %v111 = vmul.f32 %v108, %v110
    %v112 = vsub.f32 %v92, %v87
    %v113 = vsub.f32 %v94, %v90
    %v114 = vmul.f32 %v112, %v113
    %s115 = ssub.f32 %s97, %s95
    %s116 = ssub.f32 %s98, %s96
    %s117 = smul.f32 %s115, %s116
    %v118 = vstv %s117
    %v119 = vadd.f32 %v114, %v118
    %v120 = vsub.f32 %v119, %v111
    %v121 = vmax.f32 %v120, 1.1920929e-07
    %v122 = vrcp.pop %v121
    %v123 = vmul.f32 %v111, %v122
    %v124 = vmul.f32 %v123, %v65
    %v125 = vlaneseq
    %v126 = vshrl.u32 %v125, 7
    %v127 = vlaneseq
    %v128 = vand.u32 %v127, 127
    %v129 = vmul.u32 %v126, 128
    %v130 = vadd.s32 %v129, %v128
    %vm131 = vcmp.lt.s32.totalorder %v130, 252
    %v132 = vsel %vm131, %v124, -inf
    %133 = vmax.xlane.f32.xlu0 %v132
    %v134 = vpop.xlane.xlu0 %133
    %v135 = vrot.slane %v134, 4
    %v136 = vmax.f32 %v134, %v135
    %v137 = vrot.slane %v136, 2
    %v138 = vmax.f32 %v136, %v137
    %v139 = vrot.slane %v138, 1
    %v140 = vmax.f32 %v138, %v139
    %vm141 = vcmp.eq.f32.partialorder %v132, %v140
    %vm142 = vmand %vm141, %vm131
    %v143 = vsel %vm142, %v130, 1024
    %v144 = vand.u32 %v143, 65535
    %v145 = vshra.s32 %v143, 16
    %v146 = vcvt.s32.f32 %v144
    %v147 = vcvt.s32.f32 %v145
    %148 = vmin.xlane.f32.xlu0 %v147
    %v149 = vpop.xlane.xlu0 %148
    %vm150 = vcmp.eq.f32.partialorder %v147, %v149
    %v151 = vsel %vm150, %v146, inf
    %152 = vmin.xlane.f32.xlu0 %v151
    %v153 = vpop.xlane.xlu0 %152
    %v154 = vcvt.f32.s32 %v153
    %v155 = vcvt.f32.s32 %v149
    %v156 = vshll.u32 %v155, 16
    %v157 = vadd.s32 %v156, %v154
    %v158 = vrot.slane %v157, 4
    %vm159 = vcmp.lt.s32.totalorder %v157, %v158
    %v160 = vsel %vm159, %v157, %v158
    %v161 = vrot.slane %v160, 2
    %vm162 = vcmp.lt.s32.totalorder %v160, %v161
    %v163 = vsel %vm162, %v160, %v161
    %v164 = vrot.slane %v163, 1
    %vm165 = vcmp.lt.s32.totalorder %v163, %v164
    %v166 = vsel %vm165, %v163, %v164
    %vm167 = vcmp.lt.s32.totalorder %v166, 251
    %v168 = vsel %vm167, %v166, 251
    %vm169 = vcmask 0
    %170 = vst.msk [vmem:[#allocation7] sm:$0x1] %vm169, %v168
    // Predicated region
    $region26: #{yolo_v3_odam_forward.3} parent=1 // pred_check
      _
    $region27: #{yolo_v3_odam_forward.3} parent=1 // pred_check_branch
      %172 = sbr.rel (0) target = $region29
    $region28: #{yolo_v3_odam_forward.3} parent=1 // pred_region
      %s174 = ssub.s32 16, 16
      %175 = vsyncadd [#allocation3], %s174
      %s177 = sshll.u32 [#allocation7], 4
      %s178 = int_to_ptr.vmem [resolvable:$true] %s177
      %180 = dma.vmem_to_hbm [thread:$0]  %s178, 16, %s4, [#allocation3]
    $region29: #{yolo_v3_odam_forward.3} parent=1 // pred_fallthru
      _
    // Predicated region
    $region30: #{yolo_v3_odam_forward.3} parent=1 // pred_check
      _
    $region31: #{yolo_v3_odam_forward.3} parent=1 // pred_check_branch
      %182 = sbr.rel (0) target = $region33
    $region32: #{yolo_v3_odam_forward.3} parent=1 // pred_region
      %183 = dma.done [#allocation3], 16
    $region33: #{yolo_v3_odam_forward.3} parent=1 // pred_fallthru
      _
    %184 = vsyncpa [#allocation3], 1
    %185 = vsyncpa [#allocation4], 1
    %186 = vsyncpa [#allocation6], 1

// kernel: split.2
$region0: #{split.2}
  #allocation0 [shape = 'u32[2048]{0}', space=vmem, size = 0x2000, scoped, tag = 'scoped memory for split.2']
  #allocation1 [shape = 'u32[2048]{0}', space=vmem, size = 0x2000, scoped, tag = 'scoped memory for split.2']
  #allocation2 [shape = 'u32[2048]{0}', space=vmem, size = 0x2000, scoped, tag = 'scoped memory for split.2']
  #allocation3 [shape = 'u32[2048]{0}', space=vmem, size = 0x2000, scoped, tag = 'scoped memory for split.2']
  #allocation4 [shape = 'u32[2048]{0}', space=vmem, size = 0x2000, scoped, tag = 'scoped memory for split.2']
  #allocation5 [shape = 's32[1]{0}', space=sflag, size = 0x4, scoped, tag = 'scoped memory for split.2']
  %s0 = inlined_call_operand.vmem [shape: bf16[5,252,9], index: 0, kind: input, shape index: {}]
  %s1 = inlined_call_operand.vmem [shape: bf16[5,192,9], index: 1, kind: output, shape index: {}]
  %s2 = scalar_lea.vmem %s0, 28
  %s3 = scalar_lea.vmem %s0, 28
  %s4 = scalar_lea.vmem %s0, 28
  %v5 = vld [vmem:[%s4] sm:$0xf]
  %v6 = vunpack.c.l.bf16 %v5
  %v7 = vunpack.c.h.bf16 %v5
  %s8 = scalar_lea.vmem %s4, 4
  %v9 = vld [vmem:[%s8] sm:$0xf]
  %v10 = vunpack.c.l.bf16 %v9
  %v11 = vunpack.c.h.bf16 %v9
  %vm12 = vcmask 1043456
  %v13 = vsel %vm12, %v10, %v6
  %v14 = vrot.slane %v13, 4
  %v15 = vpack.c.bf16 0.0, %v14
  %16 = vst [vmem:[%s1] sm:$0xf] %v15
  %s17 = scalar_lea.vmem %s4, 128
  %v18 = vld [vmem:[%s17] sm:$0xf]
  %v19 = vunpack.c.l.bf16 %v18
  %v20 = vunpack.c.h.bf16 %v18
  %s21 = scalar_lea.vmem %s4, 132
  %v22 = vld [vmem:[%s21] sm:$0xf]
  %v23 = vunpack.c.l.bf16 %v22
  %v24 = vunpack.c.h.bf16 %v22
  %vm25 = vcmask 1043456
  %v26 = vsel %vm25, %v23, %v19
  %v27 = vrot.slane %v26, 4
  %s28 = scalar_lea.vmem %s1, 96
  %v29 = vpack.c.bf16 0.0, %v27
  %30 = vst [vmem:[%s28] sm:$0xf] %v29
  %s31 = scalar_lea.vmem %s4, 256
  %v32 = vld [vmem:[%s31] sm:$0xf]
  %v33 = vunpack.c.l.bf16 %v32
  %v34 = vunpack.c.h.bf16 %v32
  %s35 = scalar_lea.vmem %s4, 260
  %v36 = vld [vmem:[%s35] sm:$0xf]
  %v37 = vunpack.c.l.bf16 %v36
  %v38 = vunpack.c.h.bf16 %v36
  %vm39 = vcmask 1043456
  %v40 = vsel %vm39, %v37, %v33
  %v41 = vrot.slane %v40, 4
  %s42 = scalar_lea.vmem %s1, 192
  %v43 = vpack.c.bf16 0.0, %v41
  %44 = vst [vmem:[%s42] sm:$0xf] %v43
  %s45 = scalar_lea.vmem %s4, 384
  %v46 = vld [vmem:[%s45] sm:$0xf]
  %v47 = vunpack.c.l.bf16 %v46
  %v48 = vunpack.c.h.bf16 %v46
  %s49 = scalar_lea.vmem %s4, 388
  %v50 = vld [vmem:[%s49] sm:$0xf]
  %v51 = vunpack.c.l.bf16 %v50
  %v52 = vunpack.c.h.bf16 %v50
  %vm53 = vcmask 1043456
  %v54 = vsel %vm53, %v51, %v47
  %v55 = vrot.slane %v54, 4
  %s56 = scalar_lea.vmem %s1, 288
  %v57 = vpack.c.bf16 0.0, %v55
  %58 = vst [vmem:[%s56] sm:$0xf] %v57
  %s59 = scalar_lea.vmem %s4, 512
  %v60 = vld [vmem:[%s59] sm:$0xf]
  %v61 = vunpack.c.l.bf16 %v60
  %v62 = vunpack.c.h.bf16 %v60
  %s63 = scalar_lea.vmem %s4, 516
  %v64 = vld [vmem:[%s63] sm:$0xf]
  %v65 = vunpack.c.l.bf16 %v64
  %v66 = vunpack.c.h.bf16 %v64
  %vm67 = vcmask 1043456
  %v68 = vsel %vm67, %v65, %v61
  %v69 = vrot.slane %v68, 4
  %s70 = scalar_lea.vmem %s1, 384
  %v71 = vpack.c.bf16 0.0, %v69
  %72 = vst [vmem:[%s70] sm:$0xf] %v71
  %s73 = scalar_lea.vmem %s4, 8
  %v74 = vld [vmem:[%s73] sm:$0xf]
  %v75 = vunpack.c.l.bf16 %v74
  %v76 = vunpack.c.h.bf16 %v74
  %vm77 = vcmask 1043456
  %v78 = vsel %vm77, %v75, %v10
  %v79 = vrot.slane %v78, 4
  %s80 = scalar_lea.vmem %s1, 4
  %v81 = vpack.c.bf16 0.0, %v79
  %82 = vst [vmem:[%s80] sm:$0xf] %v81
  %s83 = scalar_lea.vmem %s4, 136
  %v84 = vld [vmem:[%s83] sm:$0xf]
  %v85 = vunpack.c.l.bf16 %v84
  %v86 = vunpack.c.h.bf16 %v84
  %vm87 = vcmask 1043456
  %v88 = vsel %vm87, %v85, %v23
  %v89 = vrot.slane %v88, 4
  %s90 = scalar_lea.vmem %s1, 100
  %v91 = vpack.c.bf16 0.0, %v89
  %92 = vst [vmem:[%s90] sm:$0xf] %v91
  %s93 = scalar_lea.vmem %s4, 264
  %v94 = vld [vmem:[%s93] sm:$0xf]
  %v95 = vunpack.c.l.bf16 %v94
  %v96 = vunpack.c.h.bf16 %v94
  %vm97 = vcmask 1043456
  %v98 = vsel %vm97, %v95, %v37
  %v99 = vrot.slane %v98, 4
  %s100 = scalar_lea.vmem %s1, 196
  %v101 = vpack.c.bf16 0.0, %v99
  %102 = vst [vmem:[%s100] sm:$0xf] %v101
  %s103 = scalar_lea.vmem %s4, 392
  %v104 = vld [vmem:[%s103] sm:$0xf]
  %v105 = vunpack.c.l.bf16 %v104
  %v106 = vunpack.c.h.bf16 %v104
  %vm107 = vcmask 1043456
  %v108 = vsel %vm107, %v105, %v51
  %v109 = vrot.slane %v108, 4
  %s110 = scalar_lea.vmem %s1, 292
  %v111 = vpack.c.bf16 0.0, %v109
  %112 = vst [vmem:[%s110] sm:$0xf] %v111
  %s113 = scalar_lea.vmem %s4, 520
  %v114 = vld [vmem:[%s113] sm:$0xf]
  %v115 = vunpack.c.l.bf16 %v114
  %v116 = vunpack.c.h.bf16 %v114
  %vm117 = vcmask 1043456
  %v118 = vsel %vm117, %v115, %v65
  %v119 = vrot.slane %v118, 4
  %s120 = scalar_lea.vmem %s1, 388
  %v121 = vpack.c.bf16 0.0, %v119
  %122 = vst [vmem:[%s120] sm:$0xf] %v121
  %s123 = scalar_lea.vmem %s4, 12
  %v124 = vld [vmem:[%s123] sm:$0xf]
  %v125 = vunpack.c.l.bf16 %v124
  %v126 = vunpack.c.h.bf16 %v124
  %vm127 = vcmask 1043456
  %v128 = vsel %vm127, %v125, %v75
  %v129 = vrot.slane %v128, 4
  %s130 = scalar_lea.vmem %s1, 8
  %v131 = vpack.c.bf16 0.0, %v129
  %132 = vst [vmem:[%s130] sm:$0xf] %v131
  %s133 = scalar_lea.vmem %s4, 140
  %v134 = vld [vmem:[%s133] sm:$0xf]
  %v135 = vunpack.c.l.bf16 %v134
  %v136 = vunpack.c.h.bf16 %v134
  %vm137 = vcmask 1043456
  %v138 = vsel %vm137, %v135, %v85
  %v139 = vrot.slane %v138, 4
  %s140 = scalar_lea.vmem %s1, 104
  %v141 = vpack.c.bf16 0.0, %v139
  %142 = vst [vmem:[%s140] sm:$0xf] %v141
  %s143 = scalar_lea.vmem %s4, 268
  %v144 = vld [vmem:[%s143] sm:$0xf]
  %v145 = vunpack.c.l.bf16 %v144
  %v146 = vunpack.c.h.bf16 %v144
  %vm147 = vcmask 1043456
  %v148 = vsel %vm147, %v145, %v95
  %v149 = vrot.slane %v148, 4
  %s150 = scalar_lea.vmem %s1, 200
  %v151 = vpack.c.bf16 0.0, %v149
  %152 = vst [vmem:[%s150] sm:$0xf] %v151
  %s153 = scalar_lea.vmem %s4, 396
  %v154 = vld [vmem:[%s153] sm:$0xf]
  %v155 = vunpack.c.l.bf16 %v154
  %v156 = vunpack.c.h.bf16 %v154
  %vm157 = vcmask 1043456
  %v158 = vsel %vm157, %v155, %v105
  %v159 = vrot.slane %v158, 4
  %s160 = scalar_lea.vmem %s1, 296
  %v161 = vpack.c.bf16 0.0, %v159
  %162 = vst [vmem:[%s160] sm:$0xf] %v161
  %s163 = scalar_lea.vmem %s4, 524
  %v164 = vld [vmem:[%s163] sm:$0xf]
  %v165 = vunpack.c.l.bf16 %v164
  %v166 = vunpack.c.h.bf16 %v164
  %vm167 = vcmask 1043456
  %v168 = vsel %vm167, %v165, %v115
  %v169 = vrot.slane %v168, 4
  %s170 = scalar_lea.vmem %s1, 392
  %v171 = vpack.c.bf16 0.0, %v169
  %172 = vst [vmem:[%s170] sm:$0xf] %v171
  %s173 = scalar_lea.vmem %s4, 16
  %v174 = vld [vmem:[%s173] sm:$0xf]
  %v175 = vunpack.c.l.bf16 %v174
  %v176 = vunpack.c.h.bf16 %v174
  %vm177 = vcmask 1043456
  %v178 = vsel %vm177, %v175, %v125
  %v179 = vrot.slane %v178, 4
  %s180 = scalar_lea.vmem %s1, 12
  %v181 = vpack.c.bf16 0.0, %v179
  %182 = vst [vmem:[%s180] sm:$0xf] %v181
  %s183 = scalar_lea.vmem %s4, 144
  %v184 = vld [vmem:[%s183] sm:$0xf]
  %v185 = vunpack.c.l.bf16 %v184
  %v186 = vunpack.c.h.bf16 %v184
  %vm187 = vcmask 1043456
  %v188 = vsel %vm187, %v185, %v135
  %v189 = vrot.slane %v188, 4
  %s190 = scalar_lea.vmem %s1, 108
  %v191 = vpack.c.bf16 0.0, %v189
  %192 = vst [vmem:[%s190] sm:$0xf] %v191
  %s193 = scalar_lea.vmem %s4, 272
  %v194 = vld [vmem:[%s193] sm:$0xf]
  %v195 = vunpack.c.l.bf16 %v194
  %v196 = vunpack.c.h.bf16 %v194
  %vm197 = vcmask 1043456
  %v198 = vsel %vm197, %v195, %v145
  %v199 = vrot.slane %v198, 4
  %s200 = scalar_lea.vmem %s1, 204
  %v201 = vpack.c.bf16 0.0, %v199
  %202 = vst [vmem:[%s200] sm:$0xf] %v201
  %s203 = scalar_lea.vmem %s4, 400
  %v204 = vld [vmem:[%s203] sm:$0xf]
  %v205 = vunpack.c.l.bf16 %v204
  %v206 = vunpack.c.h.bf16 %v204
  %vm207 = vcmask 1043456
  %v208 = vsel %vm207, %v205, %v155
  %v209 = vrot.slane %v208, 4
  %s210 = scalar_lea.vmem %s1, 300
  %v211 = vpack.c.bf16 0.0, %v209
  %212 = vst [vmem:[%s210] sm:$0xf] %v211
  %s213 = scalar_lea.vmem %s4, 528
  %v214 = vld [vmem:[%s213] sm:$0xf]
  %v215 = vunpack.c.l.bf16 %v214
  %v216 = vunpack.c.h.bf16 %v214
  %vm217 = vcmask 1043456
  %v218 = vsel %vm217, %v215, %v165
  %v219 = vrot.slane %v218, 4
  %s220 = scalar_lea.vmem %s1, 396
  %v221 = vpack.c.bf16 0.0, %v219
  %222 = vst [vmem:[%s220] sm:$0xf] %v221
  %s223 = scalar_lea.vmem %s4, 20
  %v224 = vld [vmem:[%s223] sm:$0xf]
  %v225 = vunpack.c.l.bf16 %v224
  %v226 = vunpack.c.h.bf16 %v224
  %vm227 = vcmask 1043456
  %v228 = vsel %vm227, %v225, %v175
  %v229 = vrot.slane %v228, 4
  %s230 = scalar_lea.vmem %s1, 16
  %v231 = vpack.c.bf16 0.0, %v229
  %232 = vst [vmem:[%s230] sm:$0xf] %v231
  %s233 = scalar_lea.vmem %s4, 148
  %v234 = vld [vmem:[%s233] sm:$0xf]
  %v235 = vunpack.c.l.bf16 %v234
  %v236 = vunpack.c.h.bf16 %v234
  %vm237 = vcmask 1043456
  %v238 = vsel %vm237, %v235, %v185
  %v239 = vrot.slane %v238, 4
  %s240 = scalar_lea.vmem %s1, 112
  %v241 = vpack.c.bf16 0.0, %v239
  %242 = vst [vmem:[%s240] sm:$0xf] %v241
  %s243 = scalar_lea.vmem %s4, 276
  %v244 = vld [vmem:[%s243] sm:$0xf]
  %v245 = vunpack.c.l.bf16 %v244
  %v246 = vunpack.c.h.bf16 %v244
  %vm247 = vcmask 1043456
  %v248 = vsel %vm247, %v245, %v195
  %v249 = vrot.slane %v248, 4
  %s250 = scalar_lea.vmem %s1, 208
  %v251 = vpack.c.bf16 0.0, %v249
  %252 = vst [vmem:[%s250] sm:$0xf] %v251
  %s253 = scalar_lea.vmem %s4, 404
  %v254 = vld [vmem:[%s253] sm:$0xf]
  %v255 = vunpack.c.l.bf16 %v254
  %v256 = vunpack.c.h.bf16 %v254
  %vm257 = vcmask 1043456
  %v258 = vsel %vm257, %v255, %v205
  %v259 = vrot.slane %v258, 4
  %s260 = scalar_lea.vmem %s1, 304
  %v261 = vpack.c.bf16 0.0, %v259
  %262 = vst [vmem:[%s260] sm:$0xf] %v261
  %s263 = scalar_lea.vmem %s4, 532
  %v264 = vld [vmem:[%s263] sm:$0xf]
  %v265 = vunpack.c.l.bf16 %v264
  %v266 = vunpack.c.h.bf16 %v264
  %vm267 = vcmask 1043456
  %v268 = vsel %vm267, %v265, %v215
  %v269 = vrot.slane %v268, 4
  %s270 = scalar_lea.vmem %s1, 400
  %v271 = vpack.c.bf16 0.0, %v269
  %272 = vst [vmem:[%s270] sm:$0xf] %v271
  %s273 = scalar_lea.vmem %s4, 24
  %v274 = vld [vmem:[%s273] sm:$0xf]
  %v275 = vunpack.c.l.bf16 %v274
  %v276 = vunpack.c.h.bf16 %v274
  %vm277 = vcmask 1043456
  %v278 = vsel %vm277, %v275, %v225
  %v279 = vrot.slane %v278, 4
  %s280 = scalar_lea.vmem %s1, 20
  %v281 = vpack.c.bf16 0.0, %v279
  %282 = vst [vmem:[%s280] sm:$0xf] %v281
  %s283 = scalar_lea.vmem %s4, 152
  %v284 = vld [vmem:[%s283] sm:$0xf]
  %v285 = vunpack.c.l.bf16 %v284
  %v286 = vunpack.c.h.bf16 %v284
  %vm287 = vcmask 1043456
  %v288 = vsel %vm287, %v285, %v235
  %v289 = vrot.slane %v288, 4
  %s290 = scalar_lea.vmem %s1, 116
  %v291 = vpack.c.bf16 0.0, %v289
  %292 = vst [vmem:[%s290] sm:$0xf] %v291
  %s293 = scalar_lea.vmem %s4, 280
  %v294 = vld [vmem:[%s293] sm:$0xf]
  %v295 = vunpack.c.l.bf16 %v294
  %v296 = vunpack.c.h.bf16 %v294
  %vm297 = vcmask 1043456
  %v298 = vsel %vm297, %v295, %v245
  %v299 = vrot.slane %v298, 4
  %s300 = scalar_lea.vmem %s1, 212
  %v301 = vpack.c.bf16 0.0, %v299
  %302 = vst [vmem:[%s300] sm:$0xf] %v301
  %s303 = scalar_lea.vmem %s4, 408
  %v304 = vld [vmem:[%s303] sm:$0xf]
  %v305 = vunpack.c.l.bf16 %v304
  %v306 = vunpack.c.h.bf16 %v304
  %vm307 = vcmask 1043456
  %v308 = vsel %vm307, %v305, %v255
  %v309 = vrot.slane %v308, 4
  %s310 = scalar_lea.vmem %s1, 308
  %v311 = vpack.c.bf16 0.0, %v309
  %312 = vst [vmem:[%s310] sm:$0xf] %v311
  %s313 = scalar_lea.vmem %s4, 536
  %v314 = vld [vmem:[%s313] sm:$0xf]
  %v315 = vunpack.c.l.bf16 %v314
  %v316 = vunpack.c.h.bf16 %v314
  %vm317 = vcmask 1043456
  %v318 = vsel %vm317, %v315, %v265
  %v319 = vrot.slane %v318, 4
  %s320 = scalar_lea.vmem %s1, 404
  %v321 = vpack.c.bf16 0.0, %v319
  %322 = vst [vmem:[%s320] sm:$0xf] %v321
  %s323 = scalar_lea.vmem %s4, 28
  %v324 = vld [vmem:[%s323] sm:$0xf]
  %v325 = vunpack.c.l.bf16 %v324
  %v326 = vunpack.c.h.bf16 %v324
  %vm327 = vcmask 1043456
  %v328 = vsel %vm327, %v325, %v275
  %v329 = vrot.slane %v328, 4
  %s330 = scalar_lea.vmem %s1, 24
  %v331 = vpack.c.bf16 0.0, %v329
  %332 = vst [vmem:[%s330] sm:$0xf] %v331
  %s333 = scalar_lea.vmem %s4, 156
  %v334 = vld [vmem:[%s333] sm:$0xf]
  %v335 = vunpack.c.l.bf16 %v334
  %v336 = vunpack.c.h.bf16 %v334
  %vm337 = vcmask 1043456
  %v338 = vsel %vm337, %v335, %v285
  %v339 = vrot.slane %v338, 4
  %s340 = scalar_lea.vmem %s1, 120
  %v341 = vpack.c.bf16 0.0, %v339
  %342 = vst [vmem:[%s340] sm:$0xf] %v341
  %s343 = scalar_lea.vmem %s4, 284
  %v344 = vld [vmem:[%s343] sm:$0xf]
  %v345 = vunpack.c.l.bf16 %v344
  %v346 = vunpack.c.h.bf16 %v344
  %vm347 = vcmask 1043456
  %v348 = vsel %vm347, %v345, %v295
  %v349 = vrot.slane %v348, 4
  %s350 = scalar_lea.vmem %s1, 216
  %v351 = vpack.c.bf16 0.0, %v349
  %352 = vst [vmem:[%s350] sm:$0xf] %v351
  %s353 = scalar_lea.vmem %s4, 412
  %v354 = vld [vmem:[%s353] sm:$0xf]
  %v355 = vunpack.c.l.bf16 %v354
  %v356 = vunpack.c.h.bf16 %v354
  %vm357 = vcmask 1043456
  %v358 = vsel %vm357, %v355, %v305
  %v359 = vrot.slane %v358, 4
  %s360 = scalar_lea.vmem %s1, 312
  %v361 = vpack.c.bf16 0.0, %v359
  %362 = vst [vmem:[%s360] sm:$0xf] %v361
  %s363 = scalar_lea.vmem %s4, 540
  %v364 = vld [vmem:[%s363] sm:$0xf]
  %v365 = vunpack.c.l.bf16 %v364
  %v366 = vunpack.c.h.bf16 %v364
  %vm367 = vcmask 1043456
  %v368 = vsel %vm367, %v365, %v315
  %v369 = vrot.slane %v368, 4
  %s370 = scalar_lea.vmem %s1, 408
  %v371 = vpack.c.bf16 0.0, %v369
  %372 = vst [vmem:[%s370] sm:$0xf] %v371
  %s373 = scalar_lea.vmem %s4, 32
  %v374 = vld [vmem:[%s373] sm:$0xf]
  %v375 = vunpack.c.l.bf16 %v374
  %v376 = vunpack.c.h.bf16 %v374
  %vm377 = vcmask 1043456
  %v378 = vsel %vm377, %v375, %v325
  %v379 = vrot.slane %v378, 4
  %s380 = scalar_lea.vmem %s1, 28
  %v381 = vpack.c.bf16 0.0, %v379
  %382 = vst [vmem:[%s380] sm:$0xf] %v381
  %s383 = scalar_lea.vmem %s4, 160
  %v384 = vld [vmem:[%s383] sm:$0xf]
  %v385 = vunpack.c.l.bf16 %v384
  %v386 = vunpack.c.h.bf16 %v384
  %vm387 = vcmask 1043456
  %v388 = vsel %vm387, %v385, %v335
  %v389 = vrot.slane %v388, 4
  %s390 = scalar_lea.vmem %s1, 124
  %v391 = vpack.c.bf16 0.0, %v389
  %392 = vst [vmem:[%s390] sm:$0xf] %v391
  %s393 = scalar_lea.vmem %s4, 288
  %v394 = vld [vmem:[%s393] sm:$0xf]
  %v395 = vunpack.c.l.bf16 %v394
  %v396 = vunpack.c.h.bf16 %v394
  %vm397 = vcmask 1043456
  %v398 = vsel %vm397, %v395, %v345
  %v399 = vrot.slane %v398, 4
  %s400 = scalar_lea.vmem %s1, 220
  %v401 = vpack.c.bf16 0.0, %v399
  %402 = vst [vmem:[%s400] sm:$0xf] %v401
  %s403 = scalar_lea.vmem %s4, 416
  %v404 = vld [vmem:[%s403] sm:$0xf]
  %v405 = vunpack.c.l.bf16 %v404
  %v406 = vunpack.c.h.bf16 %v404
  %vm407 = vcmask 1043456
  %v408 = vsel %vm407, %v405, %v355
  %v409 = vrot.slane %v408, 4
  %s410 = scalar_lea.vmem %s1, 316
  %v411 = vpack.c.bf16 0.0, %v409
  %412 = vst [vmem:[%s410] sm:$0xf] %v411
  %s413 = scalar_lea.vmem %s4, 544
  %v414 = vld [vmem:[%s413] sm:$0xf]
  %v415 = vunpack.c.l.bf16 %v414
  %v416 = vunpack.c.h.bf16 %v414
  %vm417 = vcmask 1043456
  %v418 = vsel %vm417, %v415, %v365
  %v419 = vrot.slane %v418, 4
  %s420 = scalar_lea.vmem %s1, 412
  %v421 = vpack.c.bf16 0.0, %v419
  %422 = vst [vmem:[%s420] sm:$0xf] %v421
  %s423 = scalar_lea.vmem %s4, 36
  %v424 = vld [vmem:[%s423] sm:$0xf]
  %v425 = vunpack.c.l.bf16 %v424
  %v426 = vunpack.c.h.bf16 %v424
  %vm427 = vcmask 1043456
  %v428 = vsel %vm427, %v425, %v375
  %v429 = vrot.slane %v428, 4
  %s430 = scalar_lea.vmem %s1, 32
  %v431 = vpack.c.bf16 0.0, %v429
  %432 = vst [vmem:[%s430] sm:$0xf] %v431
  %s433 = scalar_lea.vmem %s4, 164
  %v434 = vld [vmem:[%s433] sm:$0xf]
  %v435 = vunpack.c.l.bf16 %v434
  %v436 = vunpack.c.h.bf16 %v434
  %vm437 = vcmask 1043456
  %v438 = vsel %vm437, %v435, %v385
  %v439 = vrot.slane %v438, 4
  %s440 = scalar_lea.vmem %s1, 128
  %v441 = vpack.c.bf16 0.0, %v439
  %442 = vst [vmem:[%s440] sm:$0xf] %v441
  %s443 = scalar_lea.vmem %s4, 292
  %v444 = vld [vmem:[%s443] sm:$0xf]
  %v445 = vunpack.c.l.bf16 %v444
  %v446 = vunpack.c.h.bf16 %v444
  %vm447 = vcmask 1043456
  %v448 = vsel %vm447, %v445, %v395
  %v449 = vrot.slane %v448, 4
  %s450 = scalar_lea.vmem %s1, 224
  %v451 = vpack.c.bf16 0.0, %v449
  %452 = vst [vmem:[%s450] sm:$0xf] %v451
  %s453 = scalar_lea.vmem %s4, 420
  %v454 = vld [vmem:[%s453] sm:$0xf]
  %v455 = vunpack.c.l.bf16 %v454
  %v456 = vunpack.c.h.bf16 %v454
  %vm457 = vcmask 1043456
  %v458 = vsel %vm457, %v455, %v405
  %v459 = vrot.slane %v458, 4
  %s460 = scalar_lea.vmem %s1, 320
  %v461 = vpack.c.bf16 0.0, %v459
  %462 = vst [vmem:[%s460] sm:$0xf] %v461
  %s463 = scalar_lea.vmem %s4, 548
  %v464 = vld [vmem:[%s463] sm:$0xf]
  %v465 = vunpack.c.l.bf16 %v464
  %v466 = vunpack.c.h.bf16 %v464
  %vm467 = vcmask 1043456
  %v468 = vsel %vm467, %v465, %v415
  %v469 = vrot.slane %v468, 4
  %s470 = scalar_lea.vmem %s1, 416
  %v471 = vpack.c.bf16 0.0, %v469
  %472 = vst [vmem:[%s470] sm:$0xf] %v471
  %s473 = scalar_lea.vmem %s4, 40
  %v474 = vld [vmem:[%s473] sm:$0xf]
  %v475 = vunpack.c.l.bf16 %v474
  %v476 = vunpack.c.h.bf16 %v474
  %vm477 = vcmask 1043456
  %v478 = vsel %vm477, %v475, %v425
  %v479 = vrot.slane %v478, 4
  %s480 = scalar_lea.vmem %s1, 36
  %v481 = vpack.c.bf16 0.0, %v479
  %482 = vst [vmem:[%s480] sm:$0xf] %v481
  %s483 = scalar_lea.vmem %s4, 168
  %v484 = vld [vmem:[%s483] sm:$0xf]
  %v485 = vunpack.c.l.bf16 %v484
  %v486 = vunpack.c.h.bf16 %v484
  %vm487 = vcmask 1043456
  %v488 = vsel %vm487, %v485, %v435
  %v489 = vrot.slane %v488, 4
  %s490 = scalar_lea.vmem %s1, 132
  %v491 = vpack.c.bf16 0.0, %v489
  %492 = vst [vmem:[%s490] sm:$0xf] %v491
  %s493 = scalar_lea.vmem %s4, 296
  %v494 = vld [vmem:[%s493] sm:$0xf]
  %v495 = vunpack.c.l.bf16 %v494
  %v496 = vunpack.c.h.bf16 %v494
  %vm497 = vcmask 1043456
  %v498 = vsel %vm497, %v495, %v445
  %v499 = vrot.slane %v498, 4
  %s500 = scalar_lea.vmem %s1, 228
  %v501 = vpack.c.bf16 0.0, %v499
  %502 = vst [vmem:[%s500] sm:$0xf] %v501
  %s503 = scalar_lea.vmem %s4, 424
  %v504 = vld [vmem:[%s503] sm:$0xf]
  %v505 = vunpack.c.l.bf16 %v504
  %v506 = vunpack.c.h.bf16 %v504
  %vm507 = vcmask 1043456
  %v508 = vsel %vm507, %v505, %v455
  %v509 = vrot.slane %v508, 4
  %s510 = scalar_lea.vmem %s1, 324
  %v511 = vpack.c.bf16 0.0, %v509
  %512 = vst [vmem:[%s510] sm:$0xf] %v511
  %s513 = scalar_lea.vmem %s4, 552
  %v514 = vld [vmem:[%s513] sm:$0xf]
  %v515 = vunpack.c.l.bf16 %v514
  %v516 = vunpack.c.h.bf16 %v514
  %vm517 = vcmask 1043456
  %v518 = vsel %vm517, %v515, %v465
  %v519 = vrot.slane %v518, 4
  %s520 = scalar_lea.vmem %s1, 420
  %v521 = vpack.c.bf16 0.0, %v519
  %522 = vst [vmem:[%s520] sm:$0xf] %v521
  %s523 = scalar_lea.vmem %s4, 44
  %v524 = vld [vmem:[%s523] sm:$0xf]
  %v525 = vunpack.c.l.bf16 %v524
  %v526 = vunpack.c.h.bf16 %v524
  %vm527 = vcmask 1043456
  %v528 = vsel %vm527, %v525, %v475
  %v529 = vrot.slane %v528, 4
  %s530 = scalar_lea.vmem %s1, 40
  %v531 = vpack.c.bf16 0.0, %v529
  %532 = vst [vmem:[%s530] sm:$0xf] %v531
  %s533 = scalar_lea.vmem %s4, 172
  %v534 = vld [vmem:[%s533] sm:$0xf]
  %v535 = vunpack.c.l.bf16 %v534
  %v536 = vunpack.c.h.bf16 %v534
  %vm537 = vcmask 1043456
  %v538 = vsel %vm537, %v535, %v485
  %v539 = vrot.slane %v538, 4
  %s540 = scalar_lea.vmem %s1, 136
  %v541 = vpack.c.bf16 0.0, %v539
  %542 = vst [vmem:[%s540] sm:$0xf] %v541
  %s543 = scalar_lea.vmem %s4, 300
  %v544 = vld [vmem:[%s543] sm:$0xf]
  %v545 = vunpack.c.l.bf16 %v544
  %v546 = vunpack.c.h.bf16 %v544
  %vm547 = vcmask 1043456
  %v548 = vsel %vm547, %v545, %v495
  %v549 = vrot.slane %v548, 4
  %s550 = scalar_lea.vmem %s1, 232
  %v551 = vpack.c.bf16 0.0, %v549
  %552 = vst [vmem:[%s550] sm:$0xf] %v551
  %s553 = scalar_lea.vmem %s4, 428
  %v554 = vld [vmem:[%s553] sm:$0xf]
  %v555 = vunpack.c.l.bf16 %v554
  %v556 = vunpack.c.h.bf16 %v554
  %vm557 = vcmask 1043456
  %v558 = vsel %vm557, %v555, %v505
  %v559 = vrot.slane %v558, 4
  %s560 = scalar_lea.vmem %s1, 328
  %v561 = vpack.c.bf16 0.0, %v559
  %562 = vst [vmem:[%s560] sm:$0xf] %v561
  %s563 = scalar_lea.vmem %s4, 556
  %v564 = vld [vmem:[%s563] sm:$0xf]
  %v565 = vunpack.c.l.bf16 %v564
  %v566 = vunpack.c.h.bf16 %v564
  %vm567 = vcmask 1043456
  %v568 = vsel %vm567, %v565, %v515
  %v569 = vrot.slane %v568, 4
  %s570 = scalar_lea.vmem %s1, 424
  %v571 = vpack.c.bf16 0.0, %v569
  %572 = vst [vmem:[%s570] sm:$0xf] %v571
  %s573 = scalar_lea.vmem %s4, 48
  %v574 = vld [vmem:[%s573] sm:$0xf]
  %v575 = vunpack.c.l.bf16 %v574
  %v576 = vunpack.c.h.bf16 %v574
  %vm577 = vcmask 1043456
  %v578 = vsel %vm577, %v575, %v525
  %v579 = vrot.slane %v578, 4
  %s580 = scalar_lea.vmem %s1, 44
  %v581 = vpack.c.bf16 0.0, %v579
  %582 = vst [vmem:[%s580] sm:$0xf] %v581
  %s583 = scalar_lea.vmem %s4, 176
  %v584 = vld [vmem:[%s583] sm:$0xf]
  %v585 = vunpack.c.l.bf16 %v584
  %v586 = vunpack.c.h.bf16 %v584
  %vm587 = vcmask 1043456
  %v588 = vsel %vm587, %v585, %v535
  %v589 = vrot.slane %v588, 4
  %s590 = scalar_lea.vmem %s1, 140
  %v591 = vpack.c.bf16 0.0, %v589
  %592 = vst [vmem:[%s590] sm:$0xf] %v591
  %s593 = scalar_lea.vmem %s4, 304
  %v594 = vld [vmem:[%s593] sm:$0xf]
  %v595 = vunpack.c.l.bf16 %v594
  %v596 = vunpack.c.h.bf16 %v594
  %vm597 = vcmask 1043456
  %v598 = vsel %vm597, %v595, %v545
  %v599 = vrot.slane %v598, 4
  %s600 = scalar_lea.vmem %s1, 236
  %v601 = vpack.c.bf16 0.0, %v599
  %602 = vst [vmem:[%s600] sm:$0xf] %v601
  %s603 = scalar_lea.vmem %s4, 432
  %v604 = vld [vmem:[%s603] sm:$0xf]
  %v605 = vunpack.c.l.bf16 %v604
  %v606 = vunpack.c.h.bf16 %v604
  %vm607 = vcmask 1043456
  %v608 = vsel %vm607, %v605, %v555
  %v609 = vrot.slane %v608, 4
  %s610 = scalar_lea.vmem %s1, 332
  %v611 = vpack.c.bf16 0.0, %v609
  %612 = vst [vmem:[%s610] sm:$0xf] %v611
  %s613 = scalar_lea.vmem %s4, 560
  %v614 = vld [vmem:[%s613] sm:$0xf]
  %v615 = vunpack.c.l.bf16 %v614
  %v616 = vunpack.c.h.bf16 %v614
  %vm617 = vcmask 1043456
  %v618 = vsel %vm617, %v615, %v565
  %v619 = vrot.slane %v618, 4
  %s620 = scalar_lea.vmem %s1, 428
  %v621 = vpack.c.bf16 0.0, %v619
  %622 = vst [vmem:[%s620] sm:$0xf] %v621
  %s623 = scalar_lea.vmem %s4, 52
  %v624 = vld [vmem:[%s623] sm:$0xf]
  %v625 = vunpack.c.l.bf16 %v624
  %v626 = vunpack.c.h.bf16 %v624
  %vm627 = vcmask 1043456
  %v628 = vsel %vm627, %v625, %v575
  %v629 = vrot.slane %v628, 4
  %s630 = scalar_lea.vmem %s1, 48
  %v631 = vpack.c.bf16 0.0, %v629
  %632 = vst [vmem:[%s630] sm:$0xf] %v631
  %s633 = scalar_lea.vmem %s4, 180
  %v634 = vld [vmem:[%s633] sm:$0xf]
  %v635 = vunpack.c.l.bf16 %v634
  %v636 = vunpack.c.h.bf16 %v634
  %vm637 = vcmask 1043456
  %v638 = vsel %vm637, %v635, %v585
  %v639 = vrot.slane %v638, 4
  %s640 = scalar_lea.vmem %s1, 144
  %v641 = vpack.c.bf16 0.0, %v639
  %642 = vst [vmem:[%s640] sm:$0xf] %v641
  %s643 = scalar_lea.vmem %s4, 308
  %v644 = vld [vmem:[%s643] sm:$0xf]
  %v645 = vunpack.c.l.bf16 %v644
  %v646 = vunpack.c.h.bf16 %v644
  %vm647 = vcmask 1043456
  %v648 = vsel %vm647, %v645, %v595
  %v649 = vrot.slane %v648, 4
  %s650 = scalar_lea.vmem %s1, 240
  %v651 = vpack.c.bf16 0.0, %v649
  %652 = vst [vmem:[%s650] sm:$0xf] %v651
  %s653 = scalar_lea.vmem %s4, 436
  %v654 = vld [vmem:[%s653] sm:$0xf]
  %v655 = vunpack.c.l.bf16 %v654
  %v656 = vunpack.c.h.bf16 %v654
  %vm657 = vcmask 1043456
  %v658 = vsel %vm657, %v655, %v605
  %v659 = vrot.slane %v658, 4
  %s660 = scalar_lea.vmem %s1, 336
  %v661 = vpack.c.bf16 0.0, %v659
  %662 = vst [vmem:[%s660] sm:$0xf] %v661
  %s663 = scalar_lea.vmem %s4, 564
  %v664 = vld [vmem:[%s663] sm:$0xf]
  %v665 = vunpack.c.l.bf16 %v664
  %v666 = vunpack.c.h.bf16 %v664
  %vm667 = vcmask 1043456
  %v668 = vsel %vm667, %v665, %v615
  %v669 = vrot.slane %v668, 4
  %s670 = scalar_lea.vmem %s1, 432
  %v671 = vpack.c.bf16 0.0, %v669
  %672 = vst [vmem:[%s670] sm:$0xf] %v671
  %s673 = scalar_lea.vmem %s4, 56
  %v674 = vld [vmem:[%s673] sm:$0xf]
  %v675 = vunpack.c.l.bf16 %v674
  %v676 = vunpack.c.h.bf16 %v674
  %vm677 = vcmask 1043456
  %v678 = vsel %vm677, %v675, %v625
  %v679 = vrot.slane %v678, 4
  %s680 = scalar_lea.vmem %s1, 52
  %v681 = vpack.c.bf16 0.0, %v679
  %682 = vst [vmem:[%s680] sm:$0xf] %v681
  %s683 = scalar_lea.vmem %s4, 184
  %v684 = vld [vmem:[%s683] sm:$0xf]
  %v685 = vunpack.c.l.bf16 %v684
  %v686 = vunpack.c.h.bf16 %v684
  %vm687 = vcmask 1043456
  %v688 = vsel %vm687, %v685, %v635
  %v689 = vrot.slane %v688, 4
  %s690 = scalar_lea.vmem %s1, 148
  %v691 = vpack.c.bf16 0.0, %v689
  %692 = vst [vmem:[%s690] sm:$0xf] %v691
  %s693 = scalar_lea.vmem %s4, 312
  %v694 = vld [vmem:[%s693] sm:$0xf]
  %v695 = vunpack.c.l.bf16 %v694
  %v696 = vunpack.c.h.bf16 %v694
  %vm697 = vcmask 1043456
  %v698 = vsel %vm697, %v695, %v645
  %v699 = vrot.slane %v698, 4
  %s700 = scalar_lea.vmem %s1, 244
  %v701 = vpack.c.bf16 0.0, %v699
  %702 = vst [vmem:[%s700] sm:$0xf] %v701
  %s703 = scalar_lea.vmem %s4, 440
  %v704 = vld [vmem:[%s703] sm:$0xf]
  %v705 = vunpack.c.l.bf16 %v704
  %v706 = vunpack.c.h.bf16 %v704
  %vm707 = vcmask 1043456
  %v708 = vsel %vm707, %v705, %v655
  %v709 = vrot.slane %v708, 4
  %s710 = scalar_lea.vmem %s1, 340
  %v711 = vpack.c.bf16 0.0, %v709
  %712 = vst [vmem:[%s710] sm:$0xf] %v711
  %s713 = scalar_lea.vmem %s4, 568
  %v714 = vld [vmem:[%s713] sm:$0xf]
  %v715 = vunpack.c.l.bf16 %v714
  %v716 = vunpack.c.h.bf16 %v714
  %vm717 = vcmask 1043456
  %v718 = vsel %vm717, %v715, %v665
  %v719 = vrot.slane %v718, 4
  %s720 = scalar_lea.vmem %s1, 436
  %v721 = vpack.c.bf16 0.0, %v719
  %722 = vst [vmem:[%s720] sm:$0xf] %v721
  %s723 = scalar_lea.vmem %s4, 60
  %v724 = vld [vmem:[%s723] sm:$0xf]
  %v725 = vunpack.c.l.bf16 %v724
  %v726 = vunpack.c.h.bf16 %v724
  %vm727 = vcmask 1043456
  %v728 = vsel %vm727, %v725, %v675
  %v729 = vrot.slane %v728, 4
  %s730 = scalar_lea.vmem %s1, 56
  %v731 = vpack.c.bf16 0.0, %v729
  %732 = vst [vmem:[%s730] sm:$0xf] %v731
  %s733 = scalar_lea.vmem %s4, 188
  %v734 = vld [vmem:[%s733] sm:$0xf]
  %v735 = vunpack.c.l.bf16 %v734
  %v736 = vunpack.c.h.bf16 %v734
  %vm737 = vcmask 1043456
  %v738 = vsel %vm737, %v735, %v685
  %v739 = vrot.slane %v738, 4
  %s740 = scalar_lea.vmem %s1, 152
  %v741 = vpack.c.bf16 0.0, %v739
  %742 = vst [vmem:[%s740] sm:$0xf] %v741
  %s743 = scalar_lea.vmem %s4, 316
  %v744 = vld [vmem:[%s743] sm:$0xf]
  %v745 = vunpack.c.l.bf16 %v744
  %v746 = vunpack.c.h.bf16 %v744
  %vm747 = vcmask 1043456
  %v748 = vsel %vm747, %v745, %v695
  %v749 = vrot.slane %v748, 4
  %s750 = scalar_lea.vmem %s1, 248
  %v751 = vpack.c.bf16 0.0, %v749
  %752 = vst [vmem:[%s750] sm:$0xf] %v751
  %s753 = scalar_lea.vmem %s4, 444
  %v754 = vld [vmem:[%s753] sm:$0xf]
  %v755 = vunpack.c.l.bf16 %v754
  %v756 = vunpack.c.h.bf16 %v754
  %vm757 = vcmask 1043456
  %v758 = vsel %vm757, %v755, %v705
  %v759 = vrot.slane %v758, 4
  %s760 = scalar_lea.vmem %s1, 344
  %v761 = vpack.c.bf16 0.0, %v759
  %762 = vst [vmem:[%s760] sm:$0xf] %v761
  %s763 = scalar_lea.vmem %s4, 572
  %v764 = vld [vmem:[%s763] sm:$0xf]
  %v765 = vunpack.c.l.bf16 %v764
  %v766 = vunpack.c.h.bf16 %v764
  %vm767 = vcmask 1043456
  %v768 = vsel %vm767, %v765, %v715
  %v769 = vrot.slane %v768, 4
  %s770 = scalar_lea.vmem %s1, 440
  %v771 = vpack.c.bf16 0.0, %v769
  %772 = vst [vmem:[%s770] sm:$0xf] %v771
  %s773 = scalar_lea.vmem %s4, 64
  %v774 = vld [vmem:[%s773] sm:$0xf]
  %v775 = vunpack.c.l.bf16 %v774
  %v776 = vunpack.c.h.bf16 %v774
  %vm777 = vcmask 1043456
  %v778 = vsel %vm777, %v775, %v725
  %v779 = vrot.slane %v778, 4
  %s780 = scalar_lea.vmem %s1, 60
  %v781 = vpack.c.bf16 0.0, %v779
  %782 = vst [vmem:[%s780] sm:$0xf] %v781
  %s783 = scalar_lea.vmem %s4, 192
  %v784 = vld [vmem:[%s783] sm:$0xf]
  %v785 = vunpack.c.l.bf16 %v784
  %v786 = vunpack.c.h.bf16 %v784
  %vm787 = vcmask 1043456
  %v788 = vsel %vm787, %v785, %v735
  %v789 = vrot.slane %v788, 4
  %s790 = scalar_lea.vmem %s1, 156
  %v791 = vpack.c.bf16 0.0, %v789
  %792 = vst [vmem:[%s790] sm:$0xf] %v791
  %s793 = scalar_lea.vmem %s4, 320
  %v794 = vld [vmem:[%s793] sm:$0xf]
  %v795 = vunpack.c.l.bf16 %v794
  %v796 = vunpack.c.h.bf16 %v794
  %vm797 = vcmask 1043456
  %v798 = vsel %vm797, %v795, %v745
  %v799 = vrot.slane %v798, 4
  %s800 = scalar_lea.vmem %s1, 252
  %v801 = vpack.c.bf16 0.0, %v799
  %802 = vst [vmem:[%s800] sm:$0xf] %v801
  %s803 = scalar_lea.vmem %s4, 448
  %v804 = vld [vmem:[%s803] sm:$0xf]
  %v805 = vunpack.c.l.bf16 %v804
  %v806 = vunpack.c.h.bf16 %v804
  %vm807 = vcmask 1043456
  %v808 = vsel %vm807, %v805, %v755
  %v809 = vrot.slane %v808, 4
  %s810 = scalar_lea.vmem %s1, 348
  %v811 = vpack.c.bf16 0.0, %v809
  %812 = vst [vmem:[%s810] sm:$0xf] %v811
  %s813 = scalar_lea.vmem %s4, 576
  %v814 = vld [vmem:[%s813] sm:$0xf]
  %v815 = vunpack.c.l.bf16 %v814
  %v816 = vunpack.c.h.bf16 %v814
  %vm817 = vcmask 1043456
  %v818 = vsel %vm817, %v815, %v765
  %v819 = vrot.slane %v818, 4
  %s820 = scalar_lea.vmem %s1, 444
  %v821 = vpack.c.bf16 0.0, %v819
  %822 = vst [vmem:[%s820] sm:$0xf] %v821
  %s823 = scalar_lea.vmem %s4, 68
  %v824 = vld [vmem:[%s823] sm:$0xf]
  %v825 = vunpack.c.l.bf16 %v824
  %v826 = vunpack.c.h.bf16 %v824
  %vm827 = vcmask 1043456
  %v828 = vsel %vm827, %v825, %v775
  %v829 = vrot.slane %v828, 4
  %s830 = scalar_lea.vmem %s1, 64
  %v831 = vpack.c.bf16 0.0, %v829
  %832 = vst [vmem:[%s830] sm:$0xf] %v831
  %s833 = scalar_lea.vmem %s4, 196
  %v834 = vld [vmem:[%s833] sm:$0xf]
  %v835 = vunpack.c.l.bf16 %v834
  %v836 = vunpack.c.h.bf16 %v834
  %vm837 = vcmask 1043456
  %v838 = vsel %vm837, %v835, %v785
  %v839 = vrot.slane %v838, 4
  %s840 = scalar_lea.vmem %s1, 160
  %v841 = vpack.c.bf16 0.0, %v839
  %842 = vst [vmem:[%s840] sm:$0xf] %v841
  %s843 = scalar_lea.vmem %s4, 324
  %v844 = vld [vmem:[%s843] sm:$0xf]
  %v845 = vunpack.c.l.bf16 %v844
  %v846 = vunpack.c.h.bf16 %v844
  %vm847 = vcmask 1043456
  %v848 = vsel %vm847, %v845, %v795
  %v849 = vrot.slane %v848, 4
  %s850 = scalar_lea.vmem %s1, 256
  %v851 = vpack.c.bf16 0.0, %v849
  %852 = vst [vmem:[%s850] sm:$0xf] %v851
  %s853 = scalar_lea.vmem %s4, 452
  %v854 = vld [vmem:[%s853] sm:$0xf]
  %v855 = vunpack.c.l.bf16 %v854
  %v856 = vunpack.c.h.bf16 %v854
  %vm857 = vcmask 1043456
  %v858 = vsel %vm857, %v855, %v805
  %v859 = vrot.slane %v858, 4
  %s860 = scalar_lea.vmem %s1, 352
  %v861 = vpack.c.bf16 0.0, %v859
  %862 = vst [vmem:[%s860] sm:$0xf] %v861
  %s863 = scalar_lea.vmem %s4, 580
  %v864 = vld [vmem:[%s863] sm:$0xf]
  %v865 = vunpack.c.l.bf16 %v864
  %v866 = vunpack.c.h.bf16 %v864
  %vm867 = vcmask 1043456
  %v868 = vsel %vm867, %v865, %v815
  %v869 = vrot.slane %v868, 4
  %s870 = scalar_lea.vmem %s1, 448
  %v871 = vpack.c.bf16 0.0, %v869
  %872 = vst [vmem:[%s870] sm:$0xf] %v871
  %s873 = scalar_lea.vmem %s4, 72
  %v874 = vld [vmem:[%s873] sm:$0xf]
  %v875 = vunpack.c.l.bf16 %v874
  %v876 = vunpack.c.h.bf16 %v874
  %vm877 = vcmask 1043456
  %v878 = vsel %vm877, %v875, %v825
  %v879 = vrot.slane %v878, 4
  %s880 = scalar_lea.vmem %s1, 68
  %v881 = vpack.c.bf16 0.0, %v879
  %882 = vst [vmem:[%s880] sm:$0xf] %v881
  %s883 = scalar_lea.vmem %s4, 200
  %v884 = vld [vmem:[%s883] sm:$0xf]
  %v885 = vunpack.c.l.bf16 %v884
  %v886 = vunpack.c.h.bf16 %v884
  %vm887 = vcmask 1043456
  %v888 = vsel %vm887, %v885, %v835
  %v889 = vrot.slane %v888, 4
  %s890 = scalar_lea.vmem %s1, 164
  %v891 = vpack.c.bf16 0.0, %v889
  %892 = vst [vmem:[%s890] sm:$0xf] %v891
  %s893 = scalar_lea.vmem %s4, 328
  %v894 = vld [vmem:[%s893] sm:$0xf]
  %v895 = vunpack.c.l.bf16 %v894
  %v896 = vunpack.c.h.bf16 %v894
  %vm897 = vcmask 1043456
  %v898 = vsel %vm897, %v895, %v845
  %v899 = vrot.slane %v898, 4
  %s900 = scalar_lea.vmem %s1, 260
  %v901 = vpack.c.bf16 0.0, %v899
  %902 = vst [vmem:[%s900] sm:$0xf] %v901
  %s903 = scalar_lea.vmem %s4, 456
  %v904 = vld [vmem:[%s903] sm:$0xf]
  %v905 = vunpack.c.l.bf16 %v904
  %v906 = vunpack.c.h.bf16 %v904
  %vm907 = vcmask 1043456
  %v908 = vsel %vm907, %v905, %v855
  %v909 = vrot.slane %v908, 4
  %s910 = scalar_lea.vmem %s1, 356
  %v911 = vpack.c.bf16 0.0, %v909
  %912 = vst [vmem:[%s910] sm:$0xf] %v911
  %s913 = scalar_lea.vmem %s4, 584
  %v914 = vld [vmem:[%s913] sm:$0xf]
  %v915 = vunpack.c.l.bf16 %v914
  %v916 = vunpack.c.h.bf16 %v914
  %vm917 = vcmask 1043456
  %v918 = vsel %vm917, %v915, %v865
  %v919 = vrot.slane %v918, 4
  %s920 = scalar_lea.vmem %s1, 452
  %v921 = vpack.c.bf16 0.0, %v919
  %922 = vst [vmem:[%s920] sm:$0xf] %v921
  %s923 = scalar_lea.vmem %s4, 76
  %v924 = vld [vmem:[%s923] sm:$0xf]
  %v925 = vunpack.c.l.bf16 %v924
  %v926 = vunpack.c.h.bf16 %v924
  %vm927 = vcmask 1043456
  %v928 = vsel %vm927, %v925, %v875
  %v929 = vrot.slane %v928, 4
  %s930 = scalar_lea.vmem %s1, 72
  %v931 = vpack.c.bf16 0.0, %v929
  %932 = vst [vmem:[%s930] sm:$0xf] %v931
  %s933 = scalar_lea.vmem %s4, 204
  %v934 = vld [vmem:[%s933] sm:$0xf]
  %v935 = vunpack.c.l.bf16 %v934
  %v936 = vunpack.c.h.bf16 %v934
  %vm937 = vcmask 1043456
  %v938 = vsel %vm937, %v935, %v885
  %v939 = vrot.slane %v938, 4
  %s940 = scalar_lea.vmem %s1, 168
  %v941 = vpack.c.bf16 0.0, %v939
  %942 = vst [vmem:[%s940] sm:$0xf] %v941
  %s943 = scalar_lea.vmem %s4, 332
  %v944 = vld [vmem:[%s943] sm:$0xf]
  %v945 = vunpack.c.l.bf16 %v944
  %v946 = vunpack.c.h.bf16 %v944
  %vm947 = vcmask 1043456
  %v948 = vsel %vm947, %v945, %v895
  %v949 = vrot.slane %v948, 4
  %s950 = scalar_lea.vmem %s1, 264
  %v951 = vpack.c.bf16 0.0, %v949
  %952 = vst [vmem:[%s950] sm:$0xf] %v951
  %s953 = scalar_lea.vmem %s4, 460
  %v954 = vld [vmem:[%s953] sm:$0xf]
  %v955 = vunpack.c.l.bf16 %v954
  %v956 = vunpack.c.h.bf16 %v954
  %vm957 = vcmask 1043456
  %v958 = vsel %vm957, %v955, %v905
  %v959 = vrot.slane %v958, 4
  %s960 = scalar_lea.vmem %s1, 360
  %v961 = vpack.c.bf16 0.0, %v959
  %962 = vst [vmem:[%s960] sm:$0xf] %v961
  %s963 = scalar_lea.vmem %s4, 588
  %v964 = vld [vmem:[%s963] sm:$0xf]
  %v965 = vunpack.c.l.bf16 %v964
  %v966 = vunpack.c.h.bf16 %v964
  %vm967 = vcmask 1043456
  %v968 = vsel %vm967, %v965, %v915
  %v969 = vrot.slane %v968, 4
  %s970 = scalar_lea.vmem %s1, 456
  %v971 = vpack.c.bf16 0.0, %v969
  %972 = vst [vmem:[%s970] sm:$0xf] %v971
  %s973 = scalar_lea.vmem %s4, 80
  %v974 = vld [vmem:[%s973] sm:$0xf]
  %v975 = vunpack.c.l.bf16 %v974
  %v976 = vunpack.c.h.bf16 %v974
  %vm977 = vcmask 1043456
  %v978 = vsel %vm977, %v975, %v925
  %v979 = vrot.slane %v978, 4
  %s980 = scalar_lea.vmem %s1, 76
  %v981 = vpack.c.bf16 0.0, %v979
  %982 = vst [vmem:[%s980] sm:$0xf] %v981
  %s983 = scalar_lea.vmem %s4, 208
  %v984 = vld [vmem:[%s983] sm:$0xf]
  %v985 = vunpack.c.l.bf16 %v984
  %v986 = vunpack.c.h.bf16 %v984
  %vm987 = vcmask 1043456
  %v988 = vsel %vm987, %v985, %v935
  %v989 = vrot.slane %v988, 4
  %s990 = scalar_lea.vmem %s1, 172
  %v991 = vpack.c.bf16 0.0, %v989
  %992 = vst [vmem:[%s990] sm:$0xf] %v991
  %s993 = scalar_lea.vmem %s4, 336
  %v994 = vld [vmem:[%s993] sm:$0xf]
  %v995 = vunpack.c.l.bf16 %v994
  %v996 = vunpack.c.h.bf16 %v994
  %vm997 = vcmask 1043456
  %v998 = vsel %vm997, %v995, %v945
  %v999 = vrot.slane %v998, 4
  %s1000 = scalar_lea.vmem %s1, 268
  %v1001 = vpack.c.bf16 0.0, %v999
  %1002 = vst [vmem:[%s1000] sm:$0xf] %v1001
  %s1003 = scalar_lea.vmem %s4, 464
  %v1004 = vld [vmem:[%s1003] sm:$0xf]
  %v1005 = vunpack.c.l.bf16 %v1004
  %v1006 = vunpack.c.h.bf16 %v1004
  %vm1007 = vcmask 1043456
  %v1008 = vsel %vm1007, %v1005, %v955
  %v1009 = vrot.slane %v1008, 4
  %s1010 = scalar_lea.vmem %s1, 364
  %v1011 = vpack.c.bf16 0.0, %v1009
  %1012 = vst [vmem:[%s1010] sm:$0xf] %v1011
  %s1013 = scalar_lea.vmem %s4, 592
  %v1014 = vld [vmem:[%s1013] sm:$0xf]
  %v1015 = vunpack.c.l.bf16 %v1014
  %v1016 = vunpack.c.h.bf16 %v1014
  %vm1017 = vcmask 1043456
  %v1018 = vsel %vm1017, %v1015, %v965
  %v1019 = vrot.slane %v1018, 4
  %s1020 = scalar_lea.vmem %s1, 460
  %v1021 = vpack.c.bf16 0.0, %v1019
  %1022 = vst [vmem:[%s1020] sm:$0xf] %v1021
  %s1023 = scalar_lea.vmem %s4, 84
  %v1024 = vld [vmem:[%s1023] sm:$0xf]
  %v1025 = vunpack.c.l.bf16 %v1024
  %v1026 = vunpack.c.h.bf16 %v1024
  %vm1027 = vcmask 1043456
  %v1028 = vsel %vm1027, %v1025, %v975
  %v1029 = vrot.slane %v1028, 4
  %s1030 = scalar_lea.vmem %s1, 80
  %v1031 = vpack.c.bf16 0.0, %v1029
  %1032 = vst [vmem:[%s1030] sm:$0xf] %v1031
  %s1033 = scalar_lea.vmem %s4, 212
  %v1034 = vld [vmem:[%s1033] sm:$0xf]
  %v1035 = vunpack.c.l.bf16 %v1034
  %v1036 = vunpack.c.h.bf16 %v1034
  %vm1037 = vcmask 1043456
  %v1038 = vsel %vm1037, %v1035, %v985
  %v1039 = vrot.slane %v1038, 4
  %s1040 = scalar_lea.vmem %s1, 176
  %v1041 = vpack.c.bf16 0.0, %v1039
  %1042 = vst [vmem:[%s1040] sm:$0xf] %v1041
  %s1043 = scalar_lea.vmem %s4, 340
  %v1044 = vld [vmem:[%s1043] sm:$0xf]
  %v1045 = vunpack.c.l.bf16 %v1044
  %v1046 = vunpack.c.h.bf16 %v1044
  %vm1047 = vcmask 1043456
  %v1048 = vsel %vm1047, %v1045, %v995
  %v1049 = vrot.slane %v1048, 4
  %s1050 = scalar_lea.vmem %s1, 272
  %v1051 = vpack.c.bf16 0.0, %v1049
  %1052 = vst [vmem:[%s1050] sm:$0xf] %v1051
  %s1053 = scalar_lea.vmem %s4, 468
  %v1054 = vld [vmem:[%s1053] sm:$0xf]
  %v1055 = vunpack.c.l.bf16 %v1054
  %v1056 = vunpack.c.h.bf16 %v1054
  %vm1057 = vcmask 1043456
  %v1058 = vsel %vm1057, %v1055, %v1005
  %v1059 = vrot.slane %v1058, 4
  %s1060 = scalar_lea.vmem %s1, 368
  %v1061 = vpack.c.bf16 0.0, %v1059
  %1062 = vst [vmem:[%s1060] sm:$0xf] %v1061
  %s1063 = scalar_lea.vmem %s4, 596
  %v1064 = vld [vmem:[%s1063] sm:$0xf]
  %v1065 = vunpack.c.l.bf16 %v1064
  %v1066 = vunpack.c.h.bf16 %v1064
  %vm1067 = vcmask 1043456
  %v1068 = vsel %vm1067, %v1065, %v1015
  %v1069 = vrot.slane %v1068, 4
  %s1070 = scalar_lea.vmem %s1, 464
  %v1071 = vpack.c.bf16 0.0, %v1069
  %1072 = vst [vmem:[%s1070] sm:$0xf] %v1071
  %s1073 = scalar_lea.vmem %s4, 88
  %v1074 = vld [vmem:[%s1073] sm:$0xf]
  %v1075 = vunpack.c.l.bf16 %v1074
  %v1076 = vunpack.c.h.bf16 %v1074
  %vm1077 = vcmask 1043456
  %v1078 = vsel %vm1077, %v1075, %v1025
  %v1079 = vrot.slane %v1078, 4
  %s1080 = scalar_lea.vmem %s1, 84
  %v1081 = vpack.c.bf16 0.0, %v1079
  %1082 = vst [vmem:[%s1080] sm:$0xf] %v1081
  %s1083 = scalar_lea.vmem %s4, 216
  %v1084 = vld [vmem:[%s1083] sm:$0xf]
  %v1085 = vunpack.c.l.bf16 %v1084
  %v1086 = vunpack.c.h.bf16 %v1084
  %vm1087 = vcmask 1043456
  %v1088 = vsel %vm1087, %v1085, %v1035
  %v1089 = vrot.slane %v1088, 4
  %s1090 = scalar_lea.vmem %s1, 180
  %v1091 = vpack.c.bf16 0.0, %v1089
  %1092 = vst [vmem:[%s1090] sm:$0xf] %v1091
  %s1093 = scalar_lea.vmem %s4, 344
  %v1094 = vld [vmem:[%s1093] sm:$0xf]
  %v1095 = vunpack.c.l.bf16 %v1094
  %v1096 = vunpack.c.h.bf16 %v1094
  %vm1097 = vcmask 1043456
  %v1098 = vsel %vm1097, %v1095, %v1045
  %v1099 = vrot.slane %v1098, 4
  %s1100 = scalar_lea.vmem %s1, 276
  %v1101 = vpack.c.bf16 0.0, %v1099
  %1102 = vst [vmem:[%s1100] sm:$0xf] %v1101
  %s1103 = scalar_lea.vmem %s4, 472
  %v1104 = vld [vmem:[%s1103] sm:$0xf]
  %v1105 = vunpack.c.l.bf16 %v1104
  %v1106 = vunpack.c.h.bf16 %v1104
  %vm1107 = vcmask 1043456
  %v1108 = vsel %vm1107, %v1105, %v1055
  %v1109 = vrot.slane %v1108, 4
  %s1110 = scalar_lea.vmem %s1, 372
  %v1111 = vpack.c.bf16 0.0, %v1109
  %1112 = vst [vmem:[%s1110] sm:$0xf] %v1111
  %s1113 = scalar_lea.vmem %s4, 600
  %v1114 = vld [vmem:[%s1113] sm:$0xf]
  %v1115 = vunpack.c.l.bf16 %v1114
  %v1116 = vunpack.c.h.bf16 %v1114
  %vm1117 = vcmask 1043456
  %v1118 = vsel %vm1117, %v1115, %v1065
  %v1119 = vrot.slane %v1118, 4
  %s1120 = scalar_lea.vmem %s1, 468
  %v1121 = vpack.c.bf16 0.0, %v1119
  %1122 = vst [vmem:[%s1120] sm:$0xf] %v1121
  %s1123 = scalar_lea.vmem %s4, 92
  %v1124 = vld [vmem:[%s1123] sm:$0xf]
  %v1125 = vunpack.c.l.bf16 %v1124
  %v1126 = vunpack.c.h.bf16 %v1124
  %vm1127 = vcmask 1043456
  %v1128 = vsel %vm1127, %v1125, %v1075
  %v1129 = vrot.slane %v1128, 4
  %s1130 = scalar_lea.vmem %s1, 88
  %v1131 = vpack.c.bf16 0.0, %v1129
  %1132 = vst [vmem:[%s1130] sm:$0xf] %v1131
  %s1133 = scalar_lea.vmem %s4, 220
  %v1134 = vld [vmem:[%s1133] sm:$0xf]
  %v1135 = vunpack.c.l.bf16 %v1134
  %v1136 = vunpack.c.h.bf16 %v1134
  %vm1137 = vcmask 1043456
  %v1138 = vsel %vm1137, %v1135, %v1085
  %v1139 = vrot.slane %v1138, 4
  %s1140 = scalar_lea.vmem %s1, 184
  %v1141 = vpack.c.bf16 0.0, %v1139
  %1142 = vst [vmem:[%s1140] sm:$0xf] %v1141
  %s1143 = scalar_lea.vmem %s4, 348
  %v1144 = vld [vmem:[%s1143] sm:$0xf]
  %v1145 = vunpack.c.l.bf16 %v1144
  %v1146 = vunpack.c.h.bf16 %v1144
  %vm1147 = vcmask 1043456
  %v1148 = vsel %vm1147, %v1145, %v1095
  %v1149 = vrot.slane %v1148, 4
  %s1150 = scalar_lea.vmem %s1, 280
  %v1151 = vpack.c.bf16 0.0, %v1149
  %1152 = vst [vmem:[%s1150] sm:$0xf] %v1151
  %s1153 = scalar_lea.vmem %s4, 476
  %v1154 = vld [vmem:[%s1153] sm:$0xf]
  %v1155 = vunpack.c.l.bf16 %v1154
  %v1156 = vunpack.c.h.bf16 %v1154
  %vm1157 = vcmask 1043456
  %v1158 = vsel %vm1157, %v1155, %v1105
  %v1159 = vrot.slane %v1158, 4
  %s1160 = scalar_lea.vmem %s1, 376
  %v1161 = vpack.c.bf16 0.0, %v1159
  %1162 = vst [vmem:[%s1160] sm:$0xf] %v1161
  %s1163 = scalar_lea.vmem %s4, 604
  %v1164 = vld [vmem:[%s1163] sm:$0xf]
  %v1165 = vunpack.c.l.bf16 %v1164
  %v1166 = vunpack.c.h.bf16 %v1164
  %vm1167 = vcmask 1043456
  %v1168 = vsel %vm1167, %v1165, %v1115
  %v1169 = vrot.slane %v1168, 4
  %s1170 = scalar_lea.vmem %s1, 472
  %v1171 = vpack.c.bf16 0.0, %v1169
  %1172 = vst [vmem:[%s1170] sm:$0xf] %v1171
  %s1173 = scalar_lea.vmem %s4, 96
  %s1175 = sor.u32 255, 127
  %s1176 = sand.u32 %s1175, 85
  %s1177 = sshrl.u32 %s1176, 1
  %s1178 = sor.u32 %s1176, %s1177
  %s1179 = sand.u32 51, %s1178
  %s1180 = sshrl.u32 %s1179, 2
  %s1181 = sor.u32 %s1179, %s1180
  %s1182 = sand.u32 15, %s1181
  %v1183 = vld [vmem:[%s1173] sm:%s1182]
  %v1184 = vunpack.c.l.bf16 %v1183
  %v1185 = vunpack.c.h.bf16 %v1183
  %vm1186 = vcmask 1043456
  %v1187 = vsel %vm1186, %v1184, %v1125
  %v1188 = vrot.slane %v1187, 4
  %s1189 = scalar_lea.vmem %s1, 92
  %v1190 = vpack.c.bf16 0.0, %v1188
  %1191 = vst [vmem:[%s1189] sm:$0xf] %v1190
  %s1192 = scalar_lea.vmem %s4, 224
  %s1194 = sor.u32 255, 127
  %s1195 = sand.u32 %s1194, 85
  %s1196 = sshrl.u32 %s1195, 1
  %s1197 = sor.u32 %s1195, %s1196
  %s1198 = sand.u32 51, %s1197
  %s1199 = sshrl.u32 %s1198, 2
  %s1200 = sor.u32 %s1198, %s1199
  %s1201 = sand.u32 15, %s1200
  %v1202 = vld [vmem:[%s1192] sm:%s1201]
  %v1203 = vunpack.c.l.bf16 %v1202
  %v1204 = vunpack.c.h.bf16 %v1202
  %vm1205 = vcmask 1043456
  %v1206 = vsel %vm1205, %v1203, %v1135
  %v1207 = vrot.slane %v1206, 4
  %s1208 = scalar_lea.vmem %s1, 188
  %v1209 = vpack.c.bf16 0.0, %v1207
  %1210 = vst [vmem:[%s1208] sm:$0xf] %v1209
  %s1211 = scalar_lea.vmem %s4, 352
  %s1213 = sor.u32 255, 127
  %s1214 = sand.u32 %s1213, 85
  %s1215 = sshrl.u32 %s1214, 1
  %s1216 = sor.u32 %s1214, %s1215
  %s1217 = sand.u32 51, %s1216
  %s1218 = sshrl.u32 %s1217, 2
  %s1219 = sor.u32 %s1217, %s1218
  %s1220 = sand.u32 15, %s1219
  %v1221 = vld [vmem:[%s1211] sm:%s1220]
  %v1222 = vunpack.c.l.bf16 %v1221
  %v1223 = vunpack.c.h.bf16 %v1221
  %vm1224 = vcmask 1043456
  %v1225 = vsel %vm1224, %v1222, %v1145
  %v1226 = vrot.slane %v1225, 4
  %s1227 = scalar_lea.vmem %s1, 284
  %v1228 = vpack.c.bf16 0.0, %v1226
  %1229 = vst [vmem:[%s1227] sm:$0xf] %v1228
  %s1230 = scalar_lea.vmem %s4, 480
  %s1232 = sor.u32 255, 127
  %s1233 = sand.u32 %s1232, 85
  %s1234 = sshrl.u32 %s1233, 1
  %s1235 = sor.u32 %s1233, %s1234
  %s1236 = sand.u32 51, %s1235
  %s1237 = sshrl.u32 %s1236, 2
  %s1238 = sor.u32 %s1236, %s1237
  %s1239 = sand.u32 15, %s1238
  %v1240 = vld [vmem:[%s1230] sm:%s1239]
  %v1241 = vunpack.c.l.bf16 %v1240
  %v1242 = vunpack.c.h.bf16 %v1240
  %vm1243 = vcmask 1043456
  %v1244 = vsel %vm1243, %v1241, %v1155
  %v1245 = vrot.slane %v1244, 4
  %s1246 = scalar_lea.vmem %s1, 380
  %v1247 = vpack.c.bf16 0.0, %v1245
  %1248 = vst [vmem:[%s1246] sm:$0xf] %v1247
  %s1249 = scalar_lea.vmem %s4, 608
  %s1251 = sor.u32 255, 127
  %s1252 = sand.u32 %s1251, 85
  %s1253 = sshrl.u32 %s1252, 1
  %s1254 = sor.u32 %s1252, %s1253
  %s1255 = sand.u32 51, %s1254
  %s1256 = sshrl.u32 %s1255, 2
  %s1257 = sor.u32 %s1255, %s1256
  %s1258 = sand.u32 15, %s1257
  %v1259 = vld [vmem:[%s1249] sm:%s1258]
  %v1260 = vunpack.c.l.bf16 %v1259
  %v1261 = vunpack.c.h.bf16 %v1259
  %vm1262 = vcmask 1043456
  %v1263 = vsel %vm1262, %v1260, %v1165
  %v1264 = vrot.slane %v1263, 4
  %s1265 = scalar_lea.vmem %s1, 476
  %v1266 = vpack.c.bf16 0.0, %v1264
  %1267 = vst [vmem:[%s1265] sm:$0xf] %v1266

// kernel: split.1
$region0: #{split.1}
  #allocation0 [shape = 'u32[2048]{0}', space=vmem, size = 0x2000, scoped, tag = 'scoped memory for split.1']
  #allocation1 [shape = 'u32[2048]{0}', space=vmem, size = 0x2000, scoped, tag = 'scoped memory for split.1']
  #allocation2 [shape = 'u32[2048]{0}', space=vmem, size = 0x2000, scoped, tag = 'scoped memory for split.1']
  #allocation3 [shape = 'u32[2048]{0}', space=vmem, size = 0x2000, scoped, tag = 'scoped memory for split.1']
  #allocation4 [shape = 'u32[2048]{0}', space=vmem, size = 0x2000, scoped, tag = 'scoped memory for split.1']
  #allocation5 [shape = 's32[1]{0}', space=sflag, size = 0x4, scoped, tag = 'scoped memory for split.1']
  %s0 = inlined_call_operand.vmem [shape: bf16[5,252,9], index: 0, kind: input, shape index: {}]
  %s1 = inlined_call_operand.vmem [shape: bf16[5,48,9], index: 1, kind: output, shape index: {}]
  %s2 = scalar_lea.vmem %s0, 4
  %s3 = scalar_lea.vmem %s0, 4
  %s4 = scalar_lea.vmem %s0, 4
  %v5 = vld [vmem:[%s4] sm:$0xf]
  %v6 = vunpack.c.l.bf16 %v5
  %v7 = vunpack.c.h.bf16 %v5
  %s8 = scalar_lea.vmem %s4, 4
  %v9 = vld [vmem:[%s8] sm:$0xf]
  %v10 = vunpack.c.l.bf16 %v9
  %v11 = vunpack.c.h.bf16 %v9
  %vm12 = vcmask 1043456
  %v13 = vsel %vm12, %v10, %v6
  %v14 = vrot.slane %v13, 4
  %v15 = vpack.c.bf16 0.0, %v14
  %16 = vst [vmem:[%s1] sm:$0xf] %v15
  %s17 = scalar_lea.vmem %s4, 128
  %v18 = vld [vmem:[%s17] sm:$0xf]
  %v19 = vunpack.c.l.bf16 %v18
  %v20 = vunpack.c.h.bf16 %v18
  %s21 = scalar_lea.vmem %s4, 132
  %v22 = vld [vmem:[%s21] sm:$0xf]
  %v23 = vunpack.c.l.bf16 %v22
  %v24 = vunpack.c.h.bf16 %v22
  %vm25 = vcmask 1043456
  %v26 = vsel %vm25, %v23, %v19
  %v27 = vrot.slane %v26, 4
  %s28 = scalar_lea.vmem %s1, 24
  %v29 = vpack.c.bf16 0.0, %v27
  %30 = vst [vmem:[%s28] sm:$0xf] %v29
  %s31 = scalar_lea.vmem %s4, 256
  %v32 = vld [vmem:[%s31] sm:$0xf]
  %v33 = vunpack.c.l.bf16 %v32
  %v34 = vunpack.c.h.bf16 %v32
  %s35 = scalar_lea.vmem %s4, 260
  %v36 = vld [vmem:[%s35] sm:$0xf]
  %v37 = vunpack.c.l.bf16 %v36
  %v38 = vunpack.c.h.bf16 %v36
  %vm39 = vcmask 1043456
  %v40 = vsel %vm39, %v37, %v33
  %v41 = vrot.slane %v40, 4
  %s42 = scalar_lea.vmem %s1, 48
  %v43 = vpack.c.bf16 0.0, %v41
  %44 = vst [vmem:[%s42] sm:$0xf] %v43
  %s45 = scalar_lea.vmem %s4, 384
  %v46 = vld [vmem:[%s45] sm:$0xf]
  %v47 = vunpack.c.l.bf16 %v46
  %v48 = vunpack.c.h.bf16 %v46
  %s49 = scalar_lea.vmem %s4, 388
  %v50 = vld [vmem:[%s49] sm:$0xf]
  %v51 = vunpack.c.l.bf16 %v50
  %v52 = vunpack.c.h.bf16 %v50
  %vm53 = vcmask 1043456
  %v54 = vsel %vm53, %v51, %v47
  %v55 = vrot.slane %v54, 4
  %s56 = scalar_lea.vmem %s1, 72
  %v57 = vpack.c.bf16 0.0, %v55
  %58 = vst [vmem:[%s56] sm:$0xf] %v57
  %s59 = scalar_lea.vmem %s4, 512
  %v60 = vld [vmem:[%s59] sm:$0xf]
  %v61 = vunpack.c.l.bf16 %v60
  %v62 = vunpack.c.h.bf16 %v60
  %s63 = scalar_lea.vmem %s4, 516
  %v64 = vld [vmem:[%s63] sm:$0xf]
  %v65 = vunpack.c.l.bf16 %v64
  %v66 = vunpack.c.h.bf16 %v64
  %vm67 = vcmask 1043456
  %v68 = vsel %vm67, %v65, %v61
  %v69 = vrot.slane %v68, 4
  %s70 = scalar_lea.vmem %s1, 96
  %v71 = vpack.c.bf16 0.0, %v69
  %72 = vst [vmem:[%s70] sm:$0xf] %v71
  %s73 = scalar_lea.vmem %s4, 8
  %v74 = vld [vmem:[%s73] sm:$0xf]
  %v75 = vunpack.c.l.bf16 %v74
  %v76 = vunpack.c.h.bf16 %v74
  %vm77 = vcmask 1043456
  %v78 = vsel %vm77, %v75, %v10
  %v79 = vrot.slane %v78, 4
  %s80 = scalar_lea.vmem %s1, 4
  %v81 = vpack.c.bf16 0.0, %v79
  %82 = vst [vmem:[%s80] sm:$0xf] %v81
  %s83 = scalar_lea.vmem %s4, 136
  %v84 = vld [vmem:[%s83] sm:$0xf]
  %v85 = vunpack.c.l.bf16 %v84
  %v86 = vunpack.c.h.bf16 %v84
  %vm87 = vcmask 1043456
  %v88 = vsel %vm87, %v85, %v23
  %v89 = vrot.slane %v88, 4
  %s90 = scalar_lea.vmem %s1, 28
  %v91 = vpack.c.bf16 0.0, %v89
  %92 = vst [vmem:[%s90] sm:$0xf] %v91
  %s93 = scalar_lea.vmem %s4, 264
  %v94 = vld [vmem:[%s93] sm:$0xf]
  %v95 = vunpack.c.l.bf16 %v94
  %v96 = vunpack.c.h.bf16 %v94
  %vm97 = vcmask 1043456
  %v98 = vsel %vm97, %v95, %v37
  %v99 = vrot.slane %v98, 4
  %s100 = scalar_lea.vmem %s1, 52
  %v101 = vpack.c.bf16 0.0, %v99
  %102 = vst [vmem:[%s100] sm:$0xf] %v101
  %s103 = scalar_lea.vmem %s4, 392
  %v104 = vld [vmem:[%s103] sm:$0xf]
  %v105 = vunpack.c.l.bf16 %v104
  %v106 = vunpack.c.h.bf16 %v104
  %vm107 = vcmask 1043456
  %v108 = vsel %vm107, %v105, %v51
  %v109 = vrot.slane %v108, 4
  %s110 = scalar_lea.vmem %s1, 76
  %v111 = vpack.c.bf16 0.0, %v109
  %112 = vst [vmem:[%s110] sm:$0xf] %v111
  %s113 = scalar_lea.vmem %s4, 520
  %v114 = vld [vmem:[%s113] sm:$0xf]
  %v115 = vunpack.c.l.bf16 %v114
  %v116 = vunpack.c.h.bf16 %v114
  %vm117 = vcmask 1043456
  %v118 = vsel %vm117, %v115, %v65
  %v119 = vrot.slane %v118, 4
  %s120 = scalar_lea.vmem %s1, 100
  %v121 = vpack.c.bf16 0.0, %v119
  %122 = vst [vmem:[%s120] sm:$0xf] %v121
  %s123 = scalar_lea.vmem %s4, 12
  %v124 = vld [vmem:[%s123] sm:$0xf]
  %v125 = vunpack.c.l.bf16 %v124
  %v126 = vunpack.c.h.bf16 %v124
  %vm127 = vcmask 1043456
  %v128 = vsel %vm127, %v125, %v75
  %v129 = vrot.slane %v128, 4
  %s130 = scalar_lea.vmem %s1, 8
  %v131 = vpack.c.bf16 0.0, %v129
  %132 = vst [vmem:[%s130] sm:$0xf] %v131
  %s133 = scalar_lea.vmem %s4, 140
  %v134 = vld [vmem:[%s133] sm:$0xf]
  %v135 = vunpack.c.l.bf16 %v134
  %v136 = vunpack.c.h.bf16 %v134
  %vm137 = vcmask 1043456
  %v138 = vsel %vm137, %v135, %v85
  %v139 = vrot.slane %v138, 4
  %s140 = scalar_lea.vmem %s1, 32
  %v141 = vpack.c.bf16 0.0, %v139
  %142 = vst [vmem:[%s140] sm:$0xf] %v141
  %s143 = scalar_lea.vmem %s4, 268
  %v144 = vld [vmem:[%s143] sm:$0xf]
  %v145 = vunpack.c.l.bf16 %v144
  %v146 = vunpack.c.h.bf16 %v144
  %vm147 = vcmask 1043456
  %v148 = vsel %vm147, %v145, %v95
  %v149 = vrot.slane %v148, 4
  %s150 = scalar_lea.vmem %s1, 56
  %v151 = vpack.c.bf16 0.0, %v149
  %152 = vst [vmem:[%s150] sm:$0xf] %v151
  %s153 = scalar_lea.vmem %s4, 396
  %v154 = vld [vmem:[%s153] sm:$0xf]
  %v155 = vunpack.c.l.bf16 %v154
  %v156 = vunpack.c.h.bf16 %v154
  %vm157 = vcmask 1043456
  %v158 = vsel %vm157, %v155, %v105
  %v159 = vrot.slane %v158, 4
  %s160 = scalar_lea.vmem %s1, 80
  %v161 = vpack.c.bf16 0.0, %v159
  %162 = vst [vmem:[%s160] sm:$0xf] %v161
  %s163 = scalar_lea.vmem %s4, 524
  %v164 = vld [vmem:[%s163] sm:$0xf]
  %v165 = vunpack.c.l.bf16 %v164
  %v166 = vunpack.c.h.bf16 %v164
  %vm167 = vcmask 1043456
  %v168 = vsel %vm167, %v165, %v115
  %v169 = vrot.slane %v168, 4
  %s170 = scalar_lea.vmem %s1, 104
  %v171 = vpack.c.bf16 0.0, %v169
  %172 = vst [vmem:[%s170] sm:$0xf] %v171
  %s173 = scalar_lea.vmem %s4, 16
  %v174 = vld [vmem:[%s173] sm:$0xf]
  %v175 = vunpack.c.l.bf16 %v174
  %v176 = vunpack.c.h.bf16 %v174
  %vm177 = vcmask 1043456
  %v178 = vsel %vm177, %v175, %v125
  %v179 = vrot.slane %v178, 4
  %s180 = scalar_lea.vmem %s1, 12
  %v181 = vpack.c.bf16 0.0, %v179
  %182 = vst [vmem:[%s180] sm:$0xf] %v181
  %s183 = scalar_lea.vmem %s4, 144
  %v184 = vld [vmem:[%s183] sm:$0xf]
  %v185 = vunpack.c.l.bf16 %v184
  %v186 = vunpack.c.h.bf16 %v184
  %vm187 = vcmask 1043456
  %v188 = vsel %vm187, %v185, %v135
  %v189 = vrot.slane %v188, 4
  %s190 = scalar_lea.vmem %s1, 36
  %v191 = vpack.c.bf16 0.0, %v189
  %192 = vst [vmem:[%s190] sm:$0xf] %v191
  %s193 = scalar_lea.vmem %s4, 272
  %v194 = vld [vmem:[%s193] sm:$0xf]
  %v195 = vunpack.c.l.bf16 %v194
  %v196 = vunpack.c.h.bf16 %v194
  %vm197 = vcmask 1043456
  %v198 = vsel %vm197, %v195, %v145
  %v199 = vrot.slane %v198, 4
  %s200 = scalar_lea.vmem %s1, 60
  %v201 = vpack.c.bf16 0.0, %v199
  %202 = vst [vmem:[%s200] sm:$0xf] %v201
  %s203 = scalar_lea.vmem %s4, 400
  %v204 = vld [vmem:[%s203] sm:$0xf]
  %v205 = vunpack.c.l.bf16 %v204
  %v206 = vunpack.c.h.bf16 %v204
  %vm207 = vcmask 1043456
  %v208 = vsel %vm207, %v205, %v155
  %v209 = vrot.slane %v208, 4
  %s210 = scalar_lea.vmem %s1, 84
  %v211 = vpack.c.bf16 0.0, %v209
  %212 = vst [vmem:[%s210] sm:$0xf] %v211
  %s213 = scalar_lea.vmem %s4, 528
  %v214 = vld [vmem:[%s213] sm:$0xf]
  %v215 = vunpack.c.l.bf16 %v214
  %v216 = vunpack.c.h.bf16 %v214
  %vm217 = vcmask 1043456
  %v218 = vsel %vm217, %v215, %v165
  %v219 = vrot.slane %v218, 4
  %s220 = scalar_lea.vmem %s1, 108
  %v221 = vpack.c.bf16 0.0, %v219
  %222 = vst [vmem:[%s220] sm:$0xf] %v221
  %s223 = scalar_lea.vmem %s4, 20
  %v224 = vld [vmem:[%s223] sm:$0xf]
  %v225 = vunpack.c.l.bf16 %v224
  %v226 = vunpack.c.h.bf16 %v224
  %vm227 = vcmask 1043456
  %v228 = vsel %vm227, %v225, %v175
  %v229 = vrot.slane %v228, 4
  %s230 = scalar_lea.vmem %s1, 16
  %v231 = vpack.c.bf16 0.0, %v229
  %232 = vst [vmem:[%s230] sm:$0xf] %v231
  %s233 = scalar_lea.vmem %s4, 148
  %v234 = vld [vmem:[%s233] sm:$0xf]
  %v235 = vunpack.c.l.bf16 %v234
  %v236 = vunpack.c.h.bf16 %v234
  %vm237 = vcmask 1043456
  %v238 = vsel %vm237, %v235, %v185
  %v239 = vrot.slane %v238, 4
  %s240 = scalar_lea.vmem %s1, 40
  %v241 = vpack.c.bf16 0.0, %v239
  %242 = vst [vmem:[%s240] sm:$0xf] %v241
  %s243 = scalar_lea.vmem %s4, 276
  %v244 = vld [vmem:[%s243] sm:$0xf]
  %v245 = vunpack.c.l.bf16 %v244
  %v246 = vunpack.c.h.bf16 %v244
  %vm247 = vcmask 1043456
  %v248 = vsel %vm247, %v245, %v195
  %v249 = vrot.slane %v248, 4
  %s250 = scalar_lea.vmem %s1, 64
  %v251 = vpack.c.bf16 0.0, %v249
  %252 = vst [vmem:[%s250] sm:$0xf] %v251
  %s253 = scalar_lea.vmem %s4, 404
  %v254 = vld [vmem:[%s253] sm:$0xf]
  %v255 = vunpack.c.l.bf16 %v254
  %v256 = vunpack.c.h.bf16 %v254
  %vm257 = vcmask 1043456
  %v258 = vsel %vm257, %v255, %v205
  %v259 = vrot.slane %v258, 4
  %s260 = scalar_lea.vmem %s1, 88
  %v261 = vpack.c.bf16 0.0, %v259
  %262 = vst [vmem:[%s260] sm:$0xf] %v261
  %s263 = scalar_lea.vmem %s4, 532
  %v264 = vld [vmem:[%s263] sm:$0xf]
  %v265 = vunpack.c.l.bf16 %v264
  %v266 = vunpack.c.h.bf16 %v264
  %vm267 = vcmask 1043456
  %v268 = vsel %vm267, %v265, %v215
  %v269 = vrot.slane %v268, 4
  %s270 = scalar_lea.vmem %s1, 112
  %v271 = vpack.c.bf16 0.0, %v269
  %272 = vst [vmem:[%s270] sm:$0xf] %v271
  %s273 = scalar_lea.vmem %s4, 24
  %s275 = sor.u32 255, 127
  %s276 = sand.u32 %s275, 85
  %s277 = sshrl.u32 %s276, 1
  %s278 = sor.u32 %s276, %s277
  %s279 = sand.u32 51, %s278
  %s280 = sshrl.u32 %s279, 2
  %s281 = sor.u32 %s279, %s280
  %s282 = sand.u32 15, %s281
  %v283 = vld [vmem:[%s273] sm:%s282]
  %v284 = vunpack.c.l.bf16 %v283
  %v285 = vunpack.c.h.bf16 %v283
  %vm286 = vcmask 1043456
  %v287 = vsel %vm286, %v284, %v225
  %v288 = vrot.slane %v287, 4
  %s289 = scalar_lea.vmem %s1, 20
  %v290 = vpack.c.bf16 0.0, %v288
  %291 = vst [vmem:[%s289] sm:$0xf] %v290
  %s292 = scalar_lea.vmem %s4, 152
  %s294 = sor.u32 255, 127
  %s295 = sand.u32 %s294, 85
  %s296 = sshrl.u32 %s295, 1
  %s297 = sor.u32 %s295, %s296
  %s298 = sand.u32 51, %s297
  %s299 = sshrl.u32 %s298, 2
  %s300 = sor.u32 %s298, %s299
  %s301 = sand.u32 15, %s300
  %v302 = vld [vmem:[%s292] sm:%s301]
  %v303 = vunpack.c.l.bf16 %v302
  %v304 = vunpack.c.h.bf16 %v302
  %vm305 = vcmask 1043456
  %v306 = vsel %vm305, %v303, %v235
  %v307 = vrot.slane %v306, 4
  %s308 = scalar_lea.vmem %s1, 44
  %v309 = vpack.c.bf16 0.0, %v307
  %310 = vst [vmem:[%s308] sm:$0xf] %v309
  %s311 = scalar_lea.vmem %s4, 280
  %s313 = sor.u32 255, 127
  %s314 = sand.u32 %s313, 85
  %s315 = sshrl.u32 %s314, 1
  %s316 = sor.u32 %s314, %s315
  %s317 = sand.u32 51, %s316
  %s318 = sshrl.u32 %s317, 2
  %s319 = sor.u32 %s317, %s318
  %s320 = sand.u32 15, %s319
  %v321 = vld [vmem:[%s311] sm:%s320]
  %v322 = vunpack.c.l.bf16 %v321
  %v323 = vunpack.c.h.bf16 %v321
  %vm324 = vcmask 1043456
  %v325 = vsel %vm324, %v322, %v245
  %v326 = vrot.slane %v325, 4
  %s327 = scalar_lea.vmem %s1, 68
  %v328 = vpack.c.bf16 0.0, %v326
  %329 = vst [vmem:[%s327] sm:$0xf] %v328
  %s330 = scalar_lea.vmem %s4, 408
  %s332 = sor.u32 255, 127
  %s333 = sand.u32 %s332, 85
  %s334 = sshrl.u32 %s333, 1
  %s335 = sor.u32 %s333, %s334
  %s336 = sand.u32 51, %s335
  %s337 = sshrl.u32 %s336, 2
  %s338 = sor.u32 %s336, %s337
  %s339 = sand.u32 15, %s338
  %v340 = vld [vmem:[%s330] sm:%s339]
  %v341 = vunpack.c.l.bf16 %v340
  %v342 = vunpack.c.h.bf16 %v340
  %vm343 = vcmask 1043456
  %v344 = vsel %vm343, %v341, %v255
  %v345 = vrot.slane %v344, 4
  %s346 = scalar_lea.vmem %s1, 92
  %v347 = vpack.c.bf16 0.0, %v345
  %348 = vst [vmem:[%s346] sm:$0xf] %v347
  %s349 = scalar_lea.vmem %s4, 536
  %s351 = sor.u32 255, 127
  %s352 = sand.u32 %s351, 85
  %s353 = sshrl.u32 %s352, 1
  %s354 = sor.u32 %s352, %s353
  %s355 = sand.u32 51, %s354
  %s356 = sshrl.u32 %s355, 2
  %s357 = sor.u32 %s355, %s356
  %s358 = sand.u32 15, %s357
  %v359 = vld [vmem:[%s349] sm:%s358]
  %v360 = vunpack.c.l.bf16 %v359
  %v361 = vunpack.c.h.bf16 %v359
  %vm362 = vcmask 1043456
  %v363 = vsel %vm362, %v360, %v265
  %v364 = vrot.slane %v363, 4
  %s365 = scalar_lea.vmem %s1, 116
  %v366 = vpack.c.bf16 0.0, %v364
  %367 = vst [vmem:[%s365] sm:$0xf] %v366

// kernel: split.0
$region0: #{split.0}
  #allocation0 [shape = 'u32[2048]{0}', space=vmem, size = 0x2000, scoped, tag = 'scoped memory for split.0']
  #allocation1 [shape = 'u32[2048]{0}', space=vmem, size = 0x2000, scoped, tag = 'scoped memory for split.0']
  #allocation2 [shape = 'u32[2048]{0}', space=vmem, size = 0x2000, scoped, tag = 'scoped memory for split.0']
  #allocation3 [shape = 'u32[2048]{0}', space=vmem, size = 0x2000, scoped, tag = 'scoped memory for split.0']
  #allocation4 [shape = 'u32[2048]{0}', space=vmem, size = 0x2000, scoped, tag = 'scoped memory for split.0']
  #allocation5 [shape = 's32[1]{0}', space=sflag, size = 0x4, scoped, tag = 'scoped memory for split.0']
  %s0 = inlined_call_operand.vmem [shape: bf16[5,252,9], index: 0, kind: input, shape index: {}]
  %s1 = inlined_call_operand.vmem [shape: bf16[5,12,9], index: 1, kind: output, shape index: {}]
  %v2 = vld [vmem:[%s0] sm:$0xf]
  %v3 = vunpack.c.l.bf16 %v2
  %v4 = vunpack.c.h.bf16 %v2
  %v5 = vpack.c.bf16 0.0, %v3
  %6 = vst [vmem:[%s1] sm:$0xf] %v5
  %s7 = scalar_lea.vmem %s0, 128
  %v8 = vld [vmem:[%s7] sm:$0xf]
  %v9 = vunpack.c.l.bf16 %v8
  %v10 = vunpack.c.h.bf16 %v8
  %s11 = scalar_lea.vmem %s1, 8
  %v12 = vpack.c.bf16 0.0, %v9
  %13 = vst [vmem:[%s11] sm:$0xf] %v12
  %s14 = scalar_lea.vmem %s0, 256
  %v15 = vld [vmem:[%s14] sm:$0xf]
  %v16 = vunpack.c.l.bf16 %v15
  %v17 = vunpack.c.h.bf16 %v15
  %s18 = scalar_lea.vmem %s1, 16
  %v19 = vpack.c.bf16 0.0, %v16
  %20 = vst [vmem:[%s18] sm:$0xf] %v19
  %s21 = scalar_lea.vmem %s0, 384
  %v22 = vld [vmem:[%s21] sm:$0xf]
  %v23 = vunpack.c.l.bf16 %v22
  %v24 = vunpack.c.h.bf16 %v22
  %s25 = scalar_lea.vmem %s1, 24
  %v26 = vpack.c.bf16 0.0, %v23
  %27 = vst [vmem:[%s25] sm:$0xf] %v26
  %s28 = scalar_lea.vmem %s0, 512
  %v29 = vld [vmem:[%s28] sm:$0xf]
  %v30 = vunpack.c.l.bf16 %v29
  %v31 = vunpack.c.h.bf16 %v29
  %s32 = scalar_lea.vmem %s1, 32
  %v33 = vpack.c.bf16 0.0, %v30
  %34 = vst [vmem:[%s32] sm:$0xf] %v33
  %s35 = scalar_lea.vmem %s0, 4
  %v36 = vld [vmem:[%s35] sm:$0xf]
  %v37 = vunpack.c.l.bf16 %v36
  %v38 = vunpack.c.h.bf16 %v36
  %s39 = scalar_lea.vmem %s1, 4
  %v40 = vpack.c.bf16 0.0, %v37
  %41 = vst [vmem:[%s39] sm:$0xf] %v40
  %s42 = scalar_lea.vmem %s0, 132
  %v43 = vld [vmem:[%s42] sm:$0xf]
  %v44 = vunpack.c.l.bf16 %v43
  %v45 = vunpack.c.h.bf16 %v43
  %s46 = scalar_lea.vmem %s1, 12
  %v47 = vpack.c.bf16 0.0, %v44
  %48 = vst [vmem:[%s46] sm:$0xf] %v47
  %s49 = scalar_lea.vmem %s0, 260
  %v50 = vld [vmem:[%s49] sm:$0xf]
  %v51 = vunpack.c.l.bf16 %v50
  %v52 = vunpack.c.h.bf16 %v50
  %s53 = scalar_lea.vmem %s1, 20
  %v54 = vpack.c.bf16 0.0, %v51
  %55 = vst [vmem:[%s53] sm:$0xf] %v54
  %s56 = scalar_lea.vmem %s0, 388
  %v57 = vld [vmem:[%s56] sm:$0xf]
  %v58 = vunpack.c.l.bf16 %v57
  %v59 = vunpack.c.h.bf16 %v57
  %s60 = scalar_lea.vmem %s1, 28
  %v61 = vpack.c.bf16 0.0, %v58
  %62 = vst [vmem:[%s60] sm:$0xf] %v61
  %s63 = scalar_lea.vmem %s0, 516
  %v64 = vld [vmem:[%s63] sm:$0xf]
  %v65 = vunpack.c.l.bf16 %v64
  %v66 = vunpack.c.h.bf16 %v64
  %s67 = scalar_lea.vmem %s1, 36
  %v68 = vpack.c.bf16 0.0, %v65
  %69 = vst [vmem:[%s67] sm:$0xf] %v68

// kernel: squeeze.21
$region0: #{squeeze.21}
  %s0 = inlined_call_operand.vmem [shape: f32[1,5,64], index: 0, kind: input, shape index: {}]
  %s1 = inlined_call_operand.vmem [shape: f32[5,8,8], index: 1, kind: output, shape index: {}]
  %v2 = vld [vmem:[%s0] sm:$0x1f]
  %vm3 = vcmask 64512
  %4 = vst.msk [vmem:[%s1] ss:$8 sm:$0xf] %vm3, %v2
  %s5 = scalar_lea.vmem %s1, 28
  %6 = vst.msk [vmem:[%s5] sm:$0x10] %vm3, %v2
  %v7 = vld [vmem:[%s0] sm:$0x1f]
  %8 = vrot.lane.b32.xlu0 %v7, 120
  %v9 = vpop.permute.xlu0 %8
  %vm10 = vcmask 64512
  %s11 = scalar_lea.vmem %s1, 1
  %12 = vst.msk [vmem:[%s11] ss:$8 sm:$0xf] %vm10, %v9
  %s13 = scalar_lea.vmem %s1, 29
  %14 = vst.msk [vmem:[%s13] sm:$0x10] %vm10, %v9
  %v15 = vld [vmem:[%s0] sm:$0x1f]
  %16 = vrot.lane.b32.xlu0 %v15, 112
  %v17 = vpop.permute.xlu0 %16
  %vm18 = vcmask 64512
  %s19 = scalar_lea.vmem %s1, 2
  %20 = vst.msk [vmem:[%s19] ss:$8 sm:$0xf] %vm18, %v17
  %s21 = scalar_lea.vmem %s1, 30
  %22 = vst.msk [vmem:[%s21] sm:$0x10] %vm18, %v17
  %v23 = vld [vmem:[%s0] sm:$0x1f]
  %24 = vrot.lane.b32.xlu0 %v23, 104
  %v25 = vpop.permute.xlu0 %24
  %vm26 = vcmask 64512
  %s27 = scalar_lea.vmem %s1, 3
  %28 = vst.msk [vmem:[%s27] ss:$8 sm:$0xf] %vm26, %v25
  %s29 = scalar_lea.vmem %s1, 31
  %30 = vst.msk [vmem:[%s29] sm:$0x10] %vm26, %v25
  %v31 = vld [vmem:[%s0] sm:$0x1f]
  %32 = vrot.lane.b32.xlu0 %v31, 96
  %v33 = vpop.permute.xlu0 %32
  %vm34 = vcmask 64512
  %s35 = scalar_lea.vmem %s1, 4
  %36 = vst.msk [vmem:[%s35] ss:$8 sm:$0xf] %vm34, %v33
  %s37 = scalar_lea.vmem %s1, 32
  %38 = vst.msk [vmem:[%s37] sm:$0x10] %vm34, %v33
  %v39 = vld [vmem:[%s0] sm:$0x1f]
  %40 = vrot.lane.b32.xlu0 %v39, 88
  %v41 = vpop.permute.xlu0 %40
  %vm42 = vcmask 64512
  %s43 = scalar_lea.vmem %s1, 5
  %44 = vst.msk [vmem:[%s43] ss:$8 sm:$0xf] %vm42, %v41
  %s45 = scalar_lea.vmem %s1, 33
  %46 = vst.msk [vmem:[%s45] sm:$0x10] %vm42, %v41
  %v47 = vld [vmem:[%s0] sm:$0x1f]
  %48 = vrot.lane.b32.xlu0 %v47, 80
  %v49 = vpop.permute.xlu0 %48
  %vm50 = vcmask 64512
  %s51 = scalar_lea.vmem %s1, 6
  %52 = vst.msk [vmem:[%s51] ss:$8 sm:$0xf] %vm50, %v49
  %s53 = scalar_lea.vmem %s1, 34
  %54 = vst.msk [vmem:[%s53] sm:$0x10] %vm50, %v49
  %v55 = vld [vmem:[%s0] sm:$0x1f]
  %56 = vrot.lane.b32.xlu0 %v55, 72
  %v57 = vpop.permute.xlu0 %56
  %vm58 = vcmask 64512
  %s59 = scalar_lea.vmem %s1, 7
  %60 = vst.msk [vmem:[%s59] ss:$8 sm:$0xf] %vm58, %v57
  %s61 = scalar_lea.vmem %s1, 35
  %62 = vst.msk [vmem:[%s61] sm:$0x10] %vm58, %v57

// kernel: squeeze.20
$region0: #{squeeze.20}
  %s0 = inlined_call_operand.vmem [shape: f32[1,5,16], index: 0, kind: input, shape index: {}]
  %s1 = inlined_call_operand.vmem [shape: f32[5,4,4], index: 1, kind: output, shape index: {}]
  $region1: #{squeeze.20} parent=0
    #allocation0 [shape = 'u8[20480]{0}', space=vmem, size = 0x5000, scoped, tag = 'scoped mem for output reshape']
    %v2 = vld [vmem:[%s0] sm:$0x1f]
    %vm3 = vcmask 31744
    %4 = vst.msk [vmem:[#allocation0] ss:$8 sm:$0xf] %vm3, %v2
    %s5 = scalar_lea.vmem [#allocation0], 28
    %6 = vst.msk [vmem:[%s5] sm:$0x10] %vm3, %v2
    %v7 = vld [vmem:[%s0] sm:$0x1f]
    %8 = vrot.lane.b32.xlu0 %v7, 124
    %v9 = vpop.permute.xlu0 %8
    %vm10 = vcmask 31744
    %s11 = scalar_lea.vmem [#allocation0], 1
    %12 = vst.msk [vmem:[%s11] ss:$8 sm:$0xf] %vm10, %v9
    %s13 = scalar_lea.vmem [#allocation0], 29
    %14 = vst.msk [vmem:[%s13] sm:$0x10] %vm10, %v9
    %v15 = vld [vmem:[%s0] sm:$0x1f]
    %16 = vrot.lane.b32.xlu0 %v15, 120
    %v17 = vpop.permute.xlu0 %16
    %vm18 = vcmask 31744
    %s19 = scalar_lea.vmem [#allocation0], 2
    %20 = vst.msk [vmem:[%s19] ss:$8 sm:$0xf] %vm18, %v17
    %s21 = scalar_lea.vmem [#allocation0], 30
    %22 = vst.msk [vmem:[%s21] sm:$0x10] %vm18, %v17
    %v23 = vld [vmem:[%s0] sm:$0x1f]
    %24 = vrot.lane.b32.xlu0 %v23, 116
    %v25 = vpop.permute.xlu0 %24
    %vm26 = vcmask 31744
    %s27 = scalar_lea.vmem [#allocation0], 3
    %28 = vst.msk [vmem:[%s27] ss:$8 sm:$0xf] %vm26, %v25
    %s29 = scalar_lea.vmem [#allocation0], 31
    %30 = vst.msk [vmem:[%s29] sm:$0x10] %vm26, %v25
    %s32 = sshllo.u32 0, 4
    %v34 = vld [vmem:[#allocation0] sm:%s32]
    %s35 = sshllo.u32 0, 4
    %36 = vst [vmem:[%s1] sm:%s35] %v34
    %s37 = scalar_lea.vmem [#allocation0], 8
    %v38 = vld [vmem:[%s37] sm:%s32]
    %s39 = sshllo.u32 0, 4
    %s40 = scalar_lea.vmem %s1, 4
    %41 = vst [vmem:[%s40] sm:%s39] %v38
    %s42 = scalar_lea.vmem [#allocation0], 16
    %v43 = vld [vmem:[%s42] sm:%s32]
    %s44 = sshllo.u32 0, 4
    %s45 = smul.addr 4, 2
    %s46 = scalar_lea.vmem %s1, %s45
    %47 = vst [vmem:[%s46] sm:%s44] %v43
    %s48 = scalar_lea.vmem [#allocation0], 24
    %v49 = vld [vmem:[%s48] sm:%s32]
    %s50 = sshllo.u32 0, 4
    %s51 = smul.addr 4, 3
    %s52 = scalar_lea.vmem %s1, %s51
    %53 = vst [vmem:[%s52] sm:%s50] %v49
    %s54 = scalar_lea.vmem [#allocation0], 32
    %v55 = vld [vmem:[%s54] sm:%s32]
    %s56 = sshllo.u32 0, 4
    %s57 = smul.addr 4, 4
    %s58 = scalar_lea.vmem %s1, %s57
    %59 = vst [vmem:[%s58] sm:%s56] %v55

// kernel: yolo_v3_odam_forward.4
$region0: #{yolo_v3_odam_forward.4}
  #allocation0 [shape = 'u32[]', space=smem, size = 0x4, offset = 0x4, fixed_abs, tag = 'smem constant byte address 0x4 - core index']
  #allocation1 [shape = 'u32[144,128]{1,0:T(1,128)}', space=vmem, size = 0x12000, scoped, tag = 'internal scratch']
  %s0 = inlined_call_operand.vmem [shape: f32[3,8,128], index: 0, kind: input, shape index: {}]
  %s1 = inlined_call_operand.vmem [shape: f32[3,5,8,128], index: 1, kind: input, shape index: {}]
  %s2 = inlined_call_operand.vmem [shape: f32[3,5,128], index: 2, kind: output, shape index: {}]
  %s3 = sld [smem:[#allocation0]]
  $region18: #{yolo_v3_odam_forward.4} parent=0
    _
  %s5 = ssub.s32 1, %s3
  %s6 = scalar_select 0, %s5, %s3
  // Predicated region
  $region2: #{yolo_v3_odam_forward.4} parent=0 // pred_check
    _
  $region3: #{yolo_v3_odam_forward.4} parent=0 // pred_check_branch
    %8 = sbr.rel (0) target = $region5
  $region4: #{yolo_v3_odam_forward.4} parent=0 // pred_region
    _
  $region5: #{yolo_v3_odam_forward.4} parent=0 // pred_fallthru
    _
  // Predicated region
  $region6: #{yolo_v3_odam_forward.4} parent=0 // pred_check
    _
  $region7: #{yolo_v3_odam_forward.4} parent=0 // pred_check_branch
    %10 = sbr.rel (0) target = $region9
  $region8: #{yolo_v3_odam_forward.4} parent=0 // pred_region
    _
  $region9: #{yolo_v3_odam_forward.4} parent=0 // pred_fallthru
    _
  %v11 = vlaneseq
  %v12 = vand.u32 %v11, 127
  %v13 = vld [vmem:[%s0] sm:$0xff]
  %v14 = vld [vmem:[%s1] sm:$0xff]
  %v15 = vld [vmem:[%s1 + $0x8] sm:$0xff]
  %v16 = vld [vmem:[%s1 + $0x10] sm:$0xff]
  %v17 = vld [vmem:[%s1 + $0x18] sm:$0xff]
  %v18 = vld [vmem:[%s1 + $0x20] sm:$0xff]
  %v19 = vmul.f32 %v14, %v13
  %v20 = vmul.f32 %v15, %v13
  %v21 = vmul.f32 %v16, %v13
  %v22 = vmul.f32 %v17, %v13
  %v23 = vmul.f32 %v18, %v13
  %v24 = vrot.slane %v19, 4
  %v25 = vadd.f32 %v19, %v24
  %v26 = vrot.slane %v25, 2
  %v27 = vadd.f32 %v25, %v26
  %v28 = vrot.slane %v27, 1
  %v29 = vadd.f32 %v27, %v28
  %v30 = vrot.slane %v20, 4
  %v31 = vadd.f32 %v20, %v30
  %v32 = vrot.slane %v31, 2
  %v33 = vadd.f32 %v31, %v32
  %v34 = vrot.slane %v33, 1
  %v35 = vadd.f32 %v33, %v34
  %v36 = vrot.slane %v21, 4
  %v37 = vadd.f32 %v21, %v36
  %v38 = vrot.slane %v37, 2
  %v39 = vadd.f32 %v37, %v38
  %v40 = vrot.slane %v39, 1
  %v41 = vadd.f32 %v39, %v40
  %v42 = vrot.slane %v22, 4
  %v43 = vadd.f32 %v22, %v42
  %v44 = vrot.slane %v43, 2
  %v45 = vadd.f32 %v43, %v44
  %v46 = vrot.slane %v45, 1
  %v47 = vadd.f32 %v45, %v46
  %v48 = vrot.slane %v23, 4
  %v49 = vadd.f32 %v23, %v48
  %v50 = vrot.slane %v49, 2
  %v51 = vadd.f32 %v49, %v50
  %v52 = vrot.slane %v51, 1
  %v53 = vadd.f32 %v51, %v52
  %v54 = vmax.f32 %v29, 0.0
  %v55 = vmax.f32 %v35, 0.0
  %v56 = vmax.f32 %v41, 0.0
  %v57 = vmax.f32 %v47, 0.0
  %v58 = vmax.f32 %v53, 0.0
  %vm59 = vcmp.lt.s32.totalorder %v12, 4
  %vm65 = vcmask 1041409
  %v66 = vsel %vm65, %v55, %v54
  %vm67 = vcmask 1042434
  %v68 = vsel %vm67, %v56, %v66
  %vm69 = vcmask 1043459
  %v70 = vsel %vm69, %v57, %v68
  %vm71 = vcmask 1044484
  %v72 = vsel %vm71, %v58, %v70
  %v74 = vsel %vm59, %v72, inf
  %vm75 = vcmask 1044480
  %v76 = vsel %vm75, %v74, inf
  %77 = vmin.xlane.f32.xlu0 %v76
  %v78 = vpop.xlane.xlu0 %77
  %v79 = vsel %vm59, %v72, -inf
  %v80 = vsel %vm75, %v79, -inf
  %81 = vmax.xlane.f32.xlu0 %v80
  %v82 = vpop.xlane.xlu0 %81
  %v84 = vrot.slane %v78, 1
  %v85 = vrot.slane %v78, 2
  %v86 = vrot.slane %v78, 3
  %v87 = vrot.slane %v78, 4
  %v93 = vsub.f32 %v54, %v78
  %v94 = vsub.f32 %v55, %v84
  %v95 = vsub.f32 %v56, %v85
  %v96 = vsub.f32 %v57, %v86
  %v97 = vsub.f32 %v58, %v87
  %v98 = vsub.f32 %v82, %v78
  %v99 = vmax.f32 %v98, 1.1920929e-07
  %v101 = vrot.slane %v99, 1
  %v102 = vrot.slane %v99, 2
  %v103 = vrot.slane %v99, 3
  %v104 = vrot.slane %v99, 4
  %v110 = vrcp.pop %v99
  %v111 = vmul.f32 %v93, %v110
  %v112 = vrcp.pop %v101
  %v113 = vmul.f32 %v94, %v112
  %v114 = vrcp.pop %v102
  %v115 = vmul.f32 %v95, %v114
  %v116 = vrcp.pop %v103
  %v117 = vmul.f32 %v96, %v116
  %v118 = vrcp.pop %v104
  %v119 = vmul.f32 %v97, %v118
  %v125 = vrot.slane %v113, 7
  %v126 = vsel %vm65, %v125, %v111
  %v127 = vrot.slane %v115, 6
  %v128 = vsel %vm67, %v127, %v126
  %v129 = vrot.slane %v117, 5
  %v130 = vsel %vm69, %v129, %v128
  %v131 = vrot.slane %v119, 4
  %v132 = vsel %vm71, %v131, %v130
  %134 = vst [vmem:[%s2] sm:$0x1f] %v132
  %s135 = scalar_lea.vmem %s0, 8
  %v136 = vld [vmem:[%s135] sm:$0xff]
  %s137 = scalar_lea.vmem %s1, 40
  %v138 = vld [vmem:[%s137] sm:$0xff]
  %v139 = vld [vmem:[%s137 + $0x8] sm:$0xff]
  %v140 = vld [vmem:[%s137 + $0x10] sm:$0xff]
  %v141 = vld [vmem:[%s137 + $0x18] sm:$0xff]
  %v142 = vld [vmem:[%s137 + $0x20] sm:$0xff]
  %v143 = vmul.f32 %v138, %v136
  %v144 = vmul.f32 %v139, %v136
  %v145 = vmul.f32 %v140, %v136
  %v146 = vmul.f32 %v141, %v136
  %v147 = vmul.f32 %v142, %v136
  %v148 = vrot.slane %v143, 4
  %v149 = vadd.f32 %v143, %v148
  %v150 = vrot.slane %v149, 2
  %v151 = vadd.f32 %v149, %v150
  %v152 = vrot.slane %v151, 1
  %v153 = vadd.f32 %v151, %v152
  %v154 = vrot.slane %v144, 4
  %v155 = vadd.f32 %v144, %v154
  %v156 = vrot.slane %v155, 2
  %v157 = vadd.f32 %v155, %v156
  %v158 = vrot.slane %v157, 1
  %v159 = vadd.f32 %v157, %v158
  %v160 = vrot.slane %v145, 4
  %v161 = vadd.f32 %v145, %v160
  %v162 = vrot.slane %v161, 2
  %v163 = vadd.f32 %v161, %v162
  %v164 = vrot.slane %v163, 1
  %v165 = vadd.f32 %v163, %v164
  %v166 = vrot.slane %v146, 4
  %v167 = vadd.f32 %v146, %v166
  %v168 = vrot.slane %v167, 2
  %v169 = vadd.f32 %v167, %v168
  %v170 = vrot.slane %v169, 1
  %v171 = vadd.f32 %v169, %v170
  %v172 = vrot.slane %v147, 4
  %v173 = vadd.f32 %v147, %v172
  %v174 = vrot.slane %v173, 2
  %v175 = vadd.f32 %v173, %v174
  %v176 = vrot.slane %v175, 1
  %v177 = vadd.f32 %v175, %v176
  %v178 = vmax.f32 %v153, 0.0
  %v179 = vmax.f32 %v159, 0.0
  %v180 = vmax.f32 %v165, 0.0
  %v181 = vmax.f32 %v171, 0.0
  %v182 = vmax.f32 %v177, 0.0
  %vm183 = vcmp.lt.s32.totalorder %v12, 16
  %v189 = vsel %vm65, %v179, %v178
  %v190 = vsel %vm67, %v180, %v189
  %v191 = vsel %vm69, %v181, %v190
  %v192 = vsel %vm71, %v182, %v191
  %v194 = vsel %vm183, %v192, inf
  %v195 = vsel %vm75, %v194, inf
  %196 = vmin.xlane.f32.xlu0 %v195
  %v197 = vpop.xlane.xlu0 %196
  %v198 = vsel %vm183, %v192, -inf
  %v199 = vsel %vm75, %v198, -inf
  %200 = vmax.xlane.f32.xlu0 %v199
  %v201 = vpop.xlane.xlu0 %200
  %v203 = vrot.slane %v197, 1
  %v204 = vrot.slane %v197, 2
  %v205 = vrot.slane %v197, 3
  %v206 = vrot.slane %v197, 4
  %v212 = vsub.f32 %v178, %v197
  %v213 = vsub.f32 %v179, %v203
  %v214 = vsub.f32 %v180, %v204
  %v215 = vsub.f32 %v181, %v205
  %v216 = vsub.f32 %v182, %v206
  %v217 = vsub.f32 %v201, %v197
  %v218 = vmax.f32 %v217, 1.1920929e-07
  %v220 = vrot.slane %v218, 1
  %v221 = vrot.slane %v218, 2
  %v222 = vrot.slane %v218, 3
  %v223 = vrot.slane %v218, 4
  %v229 = vrcp.pop %v218
  %v230 = vmul.f32 %v212, %v229
  %v231 = vrcp.pop %v220
  %v232 = vmul.f32 %v213, %v231
  %v233 = vrcp.pop %v221
  %v234 = vmul.f32 %v214, %v233
  %v235 = vrcp.pop %v222
  %v236 = vmul.f32 %v215, %v235
  %v237 = vrcp.pop %v223
  %v238 = vmul.f32 %v216, %v237
  %v244 = vrot.slane %v232, 7
  %v245 = vsel %vm65, %v244, %v230
  %v246 = vrot.slane %v234, 6
  %v247 = vsel %vm67, %v246, %v245
  %v248 = vrot.slane %v236, 5
  %v249 = vsel %vm69, %v248, %v247
  %v250 = vrot.slane %v238, 4
  %v251 = vsel %vm71, %v250, %v249
  %s253 = scalar_lea.vmem %s2, 8
  %254 = vst [vmem:[%s253] sm:$0x1f] %v251
  %s255 = scalar_lea.vmem %s0, 16
  %v256 = vld [vmem:[%s255] sm:$0xff]
  %s257 = scalar_lea.vmem %s1, 80
  %v258 = vld [vmem:[%s257] sm:$0xff]
  %v259 = vld [vmem:[%s257 + $0x8] sm:$0xff]
  %v260 = vld [vmem:[%s257 + $0x10] sm:$0xff]
  %v261 = vld [vmem:[%s257 + $0x18] sm:$0xff]
  %v262 = vld [vmem:[%s257 + $0x20] sm:$0xff]
  %v263 = vmul.f32 %v258, %v256
  %v264 = vmul.f32 %v259, %v256
  %v265 = vmul.f32 %v260, %v256
  %v266 = vmul.f32 %v261, %v256
  %v267 = vmul.f32 %v262, %v256
  %v268 = vrot.slane %v263, 4
  %v269 = vadd.f32 %v263, %v268
  %v270 = vrot.slane %v269, 2
  %v271 = vadd.f32 %v269, %v270
  %v272 = vrot.slane %v271, 1
  %v273 = vadd.f32 %v271, %v272
  %v274 = vrot.slane %v264, 4
  %v275 = vadd.f32 %v264, %v274
  %v276 = vrot.slane %v275, 2
  %v277 = vadd.f32 %v275, %v276
  %v278 = vrot.slane %v277, 1
  %v279 = vadd.f32 %v277, %v278
  %v280 = vrot.slane %v265, 4
  %v281 = vadd.f32 %v265, %v280
  %v282 = vrot.slane %v281, 2
  %v283 = vadd.f32 %v281, %v282
  %v284 = vrot.slane %v283, 1
  %v285 = vadd.f32 %v283, %v284
  %v286 = vrot.slane %v266, 4
  %v287 = vadd.f32 %v266, %v286
  %v288 = vrot.slane %v287, 2
  %v289 = vadd.f32 %v287, %v288
  %v290 = vrot.slane %v289, 1
  %v291 = vadd.f32 %v289, %v290
  %v292 = vrot.slane %v267, 4
  %v293 = vadd.f32 %v267, %v292
  %v294 = vrot.slane %v293, 2
  %v295 = vadd.f32 %v293, %v294
  %v296 = vrot.slane %v295, 1
  %v297 = vadd.f32 %v295, %v296
  %v298 = vmax.f32 %v273, 0.0
  %v299 = vmax.f32 %v279, 0.0
  %v300 = vmax.f32 %v285, 0.0
  %v301 = vmax.f32 %v291, 0.0
  %v302 = vmax.f32 %v297, 0.0
  %vm303 = vcmp.lt.s32.totalorder %v12, 64
  %v309 = vsel %vm65, %v299, %v298
  %v310 = vsel %vm67, %v300, %v309
  %v311 = vsel %vm69, %v301, %v310
  %v312 = vsel %vm71, %v302, %v311
  %v314 = vsel %vm303, %v312, inf
  %v315 = vsel %vm75, %v314, inf
  %316 = vmin.xlane.f32.xlu0 %v315
  %v317 = vpop.xlane.xlu0 %316
  %v318 = vsel %vm303, %v312, -inf
  %v319 = vsel %vm75, %v318, -inf
  %320 = vmax.xlane.f32.xlu0 %v319
  %v321 = vpop.xlane.xlu0 %320
  %v323 = vrot.slane %v317, 1
  %v324 = vrot.slane %v317, 2
  %v325 = vrot.slane %v317, 3
  %v326 = vrot.slane %v317, 4
  %v332 = vsub.f32 %v298, %v317
  %v333 = vsub.f32 %v299, %v323
  %v334 = vsub.f32 %v300, %v324
  %v335 = vsub.f32 %v301, %v325
  %v336 = vsub.f32 %v302, %v326
  %v337 = vsub.f32 %v321, %v317
  %v338 = vmax.f32 %v337, 1.1920929e-07
  %v340 = vrot.slane %v338, 1
  %v341 = vrot.slane %v338, 2
  %v342 = vrot.slane %v338, 3
  %v343 = vrot.slane %v338, 4
  %v349 = vrcp.pop %v338
  %v350 = vmul.f32 %v332, %v349
  %v351 = vrcp.pop %v340
  %v352 = vmul.f32 %v333, %v351
  %v353 = vrcp.pop %v341
  %v354 = vmul.f32 %v334, %v353
  %v355 = vrcp.pop %v342
  %v356 = vmul.f32 %v335, %v355
  %v357 = vrcp.pop %v343
  %v358 = vmul.f32 %v336, %v357
  %v364 = vrot.slane %v352, 7
  %v365 = vsel %vm65, %v364, %v350
  %v366 = vrot.slane %v354, 6
  %v367 = vsel %vm67, %v366, %v365
  %v368 = vrot.slane %v356, 5
  %v369 = vsel %vm69, %v368, %v367
  %v370 = vrot.slane %v358, 4
  %v371 = vsel %vm71, %v370, %v369
  %s373 = scalar_lea.vmem %s2, 16
  %374 = vst [vmem:[%s373] sm:$0x1f] %v371
  // Predicated region
  $region10: #{yolo_v3_odam_forward.4} parent=0 // pred_check
    _
  $region11: #{yolo_v3_odam_forward.4} parent=0 // pred_check_branch
    %376 = sbr.rel (0) target = $region13
  $region12: #{yolo_v3_odam_forward.4} parent=0 // pred_region
    _
  $region13: #{yolo_v3_odam_forward.4} parent=0 // pred_fallthru
    _
  // Predicated region
  $region14: #{yolo_v3_odam_forward.4} parent=0 // pred_check
    _
  $region15: #{yolo_v3_odam_forward.4} parent=0 // pred_check_branch
    %378 = sbr.rel (0) target = $region17
  $region16: #{yolo_v3_odam_forward.4} parent=0 // pred_region
    _
  $region17: #{yolo_v3_odam_forward.4} parent=0 // pred_fallthru
    _

// kernel: yolo_v3_odam_forward.5
$region0: #{yolo_v3_odam_forward.5}
  #allocation0 [shape = 'u32[]', space=smem, size = 0x4, offset = 0x4, fixed_abs, tag = 'smem constant byte address 0x4 - core index']
  #allocation1 [shape = 'u32[144,128]{1,0:T(1,128)}', space=vmem, size = 0x12000, scoped, tag = 'internal scratch']
  %s0 = inlined_call_operand.vmem [shape: f32[3,5,4096], index: 0, kind: input, shape index: {}]
  %s1 = inlined_call_operand.vmem [shape: f32[1,4096], index: 1, kind: output, shape index: {}]
  %s2 = sld [smem:[#allocation0]]
  $region14: #{yolo_v3_odam_forward.5} parent=0
    _
  %s4 = ssub.s32 1, %s2
  %s5 = scalar_select 0, %s4, %s2
  // Predicated region
  $region2: #{yolo_v3_odam_forward.5} parent=0 // pred_check
    _
  $region3: #{yolo_v3_odam_forward.5} parent=0 // pred_check_branch
    %7 = sbr.rel (0) target = $region5
  $region4: #{yolo_v3_odam_forward.5} parent=0 // pred_region
    _
  $region5: #{yolo_v3_odam_forward.5} parent=0 // pred_fallthru
    _
  %v8 = vld [vmem:[%s0] sm:$0x1f]
  %v9 = vld [vmem:[%s0 + $0x8] sm:$0x1f]
  %v10 = vld [vmem:[%s0 + $0x10] sm:$0x1f]
  %v11 = vld [vmem:[%s0 + $0x18] sm:$0x1f]
  %v12 = vld [vmem:[%s0 + $0x20] sm:$0x1f]
  %v13 = vld [vmem:[%s0 + $0x28] sm:$0x1f]
  %v14 = vld [vmem:[%s0 + $0x30] sm:$0x1f]
  %v15 = vld [vmem:[%s0 + $0x38] sm:$0x1f]
  %v16 = vld [vmem:[%s0 + $0x40] sm:$0x1f]
  %v17 = vld [vmem:[%s0 + $0x48] sm:$0x1f]
  %v18 = vld [vmem:[%s0 + $0x50] sm:$0x1f]
  %v19 = vld [vmem:[%s0 + $0x58] sm:$0x1f]
  %v20 = vld [vmem:[%s0 + $0x60] sm:$0x1f]
  %v21 = vld [vmem:[%s0 + $0x68] sm:$0x1f]
  %v22 = vld [vmem:[%s0 + $0x70] sm:$0x1f]
  %v23 = vld [vmem:[%s0 + $0x78] sm:$0x1f]
  %v24 = vld [vmem:[%s0 + $0x80] sm:$0x1f]
  %v25 = vld [vmem:[%s0 + $0x88] sm:$0x1f]
  %v26 = vld [vmem:[%s0 + $0x90] sm:$0x1f]
  %v27 = vld [vmem:[%s0 + $0x98] sm:$0x1f]
  %v28 = vld [vmem:[%s0 + $0xa0] sm:$0x1f]
  %v29 = vld [vmem:[%s0 + $0xa8] sm:$0x1f]
  %v30 = vld [vmem:[%s0 + $0xb0] sm:$0x1f]
  %v31 = vld [vmem:[%s0 + $0xb8] sm:$0x1f]
  %v32 = vld [vmem:[%s0 + $0xc0] sm:$0x1f]
  %v33 = vld [vmem:[%s0 + $0xc8] sm:$0x1f]
  %v34 = vld [vmem:[%s0 + $0xd0] sm:$0x1f]
  %v35 = vld [vmem:[%s0 + $0xd8] sm:$0x1f]
  %v36 = vld [vmem:[%s0 + $0xe0] sm:$0x1f]
  %v37 = vld [vmem:[%s0 + $0xe8] sm:$0x1f]
  %v38 = vld [vmem:[%s0 + $0xf0] sm:$0x1f]
  %v39 = vld [vmem:[%s0 + $0xf8] sm:$0x1f]
  %v40 = vld [vmem:[%s0 + $0x100] sm:$0x1f]
  %v41 = vld [vmem:[%s0 + $0x108] sm:$0x1f]
  %v42 = vld [vmem:[%s0 + $0x110] sm:$0x1f]
  %v43 = vld [vmem:[%s0 + $0x118] sm:$0x1f]
  %v44 = vld [vmem:[%s0 + $0x120] sm:$0x1f]
  %v45 = vld [vmem:[%s0 + $0x128] sm:$0x1f]
  %v46 = vld [vmem:[%s0 + $0x130] sm:$0x1f]
  %v47 = vld [vmem:[%s0 + $0x138] sm:$0x1f]
  %v48 = vld [vmem:[%s0 + $0x140] sm:$0x1f]
  %v49 = vld [vmem:[%s0 + $0x148] sm:$0x1f]
  %v50 = vld [vmem:[%s0 + $0x150] sm:$0x1f]
  %v51 = vld [vmem:[%s0 + $0x158] sm:$0x1f]
  %v52 = vld [vmem:[%s0 + $0x160] sm:$0x1f]
  %v53 = vld [vmem:[%s0 + $0x168] sm:$0x1f]
  %v54 = vld [vmem:[%s0 + $0x170] sm:$0x1f]
  %v55 = vld [vmem:[%s0 + $0x178] sm:$0x1f]
  %v56 = vld [vmem:[%s0 + $0x180] sm:$0x1f]
  %v57 = vld [vmem:[%s0 + $0x188] sm:$0x1f]
  %v58 = vld [vmem:[%s0 + $0x190] sm:$0x1f]
  %v59 = vld [vmem:[%s0 + $0x198] sm:$0x1f]
  %v60 = vld [vmem:[%s0 + $0x1a0] sm:$0x1f]
  %v61 = vld [vmem:[%s0 + $0x1a8] sm:$0x1f]
  %v62 = vld [vmem:[%s0 + $0x1b0] sm:$0x1f]
  %v63 = vld [vmem:[%s0 + $0x1b8] sm:$0x1f]
  %v64 = vld [vmem:[%s0 + $0x1c0] sm:$0x1f]
  %v65 = vld [vmem:[%s0 + $0x1c8] sm:$0x1f]
  %v66 = vld [vmem:[%s0 + $0x1d0] sm:$0x1f]
  %v67 = vld [vmem:[%s0 + $0x1d8] sm:$0x1f]
  %v68 = vld [vmem:[%s0 + $0x1e0] sm:$0x1f]
  %v69 = vld [vmem:[%s0 + $0x1e8] sm:$0x1f]
  %v70 = vld [vmem:[%s0 + $0x1f0] sm:$0x1f]
  %v71 = vld [vmem:[%s0 + $0x1f8] sm:$0x1f]
  %v72 = vld [vmem:[%s0 + $0x200] sm:$0x1f]
  %v73 = vld [vmem:[%s0 + $0x208] sm:$0x1f]
  %v74 = vld [vmem:[%s0 + $0x210] sm:$0x1f]
  %v75 = vld [vmem:[%s0 + $0x218] sm:$0x1f]
  %v76 = vld [vmem:[%s0 + $0x220] sm:$0x1f]
  %v77 = vld [vmem:[%s0 + $0x228] sm:$0x1f]
  %v78 = vld [vmem:[%s0 + $0x230] sm:$0x1f]
  %v79 = vld [vmem:[%s0 + $0x238] sm:$0x1f]
  %v80 = vld [vmem:[%s0 + $0x240] sm:$0x1f]
  %v81 = vld [vmem:[%s0 + $0x248] sm:$0x1f]
  %v82 = vld [vmem:[%s0 + $0x250] sm:$0x1f]
  %v83 = vld [vmem:[%s0 + $0x258] sm:$0x1f]
  %v84 = vld [vmem:[%s0 + $0x260] sm:$0x1f]
  %v85 = vld [vmem:[%s0 + $0x268] sm:$0x1f]
  %v86 = vld [vmem:[%s0 + $0x270] sm:$0x1f]
  %v87 = vld [vmem:[%s0 + $0x278] sm:$0x1f]
  %v88 = vld [vmem:[%s0 + $0x280] sm:$0x1f]
  %v89 = vld [vmem:[%s0 + $0x288] sm:$0x1f]
  %v90 = vld [vmem:[%s0 + $0x290] sm:$0x1f]
  %v91 = vld [vmem:[%s0 + $0x298] sm:$0x1f]
  %v92 = vld [vmem:[%s0 + $0x2a0] sm:$0x1f]
  %v93 = vld [vmem:[%s0 + $0x2a8] sm:$0x1f]
  %v94 = vld [vmem:[%s0 + $0x2b0] sm:$0x1f]
  %v95 = vld [vmem:[%s0 + $0x2b8] sm:$0x1f]
  %v96 = vld [vmem:[%s0 + $0x2c0] sm:$0x1f]
  %v97 = vld [vmem:[%s0 + $0x2c8] sm:$0x1f]
  %v98 = vld [vmem:[%s0 + $0x2d0] sm:$0x1f]
  %v99 = vld [vmem:[%s0 + $0x2d8] sm:$0x1f]
  %v100 = vld [vmem:[%s0 + $0x2e0] sm:$0x1f]
  %v101 = vld [vmem:[%s0 + $0x2e8] sm:$0x1f]
  %v102 = vld [vmem:[%s0 + $0x2f0] sm:$0x1f]
  %v103 = vld [vmem:[%s0 + $0x2f8] sm:$0x1f]
  %vm104 = vcmask 1044480
  %v105 = vsel %vm104, %v8, 0.0
  %v106 = vsel %vm104, %v40, 0.0
  %v107 = vadd.f32 %v105, %v106
  %v108 = vsel %vm104, %v72, 0.0
  %v109 = vadd.f32 %v107, %v108
  %v110 = vsel %vm104, %v9, 0.0
  %v111 = vsel %vm104, %v41, 0.0
  %v112 = vadd.f32 %v110, %v111
  %v113 = vsel %vm104, %v73, 0.0
  %v114 = vadd.f32 %v112, %v113
  %v115 = vsel %vm104, %v10, 0.0
  %v116 = vsel %vm104, %v42, 0.0
  %v117 = vadd.f32 %v115, %v116
  %v118 = vsel %vm104, %v74, 0.0
  %v119 = vadd.f32 %v117, %v118
  %v120 = vsel %vm104, %v11, 0.0
  %v121 = vsel %vm104, %v43, 0.0
  %v122 = vadd.f32 %v120, %v121
  %v123 = vsel %vm104, %v75, 0.0
  %v124 = vadd.f32 %v122, %v123
  %v125 = vsel %vm104, %v12, 0.0
  %v126 = vsel %vm104, %v44, 0.0
  %v127 = vadd.f32 %v125, %v126
  %v128 = vsel %vm104, %v76, 0.0
  %v129 = vadd.f32 %v127, %v128
  %v130 = vsel %vm104, %v13, 0.0
  %v131 = vsel %vm104, %v45, 0.0
  %v132 = vadd.f32 %v130, %v131
  %v133 = vsel %vm104, %v77, 0.0
  %v134 = vadd.f32 %v132, %v133
  %v135 = vsel %vm104, %v14, 0.0
  %v136 = vsel %vm104, %v46, 0.0
  %v137 = vadd.f32 %v135, %v136
  %v138 = vsel %vm104, %v78, 0.0
  %v139 = vadd.f32 %v137, %v138
  %v140 = vsel %vm104, %v15, 0.0
  %v141 = vsel %vm104, %v47, 0.0
  %v142 = vadd.f32 %v140, %v141
  %v143 = vsel %vm104, %v79, 0.0
  %v144 = vadd.f32 %v142, %v143
  %v145 = vsel %vm104, %v16, 0.0
  %v146 = vsel %vm104, %v48, 0.0
  %v147 = vadd.f32 %v145, %v146
  %v148 = vsel %vm104, %v80, 0.0
  %v149 = vadd.f32 %v147, %v148
  %v150 = vsel %vm104, %v17, 0.0
  %v151 = vsel %vm104, %v49, 0.0
  %v152 = vadd.f32 %v150, %v151
  %v153 = vsel %vm104, %v81, 0.0
  %v154 = vadd.f32 %v152, %v153
  %v155 = vsel %vm104, %v18, 0.0
  %v156 = vsel %vm104, %v50, 0.0
  %v157 = vadd.f32 %v155, %v156
  %v158 = vsel %vm104, %v82, 0.0
  %v159 = vadd.f32 %v157, %v158
  %v160 = vsel %vm104, %v19, 0.0
  %v161 = vsel %vm104, %v51, 0.0
  %v162 = vadd.f32 %v160, %v161
  %v163 = vsel %vm104, %v83, 0.0
  %v164 = vadd.f32 %v162, %v163
  %v165 = vsel %vm104, %v20, 0.0
  %v166 = vsel %vm104, %v52, 0.0
  %v167 = vadd.f32 %v165, %v166
  %v168 = vsel %vm104, %v84, 0.0
  %v169 = vadd.f32 %v167, %v168
  %v170 = vsel %vm104, %v21, 0.0
  %v171 = vsel %vm104, %v53, 0.0
  %v172 = vadd.f32 %v170, %v171
  %v173 = vsel %vm104, %v85, 0.0
  %v174 = vadd.f32 %v172, %v173
  %v175 = vsel %vm104, %v22, 0.0
  %v176 = vsel %vm104, %v54, 0.0
  %v177 = vadd.f32 %v175, %v176
  %v178 = vsel %vm104, %v86, 0.0
  %v179 = vadd.f32 %v177, %v178
  %v180 = vsel %vm104, %v23, 0.0
  %v181 = vsel %vm104, %v55, 0.0
  %v182 = vadd.f32 %v180, %v181
  %v183 = vsel %vm104, %v87, 0.0
  %v184 = vadd.f32 %v182, %v183
  %v185 = vsel %vm104, %v24, 0.0
  %v186 = vsel %vm104, %v56, 0.0
  %v187 = vadd.f32 %v185, %v186
  %v188 = vsel %vm104, %v88, 0.0
  %v189 = vadd.f32 %v187, %v188
  %v190 = vsel %vm104, %v25, 0.0
  %v191 = vsel %vm104, %v57, 0.0
  %v192 = vadd.f32 %v190, %v191
  %v193 = vsel %vm104, %v89, 0.0
  %v194 = vadd.f32 %v192, %v193
  %v195 = vsel %vm104, %v26, 0.0
  %v196 = vsel %vm104, %v58, 0.0
  %v197 = vadd.f32 %v195, %v196
  %v198 = vsel %vm104, %v90, 0.0
  %v199 = vadd.f32 %v197, %v198
  %v200 = vsel %vm104, %v27, 0.0
  %v201 = vsel %vm104, %v59, 0.0
  %v202 = vadd.f32 %v200, %v201
  %v203 = vsel %vm104, %v91, 0.0
  %v204 = vadd.f32 %v202, %v203
  %v205 = vsel %vm104, %v28, 0.0
  %v206 = vsel %vm104, %v60, 0.0
  %v207 = vadd.f32 %v205, %v206
  %v208 = vsel %vm104, %v92, 0.0
  %v209 = vadd.f32 %v207, %v208
  %v210 = vsel %vm104, %v29, 0.0
  %v211 = vsel %vm104, %v61, 0.0
  %v212 = vadd.f32 %v210, %v211
  %v213 = vsel %vm104, %v93, 0.0
  %v214 = vadd.f32 %v212, %v213
  %v215 = vsel %vm104, %v30, 0.0
  %v216 = vsel %vm104, %v62, 0.0
  %v217 = vadd.f32 %v215, %v216
  %v218 = vsel %vm104, %v94, 0.0
  %v219 = vadd.f32 %v217, %v218
  %v220 = vsel %vm104, %v31, 0.0
  %v221 = vsel %vm104, %v63, 0.0
  %v222 = vadd.f32 %v220, %v221
  %v223 = vsel %vm104, %v95, 0.0
  %v224 = vadd.f32 %v222, %v223
  %v225 = vsel %vm104, %v32, 0.0
  %v226 = vsel %vm104, %v64, 0.0
  %v227 = vadd.f32 %v225, %v226
  %v228 = vsel %vm104, %v96, 0.0
  %v229 = vadd.f32 %v227, %v228
  %v230 = vsel %vm104, %v33, 0.0
  %v231 = vsel %vm104, %v65, 0.0
  %v232 = vadd.f32 %v230, %v231
  %v233 = vsel %vm104, %v97, 0.0
  %v234 = vadd.f32 %v232, %v233
  %v235 = vsel %vm104, %v34, 0.0
  %v236 = vsel %vm104, %v66, 0.0
  %v237 = vadd.f32 %v235, %v236
  %v238 = vsel %vm104, %v98, 0.0
  %v239 = vadd.f32 %v237, %v238
  %v240 = vsel %vm104, %v35, 0.0
  %v241 = vsel %vm104, %v67, 0.0
  %v242 = vadd.f32 %v240, %v241
  %v243 = vsel %vm104, %v99, 0.0
  %v244 = vadd.f32 %v242, %v243
  %v245 = vsel %vm104, %v36, 0.0
  %v246 = vsel %vm104, %v68, 0.0
  %v247 = vadd.f32 %v245, %v246
  %v248 = vsel %vm104, %v100, 0.0
  %v249 = vadd.f32 %v247, %v248
  %v250 = vsel %vm104, %v37, 0.0
  %v251 = vsel %vm104, %v69, 0.0
  %v252 = vadd.f32 %v250, %v251
  %v253 = vsel %vm104, %v101, 0.0
  %v254 = vadd.f32 %v252, %v253
  %v255 = vsel %vm104, %v38, 0.0
  %v256 = vsel %vm104, %v70, 0.0
  %v257 = vadd.f32 %v255, %v256
  %v258 = vsel %vm104, %v102, 0.0
  %v259 = vadd.f32 %v257, %v258
  %v260 = vsel %vm104, %v39, 0.0
  %v261 = vsel %vm104, %v71, 0.0
  %v262 = vadd.f32 %v260, %v261
  %v263 = vsel %vm104, %v103, 0.0
  %v264 = vadd.f32 %v262, %v263
  %v265 = vrcp.pop 3.0
  %v266 = vmul.f32 %v109, %v265
  %v267 = vmul.f32 %v114, %v265
  %v268 = vmul.f32 %v119, %v265
  %v269 = vmul.f32 %v124, %v265
  %v270 = vmul.f32 %v129, %v265
  %v271 = vmul.f32 %v134, %v265
  %v272 = vmul.f32 %v139, %v265
  %v273 = vmul.f32 %v144, %v265
  %v274 = vmul.f32 %v149, %v265
  %v275 = vmul.f32 %v154, %v265
  %v276 = vmul.f32 %v159, %v265
  %v277 = vmul.f32 %v164, %v265
  %v278 = vmul.f32 %v169, %v265
  %v279 = vmul.f32 %v174, %v265
  %v280 = vmul.f32 %v179, %v265
  %v281 = vmul.f32 %v184, %v265
  %v282 = vmul.f32 %v189, %v265
  %v283 = vmul.f32 %v194, %v265
  %v284 = vmul.f32 %v199, %v265
  %v285 = vmul.f32 %v204, %v265
  %v286 = vmul.f32 %v209, %v265
  %v287 = vmul.f32 %v214, %v265
  %v288 = vmul.f32 %v219, %v265
  %v289 = vmul.f32 %v224, %v265
  %v290 = vmul.f32 %v229, %v265
  %v291 = vmul.f32 %v234, %v265
  %v292 = vmul.f32 %v239, %v265
  %v293 = vmul.f32 %v244, %v265
  %v294 = vmul.f32 %v249, %v265
  %v295 = vmul.f32 %v254, %v265
  %v296 = vmul.f32 %v259, %v265
  %v297 = vmul.f32 %v264, %v265
  %v298 = vsel %vm104, %v266, inf
  %v299 = vsel %vm104, %v267, inf
  %v300 = vsel %vm104, %v268, inf
  %v301 = vsel %vm104, %v269, inf
  %v302 = vsel %vm104, %v270, inf
  %v303 = vmin.f32 %v298, %v302
  %v304 = vsel %vm104, %v271, inf
  %v305 = vmin.f32 %v299, %v304
  %v306 = vsel %vm104, %v272, inf
  %v307 = vmin.f32 %v300, %v306
  %v308 = vsel %vm104, %v273, inf
  %v309 = vmin.f32 %v301, %v308
  %v310 = vsel %vm104, %v274, inf
  %v311 = vmin.f32 %v303, %v310
  %v312 = vsel %vm104, %v275, inf
  %v313 = vmin.f32 %v305, %v312
  %v314 = vsel %vm104, %v276, inf
  %v315 = vmin.f32 %v307, %v314
  %v316 = vsel %vm104, %v277, inf
  %v317 = vmin.f32 %v309, %v316
  %v318 = vsel %vm104, %v278, inf
  %v319 = vmin.f32 %v311, %v318
  %v320 = vsel %vm104, %v279, inf
  %v321 = vmin.f32 %v313, %v320
  %v322 = vsel %vm104, %v280, inf
  %v323 = vmin.f32 %v315, %v322
  %v324 = vsel %vm104, %v281, inf
  %v325 = vmin.f32 %v317, %v324
  %v326 = vsel %vm104, %v282, inf
  %v327 = vmin.f32 %v319, %v326
  %v328 = vsel %vm104, %v283, inf
  %v329 = vmin.f32 %v321, %v328
  %v330 = vsel %vm104, %v284, inf
  %v331 = vmin.f32 %v323, %v330
  %v332 = vsel %vm104, %v285, inf
  %v333 = vmin.f32 %v325, %v332
  %v334 = vsel %vm104, %v286, inf
  %v335 = vmin.f32 %v327, %v334
  %v336 = vsel %vm104, %v287, inf
  %v337 = vmin.f32 %v329, %v336
  %v338 = vsel %vm104, %v288, inf
  %v339 = vmin.f32 %v331, %v338
  %v340 = vsel %vm104, %v289, inf
  %v341 = vmin.f32 %v333, %v340
  %v342 = vsel %vm104, %v290, inf
  %v343 = vmin.f32 %v335, %v342
  %v344 = vsel %vm104, %v291, inf
  %v345 = vmin.f32 %v337, %v344
  %v346 = vsel %vm104, %v292, inf
  %v347 = vmin.f32 %v339, %v346
  %v348 = vsel %vm104, %v293, inf
  %v349 = vmin.f32 %v341, %v348
  %v350 = vsel %vm104, %v294, inf
  %v351 = vmin.f32 %v343, %v350
  %v352 = vsel %vm104, %v295, inf
  %v353 = vmin.f32 %v345, %v352
  %v354 = vsel %vm104, %v296, inf
  %v355 = vmin.f32 %v347, %v354
  %v356 = vsel %vm104, %v297, inf
  %v357 = vmin.f32 %v349, %v356
  %v358 = vmin.f32 %v351, %v353
  %v359 = vmin.f32 %v355, %v357
  %v360 = vmin.f32 %v358, %v359
  %361 = vmin.xlane.f32.xlu0 %v360
  %v362 = vpop.xlane.xlu0 %361
  %v363 = vsel %vm104, %v266, -inf
  %v364 = vsel %vm104, %v267, -inf
  %v365 = vsel %vm104, %v268, -inf
  %v366 = vsel %vm104, %v269, -inf
  %v367 = vsel %vm104, %v270, -inf
  %v368 = vmax.f32 %v363, %v367
  %v369 = vsel %vm104, %v271, -inf
  %v370 = vmax.f32 %v364, %v369
  %v371 = vsel %vm104, %v272, -inf
  %v372 = vmax.f32 %v365, %v371
  %v373 = vsel %vm104, %v273, -inf
  %v374 = vmax.f32 %v366, %v373
  %v375 = vsel %vm104, %v274, -inf
  %v376 = vmax.f32 %v368, %v375
  %v377 = vsel %vm104, %v275, -inf
  %v378 = vmax.f32 %v370, %v377
  %v379 = vsel %vm104, %v276, -inf
  %v380 = vmax.f32 %v372, %v379
  %v381 = vsel %vm104, %v277, -inf
  %v382 = vmax.f32 %v374, %v381
  %v383 = vsel %vm104, %v278, -inf
  %v384 = vmax.f32 %v376, %v383
  %v385 = vsel %vm104, %v279, -inf
  %v386 = vmax.f32 %v378, %v385
  %v387 = vsel %vm104, %v280, -inf
  %v388 = vmax.f32 %v380, %v387
  %v389 = vsel %vm104, %v281, -inf
  %v390 = vmax.f32 %v382, %v389
  %v391 = vsel %vm104, %v282, -inf
  %v392 = vmax.f32 %v384, %v391
  %v393 = vsel %vm104, %v283, -inf
  %v394 = vmax.f32 %v386, %v393
  %v395 = vsel %vm104, %v284, -inf
  %v396 = vmax.f32 %v388, %v395
  %v397 = vsel %vm104, %v285, -inf
  %v398 = vmax.f32 %v390, %v397
  %v399 = vsel %vm104, %v286, -inf
  %v400 = vmax.f32 %v392, %v399
  %v401 = vsel %vm104, %v287, -inf
  %v402 = vmax.f32 %v394, %v401
  %v403 = vsel %vm104, %v288, -inf
  %v404 = vmax.f32 %v396, %v403
  %v405 = vsel %vm104, %v289, -inf
  %v406 = vmax.f32 %v398, %v405
  %v407 = vsel %vm104, %v290, -inf
  %v408 = vmax.f32 %v400, %v407
  %v409 = vsel %vm104, %v291, -inf
  %v410 = vmax.f32 %v402, %v409
  %v411 = vsel %vm104, %v292, -inf
  %v412 = vmax.f32 %v404, %v411
  %v413 = vsel %vm104, %v293, -inf
  %v414 = vmax.f32 %v406, %v413
  %v415 = vsel %vm104, %v294, -inf
  %v416 = vmax.f32 %v408, %v415
  %v417 = vsel %vm104, %v295, -inf
  %v418 = vmax.f32 %v410, %v417
  %v419 = vsel %vm104, %v296, -inf
  %v420 = vmax.f32 %v412, %v419
  %v421 = vsel %vm104, %v297, -inf
  %v422 = vmax.f32 %v414, %v421
  %v423 = vmax.f32 %v416, %v418
  %v424 = vmax.f32 %v420, %v422
  %v425 = vmax.f32 %v423, %v424
  %426 = vmax.xlane.f32.xlu0 %v425
  %v427 = vpop.xlane.xlu0 %426
  %v428 = vsub.f32 %v266, %v362
  %v429 = vsub.f32 %v267, %v362
  %v430 = vsub.f32 %v268, %v362
  %v431 = vsub.f32 %v269, %v362
  %v432 = vsub.f32 %v270, %v362
  %v433 = vsub.f32 %v271, %v362
  %v434 = vsub.f32 %v272, %v362
  %v435 = vsub.f32 %v273, %v362
  %v436 = vsub.f32 %v274, %v362
  %v437 = vsub.f32 %v275, %v362
  %v438 = vsub.f32 %v276, %v362
  %v439 = vsub.f32 %v277, %v362
  %v440 = vsub.f32 %v278, %v362
  %v441 = vsub.f32 %v279, %v362
  %v442 = vsub.f32 %v280, %v362
  %v443 = vsub.f32 %v281, %v362
  %v444 = vsub.f32 %v282, %v362
  %v445 = vsub.f32 %v283, %v362
  %v446 = vsub.f32 %v284, %v362
  %v447 = vsub.f32 %v285, %v362
  %v448 = vsub.f32 %v286, %v362
  %v449 = vsub.f32 %v287, %v362
  %v450 = vsub.f32 %v288, %v362
  %v451 = vsub.f32 %v289, %v362
  %v452 = vsub.f32 %v290, %v362
  %v453 = vsub.f32 %v291, %v362
  %v454 = vsub.f32 %v292, %v362
  %v455 = vsub.f32 %v293, %v362
  %v456 = vsub.f32 %v294, %v362
  %v457 = vsub.f32 %v295, %v362
  %v458 = vsub.f32 %v296, %v362
  %v459 = vsub.f32 %v297, %v362
  %v460 = vsub.f32 %v427, %v362
  %v461 = vmax.f32 %v460, 1.1920929e-07
  %v462 = vrcp.pop %v461
  %v463 = vmul.f32 %v428, %v462
  %v464 = vmul.f32 %v429, %v462
  %v465 = vmul.f32 %v430, %v462
  %v466 = vmul.f32 %v431, %v462
  %v467 = vmul.f32 %v432, %v462
  %v468 = vmul.f32 %v433, %v462
  %v469 = vmul.f32 %v434, %v462
  %v470 = vmul.f32 %v435, %v462
  %v471 = vmul.f32 %v436, %v462
  %v472 = vmul.f32 %v437, %v462
  %v473 = vmul.f32 %v438, %v462
  %v474 = vmul.f32 %v439, %v462
  %v475 = vmul.f32 %v440, %v462
  %v476 = vmul.f32 %v441, %v462
  %v477 = vmul.f32 %v442, %v462
  %v478 = vmul.f32 %v443, %v462
  %v479 = vmul.f32 %v444, %v462
  %v480 = vmul.f32 %v445, %v462
  %v481 = vmul.f32 %v446, %v462
  %v482 = vmul.f32 %v447, %v462
  %v483 = vmul.f32 %v448, %v462
  %v484 = vmul.f32 %v449, %v462
  %v485 = vmul.f32 %v450, %v462
  %v486 = vmul.f32 %v451, %v462
  %v487 = vmul.f32 %v452, %v462
  %v488 = vmul.f32 %v453, %v462
  %v489 = vmul.f32 %v454, %v462
  %v490 = vmul.f32 %v455, %v462
  %v491 = vmul.f32 %v456, %v462
  %v492 = vmul.f32 %v457, %v462
  %v493 = vmul.f32 %v458, %v462
  %v494 = vmul.f32 %v459, %v462
  %v495 = vsel %vm104, %v463, -inf
  %v496 = vrot.slane %v495, 4
  %v497 = vmax.f32 %v495, %v496
  %v498 = vrot.slane %v497, 2
  %v499 = vmax.f32 %v497, %v498
  %v500 = vrot.slane %v499, 1
  %v501 = vmax.f32 %v499, %v500
  %v502 = vsel %vm104, %v464, -inf
  %v503 = vrot.slane %v502, 4
  %v504 = vmax.f32 %v502, %v503
  %v505 = vrot.slane %v504, 2
  %v506 = vmax.f32 %v504, %v505
  %v507 = vrot.slane %v506, 1
  %v508 = vmax.f32 %v506, %v507
  %v509 = vsel %vm104, %v465, -inf
  %v510 = vrot.slane %v509, 4
  %v511 = vmax.f32 %v509, %v510
  %v512 = vrot.slane %v511, 2
  %v513 = vmax.f32 %v511, %v512
  %v514 = vrot.slane %v513, 1
  %v515 = vmax.f32 %v513, %v514
  %v516 = vsel %vm104, %v466, -inf
  %v517 = vrot.slane %v516, 4
  %v518 = vmax.f32 %v516, %v517
  %v519 = vrot.slane %v518, 2
  %v520 = vmax.f32 %v518, %v519
  %v521 = vrot.slane %v520, 1
  %v522 = vmax.f32 %v520, %v521
  %v523 = vsel %vm104, %v467, -inf
  %v524 = vrot.slane %v523, 4
  %v525 = vmax.f32 %v523, %v524
  %v526 = vrot.slane %v525, 2
  %v527 = vmax.f32 %v525, %v526
  %v528 = vrot.slane %v527, 1
  %v529 = vmax.f32 %v527, %v528
  %v530 = vsel %vm104, %v468, -inf
  %v531 = vrot.slane %v530, 4
  %v532 = vmax.f32 %v530, %v531
  %v533 = vrot.slane %v532, 2
  %v534 = vmax.f32 %v532, %v533
  %v535 = vrot.slane %v534, 1
  %v536 = vmax.f32 %v534, %v535
  %v537 = vsel %vm104, %v469, -inf
  %v538 = vrot.slane %v537, 4
  %v539 = vmax.f32 %v537, %v538
  %v540 = vrot.slane %v539, 2
  %v541 = vmax.f32 %v539, %v540
  %v542 = vrot.slane %v541, 1
  %v543 = vmax.f32 %v541, %v542
  %v544 = vsel %vm104, %v470, -inf
  %v545 = vrot.slane %v544, 4
  %v546 = vmax.f32 %v544, %v545
  %v547 = vrot.slane %v546, 2
  %v548 = vmax.f32 %v546, %v547
  %v549 = vrot.slane %v548, 1
  %v550 = vmax.f32 %v548, %v549
  %v551 = vsel %vm104, %v471, -inf
  %v552 = vrot.slane %v551, 4
  %v553 = vmax.f32 %v551, %v552
  %v554 = vrot.slane %v553, 2
  %v555 = vmax.f32 %v553, %v554
  %v556 = vrot.slane %v555, 1
  %v557 = vmax.f32 %v555, %v556
  %v558 = vsel %vm104, %v472, -inf
  %v559 = vrot.slane %v558, 4
  %v560 = vmax.f32 %v558, %v559
  %v561 = vrot.slane %v560, 2
  %v562 = vmax.f32 %v560, %v561
  %v563 = vrot.slane %v562, 1
  %v564 = vmax.f32 %v562, %v563
  %v565 = vsel %vm104, %v473, -inf
  %v566 = vrot.slane %v565, 4
  %v567 = vmax.f32 %v565, %v566
  %v568 = vrot.slane %v567, 2
  %v569 = vmax.f32 %v567, %v568
  %v570 = vrot.slane %v569, 1
  %v571 = vmax.f32 %v569, %v570
  %v572 = vsel %vm104, %v474, -inf
  %v573 = vrot.slane %v572, 4
  %v574 = vmax.f32 %v572, %v573
  %v575 = vrot.slane %v574, 2
  %v576 = vmax.f32 %v574, %v575
  %v577 = vrot.slane %v576, 1
  %v578 = vmax.f32 %v576, %v577
  %v579 = vsel %vm104, %v475, -inf
  %v580 = vrot.slane %v579, 4
  %v581 = vmax.f32 %v579, %v580
  %v582 = vrot.slane %v581, 2
  %v583 = vmax.f32 %v581, %v582
  %v584 = vrot.slane %v583, 1
  %v585 = vmax.f32 %v583, %v584
  %v586 = vsel %vm104, %v476, -inf
  %v587 = vrot.slane %v586, 4
  %v588 = vmax.f32 %v586, %v587
  %v589 = vrot.slane %v588, 2
  %v590 = vmax.f32 %v588, %v589
  %v591 = vrot.slane %v590, 1
  %v592 = vmax.f32 %v590, %v591
  %v593 = vsel %vm104, %v477, -inf
  %v594 = vrot.slane %v593, 4
  %v595 = vmax.f32 %v593, %v594
  %v596 = vrot.slane %v595, 2
  %v597 = vmax.f32 %v595, %v596
  %v598 = vrot.slane %v597, 1
  %v599 = vmax.f32 %v597, %v598
  %v600 = vsel %vm104, %v478, -inf
  %v601 = vrot.slane %v600, 4
  %v602 = vmax.f32 %v600, %v601
  %v603 = vrot.slane %v602, 2
  %v604 = vmax.f32 %v602, %v603
  %v605 = vrot.slane %v604, 1
  %v606 = vmax.f32 %v604, %v605
  %v607 = vsel %vm104, %v479, -inf
  %v608 = vrot.slane %v607, 4
  %v609 = vmax.f32 %v607, %v608
  %v610 = vrot.slane %v609, 2
  %v611 = vmax.f32 %v609, %v610
  %v612 = vrot.slane %v611, 1
  %v613 = vmax.f32 %v611, %v612
  %v614 = vsel %vm104, %v480, -inf
  %v615 = vrot.slane %v614, 4
  %v616 = vmax.f32 %v614, %v615
  %v617 = vrot.slane %v616, 2
  %v618 = vmax.f32 %v616, %v617
  %v619 = vrot.slane %v618, 1
  %v620 = vmax.f32 %v618, %v619
  %v621 = vsel %vm104, %v481, -inf
  %v622 = vrot.slane %v621, 4
  %v623 = vmax.f32 %v621, %v622
  %v624 = vrot.slane %v623, 2
  %v625 = vmax.f32 %v623, %v624
  %v626 = vrot.slane %v625, 1
  %v627 = vmax.f32 %v625, %v626
  %v628 = vsel %vm104, %v482, -inf
  %v629 = vrot.slane %v628, 4
  %v630 = vmax.f32 %v628, %v629
  %v631 = vrot.slane %v630, 2
  %v632 = vmax.f32 %v630, %v631
  %v633 = vrot.slane %v632, 1
  %v634 = vmax.f32 %v632, %v633
  %v635 = vsel %vm104, %v483, -inf
  %v636 = vrot.slane %v635, 4
  %v637 = vmax.f32 %v635, %v636
  %v638 = vrot.slane %v637, 2
  %v639 = vmax.f32 %v637, %v638
  %v640 = vrot.slane %v639, 1
  %v641 = vmax.f32 %v639, %v640
  %v642 = vsel %vm104, %v484, -inf
  %v643 = vrot.slane %v642, 4
  %v644 = vmax.f32 %v642, %v643
  %v645 = vrot.slane %v644, 2
  %v646 = vmax.f32 %v644, %v645
  %v647 = vrot.slane %v646, 1
  %v648 = vmax.f32 %v646, %v647
  %v649 = vsel %vm104, %v485, -inf
  %v650 = vrot.slane %v649, 4
  %v651 = vmax.f32 %v649, %v650
  %v652 = vrot.slane %v651, 2
  %v653 = vmax.f32 %v651, %v652
  %v654 = vrot.slane %v653, 1
  %v655 = vmax.f32 %v653, %v654
  %v656 = vsel %vm104, %v486, -inf
  %v657 = vrot.slane %v656, 4
  %v658 = vmax.f32 %v656, %v657
  %v659 = vrot.slane %v658, 2
  %v660 = vmax.f32 %v658, %v659
  %v661 = vrot.slane %v660, 1
  %v662 = vmax.f32 %v660, %v661
  %v663 = vsel %vm104, %v487, -inf
  %v664 = vrot.slane %v663, 4
  %v665 = vmax.f32 %v663, %v664
  %v666 = vrot.slane %v665, 2
  %v667 = vmax.f32 %v665, %v666
  %v668 = vrot.slane %v667, 1
  %v669 = vmax.f32 %v667, %v668
  %v670 = vsel %vm104, %v488, -inf
  %v671 = vrot.slane %v670, 4
  %v672 = vmax.f32 %v670, %v671
  %v673 = vrot.slane %v672, 2
  %v674 = vmax.f32 %v672, %v673
  %v675 = vrot.slane %v674, 1
  %v676 = vmax.f32 %v674, %v675
  %v677 = vsel %vm104, %v489, -inf
  %v678 = vrot.slane %v677, 4
  %v679 = vmax.f32 %v677, %v678
  %v680 = vrot.slane %v679, 2
  %v681 = vmax.f32 %v679, %v680
  %v682 = vrot.slane %v681, 1
  %v683 = vmax.f32 %v681, %v682
  %v684 = vsel %vm104, %v490, -inf
  %v685 = vrot.slane %v684, 4
  %v686 = vmax.f32 %v684, %v685
  %v687 = vrot.slane %v686, 2
  %v688 = vmax.f32 %v686, %v687
  %v689 = vrot.slane %v688, 1
  %v690 = vmax.f32 %v688, %v689
  %v691 = vsel %vm104, %v491, -inf
  %v692 = vrot.slane %v691, 4
  %v693 = vmax.f32 %v691, %v692
  %v694 = vrot.slane %v693, 2
  %v695 = vmax.f32 %v693, %v694
  %v696 = vrot.slane %v695, 1
  %v697 = vmax.f32 %v695, %v696
  %v698 = vsel %vm104, %v492, -inf
  %v699 = vrot.slane %v698, 4
  %v700 = vmax.f32 %v698, %v699
  %v701 = vrot.slane %v700, 2
  %v702 = vmax.f32 %v700, %v701
  %v703 = vrot.slane %v702, 1
  %v704 = vmax.f32 %v702, %v703
  %v705 = vsel %vm104, %v493, -inf
  %v706 = vrot.slane %v705, 4
  %v707 = vmax.f32 %v705, %v706
  %v708 = vrot.slane %v707, 2
  %v709 = vmax.f32 %v707, %v708
  %v710 = vrot.slane %v709, 1
  %v711 = vmax.f32 %v709, %v710
  %v712 = vsel %vm104, %v494, -inf
  %v713 = vrot.slane %v712, 4
  %v714 = vmax.f32 %v712, %v713
  %v715 = vrot.slane %v714, 2
  %v716 = vmax.f32 %v714, %v715
  %v717 = vrot.slane %v716, 1
  %v718 = vmax.f32 %v716, %v717
  %v751 = vcombine.low %v501, %v508
  %v752 = vcombine.low %v515, %v522
  %v753 = vcombine.low %v529, %v536
  %v754 = vcombine.low %v543, %v550
  %v756 = vunpack.c.l.s4 1966171168
  %v757 = vunpack.c.0.s8 %v756
  %v758 = vlaneseq
  %v759 = vshrl.u32 %v758, 7
  %v760 = vsub.s32 %v757, %v759
  %v761 = vrot.slane %v751, %v760
  %v763 = vunpack.c.l.s4 1966171168
  %v764 = vunpack.c.0.s8 %v763
  %v765 = vlaneseq
  %v766 = vshrl.u32 %v765, 7
  %v767 = vsub.s32 %v764, %v766
  %v768 = vrot.slane %v752, %v767
  %v770 = vunpack.c.l.s4 1966171168
  %v771 = vunpack.c.0.s8 %v770
  %v772 = vlaneseq
  %v773 = vshrl.u32 %v772, 7
  %v774 = vsub.s32 %v771, %v773
  %v775 = vrot.slane %v753, %v774
  %v777 = vunpack.c.l.s4 1966171168
  %v778 = vunpack.c.0.s8 %v777
  %v779 = vlaneseq
  %v780 = vshrl.u32 %v779, 7
  %v781 = vsub.s32 %v778, %v780
  %v782 = vrot.slane %v754, %v781
  %v783 = vcombine.low %v761, %v768
  %v784 = vcombine.low %v775, %v782
  %v786 = vunpack.c.l.s4 1966171168
  %v787 = vunpack.c.0.s8 %v786
  %v788 = vlaneseq
  %v789 = vshrl.u32 %v788, 7
  %v790 = vsub.s32 %v787, %v789
  %v791 = vrot.slane %v783, %v790
  %v793 = vunpack.c.l.s4 1966171168
  %v794 = vunpack.c.0.s8 %v793
  %v795 = vlaneseq
  %v796 = vshrl.u32 %v795, 7
  %v797 = vsub.s32 %v794, %v796
  %v798 = vrot.slane %v784, %v797
  %v799 = vcombine.low %v791, %v798
  %v800 = vcombine.low %v557, %v564
  %v801 = vcombine.low %v571, %v578
  %v802 = vcombine.low %v585, %v592
  %v803 = vcombine.low %v599, %v606
  %v805 = vunpack.c.l.s4 1966171168
  %v806 = vunpack.c.0.s8 %v805
  %v807 = vlaneseq
  %v808 = vshrl.u32 %v807, 7
  %v809 = vsub.s32 %v806, %v808
  %v810 = vrot.slane %v800, %v809
  %v812 = vunpack.c.l.s4 1966171168
  %v813 = vunpack.c.0.s8 %v812
  %v814 = vlaneseq
  %v815 = vshrl.u32 %v814, 7
  %v816 = vsub.s32 %v813, %v815
  %v817 = vrot.slane %v801, %v816
  %v819 = vunpack.c.l.s4 1966171168
  %v820 = vunpack.c.0.s8 %v819
  %v821 = vlaneseq
  %v822 = vshrl.u32 %v821, 7
  %v823 = vsub.s32 %v820, %v822
  %v824 = vrot.slane %v802, %v823
  %v826 = vunpack.c.l.s4 1966171168
  %v827 = vunpack.c.0.s8 %v826
  %v828 = vlaneseq
  %v829 = vshrl.u32 %v828, 7
  %v830 = vsub.s32 %v827, %v829
  %v831 = vrot.slane %v803, %v830
  %v832 = vcombine.low %v810, %v817
  %v833 = vcombine.low %v824, %v831
  %v835 = vunpack.c.l.s4 1966171168
  %v836 = vunpack.c.0.s8 %v835
  %v837 = vlaneseq
  %v838 = vshrl.u32 %v837, 7
  %v839 = vsub.s32 %v836, %v838
  %v840 = vrot.slane %v832, %v839
  %v842 = vunpack.c.l.s4 1966171168
  %v843 = vunpack.c.0.s8 %v842
  %v844 = vlaneseq
  %v845 = vshrl.u32 %v844, 7
  %v846 = vsub.s32 %v843, %v845
  %v847 = vrot.slane %v833, %v846
  %v848 = vcombine.low %v840, %v847
  %v849 = vcombine.low %v613, %v620
  %v850 = vcombine.low %v627, %v634
  %v851 = vcombine.low %v641, %v648
  %v852 = vcombine.low %v655, %v662
  %v854 = vunpack.c.l.s4 1966171168
  %v855 = vunpack.c.0.s8 %v854
  %v856 = vlaneseq
  %v857 = vshrl.u32 %v856, 7
  %v858 = vsub.s32 %v855, %v857
  %v859 = vrot.slane %v849, %v858
  %v861 = vunpack.c.l.s4 1966171168
  %v862 = vunpack.c.0.s8 %v861
  %v863 = vlaneseq
  %v864 = vshrl.u32 %v863, 7
  %v865 = vsub.s32 %v862, %v864
  %v866 = vrot.slane %v850, %v865
  %v868 = vunpack.c.l.s4 1966171168
  %v869 = vunpack.c.0.s8 %v868
  %v870 = vlaneseq
  %v871 = vshrl.u32 %v870, 7
  %v872 = vsub.s32 %v869, %v871
  %v873 = vrot.slane %v851, %v872
  %v875 = vunpack.c.l.s4 1966171168
  %v876 = vunpack.c.0.s8 %v875
  %v877 = vlaneseq
  %v878 = vshrl.u32 %v877, 7
  %v879 = vsub.s32 %v876, %v878
  %v880 = vrot.slane %v852, %v879
  %v881 = vcombine.low %v859, %v866
  %v882 = vcombine.low %v873, %v880
  %v884 = vunpack.c.l.s4 1966171168
  %v885 = vunpack.c.0.s8 %v884
  %v886 = vlaneseq
  %v887 = vshrl.u32 %v886, 7
  %v888 = vsub.s32 %v885, %v887
  %v889 = vrot.slane %v881, %v888
  %v891 = vunpack.c.l.s4 1966171168
  %v892 = vunpack.c.0.s8 %v891
  %v893 = vlaneseq
  %v894 = vshrl.u32 %v893, 7
  %v895 = vsub.s32 %v892, %v894
  %v896 = vrot.slane %v882, %v895
  %v897 = vcombine.low %v889, %v896
  %v898 = vcombine.low %v669, %v676
  %v899 = vcombine.low %v683, %v690
  %v900 = vcombine.low %v697, %v704
  %v901 = vcombine.low %v711, %v718
  %v903 = vunpack.c.l.s4 1966171168
  %v904 = vunpack.c.0.s8 %v903
  %v905 = vlaneseq
  %v906 = vshrl.u32 %v905, 7
  %v907 = vsub.s32 %v904, %v906
  %v908 = vrot.slane %v898, %v907
  %v910 = vunpack.c.l.s4 1966171168
  %v911 = vunpack.c.0.s8 %v910
  %v912 = vlaneseq
  %v913 = vshrl.u32 %v912, 7
  %v914 = vsub.s32 %v911, %v913
  %v915 = vrot.slane %v899, %v914
  %v917 = vunpack.c.l.s4 1966171168
  %v918 = vunpack.c.0.s8 %v917
  %v919 = vlaneseq
  %v920 = vshrl.u32 %v919, 7
  %v921 = vsub.s32 %v918, %v920
  %v922 = vrot.slane %v900, %v921
  %v924 = vunpack.c.l.s4 1966171168
  %v925 = vunpack.c.0.s8 %v924
  %v926 = vlaneseq
  %v927 = vshrl.u32 %v926, 7
  %v928 = vsub.s32 %v925, %v927
  %v929 = vrot.slane %v901, %v928
  %v930 = vcombine.low %v908, %v915
  %v931 = vcombine.low %v922, %v929
  %v933 = vunpack.c.l.s4 1966171168
  %v934 = vunpack.c.0.s8 %v933
  %v935 = vlaneseq
  %v936 = vshrl.u32 %v935, 7
  %v937 = vsub.s32 %v934, %v936
  %v938 = vrot.slane %v930, %v937
  %v940 = vunpack.c.l.s4 1966171168
  %v941 = vunpack.c.0.s8 %v940
  %v942 = vlaneseq
  %v943 = vshrl.u32 %v942, 7
  %v944 = vsub.s32 %v941, %v943
  %v945 = vrot.slane %v931, %v944
  %v946 = vcombine.low %v938, %v945
  %951 = vst [vmem:[%s1] sm:$0xff] %v799
  %952 = vst [vmem:[%s1 + $0x8] sm:$0xff] %v848
  %953 = vst [vmem:[%s1 + $0x10] sm:$0xff] %v897
  %954 = vst [vmem:[%s1 + $0x18] sm:$0xff] %v946
  // Predicated region
  $region6: #{yolo_v3_odam_forward.5} parent=0 // pred_check
    _
  $region7: #{yolo_v3_odam_forward.5} parent=0 // pred_check_branch
    %956 = sbr.rel (0) target = $region9
  $region8: #{yolo_v3_odam_forward.5} parent=0 // pred_region
    _
  $region9: #{yolo_v3_odam_forward.5} parent=0 // pred_fallthru
    _
  // Predicated region
  $region10: #{yolo_v3_odam_forward.5} parent=0 // pred_check
    _
  $region11: #{yolo_v3_odam_forward.5} parent=0 // pred_check_branch
    %958 = sbr.rel (0) target = $region13
  $region12: #{yolo_v3_odam_forward.5} parent=0 // pred_region
    _
  $region13: #{yolo_v3_odam_forward.5} parent=0 // pred_fallthru
    _

</llo_original>
